<compile_context>
chip_gen: v5e
topology: v5e:2x2
jax: 0.10.0
libtpu: 0.0.40
codegen_flags: <defaults>
</compile_context>

<pallas_src>
import math
import numpy as np
import jax
import jax.numpy as jnp
from jax import lax
from jax.experimental import pallas as pl
from jax.experimental.pallas import tpu as pltpu

KAPPA = 0.8       # self.kappa
SIGMA = 0.5       # self.sigma
BN_EPS = 1e-5     # nn.BatchNorm1d default eps


def _make_kernel(S, N, G, dim):
    """Blocked Net_stacked forward kernel: S timesteps per grid iteration."""

    def kernel(x0_ref, gv0_ref, xi_ref, vec_ref, w1_ref, w2_ref, w3_ref,
               h_ref, sqh_ref, v0_ref,
               v_out_ref, x_out_ref, path_ref):
        g = pl.program_id(0)

        # -------- step 0 (global step 0, first block only) ----------------
        # uses the learned scalars v0 / grad_v0 instead of a per-step MLP
        @pl.when(g == 0)
        def _():
            x = x0_ref[...]                       # (B, dim)
            gv0 = gv0_ref[...]                    # (1, dim)
            vec0 = vec_ref[0]                     # (8, hid) packed vectors
            law0 = vec0[0:1, :dim]                # (1, dim)
            h0 = h_ref[0]
            sqh0 = sqh_ref[0]
            xi0 = xi_ref[0]                       # (B, dim)
            diff = x - law0
            # f = kappa^2/2 * ||x - law||^2 (per row) + 1/2 * ||grad_v0||^2
            f = (0.5 * KAPPA * KAPPA) * jnp.sum(diff * diff, axis=1, keepdims=True) \
                + 0.5 * jnp.sum(gv0 * gv0)
            v = v0_ref[0] - f * h0 + SIGMA * sqh0 * jnp.sum(xi0 * gv0, axis=1,
                                                            keepdims=True)
            x_new = x - gv0 * h0 + SIGMA * sqh0 * xi0          # alpha = -grad_v0
            v_out_ref[...] = v
            x_out_ref[...] = x_new
            path_ref[0] = x_new

        # -------- generic per-step MLP (global step >= 1) ------------------
        def run_step(s):
            i = g * S + s                         # global timestep index (SMEM idx)
            h = h_ref[i]
            sqh = sqh_ref[i]
            xi = xi_ref[s]                        # (B, dim)
            vec = vec_ref[s]                      # (8, hid) packed row vectors
            law_i = vec[0:1, :dim]
            b1, gm1, bt1 = vec[1:2, :], vec[2:3, :], vec[3:4, :]
            b2, gm2, bt2 = vec[4:5, :], vec[5:6, :], vec[6:7, :]
            b3 = vec[7:8, :dim]

            x = x_out_ref[...]                    # carried state (resident block)
            v = v_out_ref[...]

            # Linear -> BatchNorm1d (training-mode batch stats) -> ReLU
            z1 = jnp.dot(x, w1_ref[s], preferred_element_type=jnp.float32) + b1
            m1 = jnp.mean(z1, axis=0, keepdims=True)
            var1 = jnp.mean(z1 * z1, axis=0, keepdims=True) - m1 * m1
            h1 = jnp.maximum((z1 - m1) * lax.rsqrt(var1 + BN_EPS) * gm1 + bt1, 0.0)

            z2 = jnp.dot(h1, w2_ref[s], preferred_element_type=jnp.float32) + b2
            m2 = jnp.mean(z2, axis=0, keepdims=True)
            var2 = jnp.mean(z2 * z2, axis=0, keepdims=True) - m2 * m2
            h2 = jnp.maximum((z2 - m2) * lax.rsqrt(var2 + BN_EPS) * gm2 + bt2, 0.0)

            grad = jnp.dot(h2, w3_ref[s], preferred_element_type=jnp.float32) + b3

            diff = x - law_i
            f = (0.5 * KAPPA * KAPPA) * jnp.sum(diff * diff, axis=1, keepdims=True) \
                + 0.5 * jnp.sum(grad * grad, axis=1, keepdims=True)
            # diag(grad @ (sigma*sqrt(h)*xi)^T) == sigma*sqrt(h)*sum(grad*xi, axis=1)
            v_new = v - f * h + SIGMA * sqh * jnp.sum(grad * xi, axis=1, keepdims=True)
            x_new = x - grad * h + SIGMA * sqh * xi            # alpha = -grad

            v_out_ref[...] = v_new
            x_out_ref[...] = x_new
            path_ref[s] = x_new

        # statically unrolled inner loop over the S timesteps of this block
        for s in range(S):
            if s == 0:
                # local step 0 of block 0 is the special v0/grad_v0 step above
                @pl.when(g > 0)
                def _(s=s):
                    run_step(s)
            elif (G - 1) * S + s >= N:
                # only the padded tail block can run past step N-1 -> guard
                @pl.when(g * S + s < N)
                def _(s=s):
                    run_step(s)
            else:
                run_step(s)

    return kernel


def net_stacked_forward(x0, xi_all, law, timegrid, params, *, steps_per_block=8):
    """Pallas forward pass.  Returns (v, x_final, path) like Net_stacked.forward."""
    B, dim = x0.shape
    hid = dim + 10
    N = int(timegrid.shape[0]) - 1                 # number of time steps
    S = min(int(steps_per_block), N)               # timesteps per grid block
    G = -(-N // S)                                 # number of grid blocks
    N_pad = G * S

    f32 = jnp.float32
    h_all = (timegrid[1:] - timegrid[:-1]).astype(f32)       # (N,)
    sqh_all = jnp.sqrt(h_all)                                 # precomputed sqrt(h)

    def pad_steps(a):
        if N_pad == N:
            return a
        pad = [(0, N_pad - N)] + [(0, 0)] * (a.ndim - 1)
        return jnp.pad(a, pad)

    # pack all per-step row vectors (law, b1, g1, be1, b2, g2, be2, b3)
    # into one sublane-packed (N, 8, hid) array -> single DMA stream.
    def as_row(v):
        v = jnp.asarray(v, f32).reshape(N, 1, -1)
        if v.shape[-1] < hid:
            v = jnp.pad(v, ((0, 0), (0, 0), (0, hid - v.shape[-1])))
        return v

    vecs = jnp.concatenate(
        [as_row(law[:N]),
         as_row(params["b1"]), as_row(params["g1"]), as_row(params["be1"]),
         as_row(params["b2"]), as_row(params["g2"]), as_row(params["be2"]),
         as_row(params["b3"])], axis=1)                       # (N, 8, hid)

    xi_p = pad_steps(xi_all.astype(f32))
    vec_p = pad_steps(vecs)
    w1_p = pad_steps(params["W1"].astype(f32))
    w2_p = pad_steps(params["W2"].astype(f32))
    w3_p = pad_steps(params["W3"].astype(f32))
    h_p = pad_steps(h_all)
    sqh_p = pad_steps(sqh_all)

    gv0 = params["grad_v0"].reshape(1, dim).astype(f32)
    v0 = params["v0"].astype(f32)                             # (1,)

    grid_spec = pltpu.PrefetchScalarGridSpec(
        num_scalar_prefetch=0,
        grid=(G,),
        in_specs=[
            pl.BlockSpec((B, dim), lambda g: (0, 0)),              # x0 (resident)
            pl.BlockSpec((1, dim), lambda g: (0, 0)),              # grad_v0 (resident)
            pl.BlockSpec((S, B, dim), lambda g: (g, 0, 0)),        # xi, S steps/block
            pl.BlockSpec((S, 8, hid), lambda g: (g, 0, 0)),        # packed vectors
            pl.BlockSpec((S, dim, hid), lambda g: (g, 0, 0)),      # W1
            pl.BlockSpec((S, hid, hid), lambda g: (g, 0, 0)),      # W2
            pl.BlockSpec((S, hid, dim), lambda g: (g, 0, 0)),      # W3
            pl.BlockSpec(memory_space=pltpu.MemorySpace.SMEM),     # h
            pl.BlockSpec(memory_space=pltpu.MemorySpace.SMEM),     # sqrt(h)
            pl.BlockSpec(memory_space=pltpu.MemorySpace.SMEM),     # v0
        ],
        out_specs=[
            pl.BlockSpec((B, 1), lambda g: (0, 0)),                # v (resident carry)
            pl.BlockSpec((B, dim), lambda g: (0, 0)),              # x (resident carry)
            pl.BlockSpec((S, B, dim), lambda g: (g, 0, 0)),        # path (new states)
        ],
    )

    kernel = _make_kernel(S, N, G, dim)
    v, x_final, path_new = pl.pallas_call(
        kernel,
        grid_spec=grid_spec,
        out_shape=(
            jax.ShapeDtypeStruct((B, 1), f32),
            jax.ShapeDtypeStruct((B, dim), f32),
            jax.ShapeDtypeStruct((N_pad, B, dim), f32),
        ),
        compiler_params=pltpu.CompilerParams(
            dimension_semantics=("arbitrary",)),
    )(x0.astype(f32), gv0, xi_p, vec_p, w1_p, w2_p, w3_p, h_p, sqh_p, v0)

    # path[0] = initial x, path[1:] = new states per step.
    # TODO(synk): write x0 straight into an (N+1, B, dim) kernel output to drop this copy.
    path = jnp.concatenate([x0[None].astype(f32), path_new[:N]], axis=0)
    return v[:, 0], x_final, path


# ----------------------------- pure-JAX reference ---------------------------
def reference_forward(x0, xi_all, law, timegrid, params):
    x = x0
    N = timegrid.shape[0] - 1
    path = [x0]
    v = None
    for i in range(N):
        h = timegrid[i + 1] - timegrid[i]
        sqh = jnp.sqrt(h)
        xi = xi_all[i]
        if i == 0:
            gv0 = params["grad_v0"]
            f = 0.5 * KAPPA ** 2 * jnp.sum((x - law[i]) ** 2, axis=1) \
                + 0.5 * jnp.sum(gv0 ** 2)
            v = params["v0"][0] - f * h + SIGMA * sqh * (xi @ gv0)
            x = x + (-gv0)[None, :] * h + SIGMA * sqh * xi
        else:
            W1, b1 = params["W1"][i], params["b1"][i, 0]
            g1, be1 = params["g1"][i, 0], params["be1"][i, 0]
            W2, b2 = params["W2"][i], params["b2"][i, 0]
            g2, be2 = params["g2"][i, 0], params["be2"][i, 0]
            W3, b3 = params["W3"][i], params["b3"][i, 0]
            z1 = x @ W1 + b1
            m1, var1 = z1.mean(0), ((z1 - z1.mean(0)) ** 2).mean(0)
            h1 = jnp.maximum((z1 - m1) / jnp.sqrt(var1 + BN_EPS) * g1 + be1, 0.0)
            z2 = h1 @ W2 + b2
            m2, var2 = z2.mean(0), ((z2 - z2.mean(0)) ** 2).mean(0)
            h2 = jnp.maximum((z2 - m2) / jnp.sqrt(var2 + BN_EPS) * g2 + be2, 0.0)
            grad = h2 @ W3 + b3
            f = 0.5 * KAPPA ** 2 * jnp.sum((x - law[i]) ** 2, axis=1) \
                + 0.5 * jnp.sum(grad ** 2, axis=1)
            v = v - f * h + SIGMA * sqh * jnp.sum(grad * xi, axis=1)
            x = x + (-grad) * h + SIGMA * sqh * xi
        path.append(x)
    return v, x, jnp.stack(path)


# ----------------------------- deterministic init ---------------------------
def init_params(key, dim, n_steps):
    """Shapes follow Net_stacked.__init__; values are deterministic (PRNGKey)."""
    hid = dim + 10
    n_nets = n_steps - 1                       # networks for timegrid[1:-1]

    def linear(k, n_in, n_out):
        k1, k2 = jax.random.split(k)
        bound = 1.0 / math.sqrt(n_in)
        W = jax.random.uniform(k1, (n_in, n_out), jnp.float32, -bound, bound)
        b = jax.random.uniform(k2, (1, n_out), jnp.float32, -bound, bound)
        return W, b

    keys = jax.random.split(key, 3 * n_nets + 2)
    W1 = np.zeros((n_steps, dim, hid), np.float32); b1 = np.zeros((n_steps, 1, hid), np.float32)
    W2 = np.zeros((n_steps, hid, hid), np.float32); b2 = np.zeros((n_steps, 1, hid), np.float32)
    W3 = np.zeros((n_steps, hid, dim), np.float32); b3 = np.zeros((n_steps, 1, dim), np.float32)
    for t in range(n_nets):                    # slot 0 is an unused dummy (step 0)
        w, b = linear(keys[3 * t + 0], dim, hid);  W1[t + 1], b1[t + 1] = w, b
        w, b = linear(keys[3 * t + 1], hid, hid);  W2[t + 1], b2[t + 1] = w, b
        w, b = linear(keys[3 * t + 2], hid, dim);  W3[t + 1], b3[t + 1] = w, b

    # BatchNorm1d defaults: gamma=1, beta=0
    g1 = np.ones((n_steps, 1, hid), np.float32);  be1 = np.zeros((n_steps, 1, hid), np.float32)
    g2 = np.ones((n_steps, 1, hid), np.float32);  be2 = np.zeros((n_steps, 1, hid), np.float32)

    # module inits v0/grad_v0 to zeros; we use small deterministic values so the
    # step-0 branch is actually exercised.
    v0 = 0.1 * jax.random.normal(keys[-2], (1,), jnp.float32)
    grad_v0 = 0.1 * jax.random.normal(keys[-1], (dim,), jnp.float32)

    return dict(
        W1=jnp.asarray(W1), b1=jnp.asarray(b1), g1=jnp.asarray(g1), be1=jnp.asarray(be1),
        W2=jnp.asarray(W2), b2=jnp.asarray(b2), g2=jnp.asarray(g2), be2=jnp.asarray(be2),
        W3=jnp.asarray(W3), b3=jnp.asarray(b3),
        v0=v0, grad_v0=grad_v0,
    )


if __name__ == "__main__":
    B, dim = 32, 6                              # batch, state dimension (hid = dim+10 = 16)
    n_points = 21                               # 21 points -> 20 time steps
    timegrid = jnp.linspace(0.0, 1.0, n_points).astype(jnp.float32)
    N = n_points - 1

    key = jax.random.PRNGKey(0)
    k_x, k_xi, k_law, k_p = jax.random.split(key, 4)
    x0 = jax.random.normal(k_x, (B, dim), jnp.float32)
    # torch.randn inside forward() is hoisted: pre-sampled Brownian increments dW
    xi_all = jax.random.normal(k_xi, (N, B, dim), jnp.float32)
    law = jax.random.normal(k_law, (N, dim), jnp.float32)       # self.law[i], i=0..N-1
    params = init_params(k_p, dim, N)

    v, x_final, path = net_stacked_forward(x0, xi_all, law, timegrid, params,
                                           steps_per_block=8)
    jax.block_until_ready((v, x_final, path))

    v_ref, x_ref, path_ref = reference_forward(x0, xi_all, law, timegrid, params)
    np.testing.assert_allclose(np.asarray(v), np.asarray(v_ref), rtol=2e-2, atol=2e-2)
    np.testing.assert_allclose(np.asarray(x_final), np.asarray(x_ref), rtol=2e-2, atol=2e-2)
    np.testing.assert_allclose(np.asarray(path), np.asarray(path_ref), rtol=2e-2, atol=2e-2)

    print("KERNEL_OK")
</pallas_src>

<mosaic_0001>
module attributes {stable_mosaic.version = 11 : i64} {
  func.func @kernel(%arg0: i32, %arg1: memref<32x6xf32, #tpu.memory_space<vmem>>, %arg2: memref<1x6xf32, #tpu.memory_space<vmem>>, %arg3: memref<8x32x6xf32, #tpu.memory_space<vmem>>, %arg4: memref<8x8x16xf32, #tpu.memory_space<vmem>>, %arg5: memref<8x6x16xf32, #tpu.memory_space<vmem>>, %arg6: memref<8x16x16xf32, #tpu.memory_space<vmem>>, %arg7: memref<8x16x6xf32, #tpu.memory_space<vmem>>, %arg8: memref<24xf32, #tpu.memory_space<smem>>, %arg9: memref<24xf32, #tpu.memory_space<smem>>, %arg10: memref<1xf32, #tpu.memory_space<smem>>, %arg11: memref<32x1xf32, #tpu.memory_space<vmem>>, %arg12: memref<32x6xf32, #tpu.memory_space<vmem>>, %arg13: memref<8x32x6xf32, #tpu.memory_space<vmem>>) attributes {dimension_semantics = [#tpu.dimension_semantics<arbitrary>], iteration_bounds = array<i64: 3>, scalar_prefetch = 0 : i64, scratch_operands = 0 : i64, tpu.core_type = #tpu.core_type<tc>, window_params = [{pipeline_mode = #tpu.pipeline_mode<synchronous>, transform_indices = @transform_0, window_bounds = array<i64: 32, 6>}, {pipeline_mode = #tpu.pipeline_mode<synchronous>, transform_indices = @transform_1, window_bounds = array<i64: 1, 6>}, {transform_indices = @transform_2, window_bounds = array<i64: 8, 32, 6>}, {transform_indices = @transform_3, window_bounds = array<i64: 8, 8, 16>}, {transform_indices = @transform_4, window_bounds = array<i64: 8, 6, 16>}, {transform_indices = @transform_5, window_bounds = array<i64: 8, 16, 16>}, {transform_indices = @transform_6, window_bounds = array<i64: 8, 16, 6>}, {transform_indices = @transform_7, window_bounds = array<i64: 24>}, {transform_indices = @transform_8, window_bounds = array<i64: 24>}, {transform_indices = @transform_9, window_bounds = array<i64: 1>}, {pipeline_mode = #tpu.pipeline_mode<synchronous>, transform_indices = @transform_10, window_bounds = array<i64: 32, 1>}, {pipeline_mode = #tpu.pipeline_mode<synchronous>, transform_indices = @transform_11, window_bounds = array<i64: 32, 6>}, {transform_indices = @transform_12, window_bounds = array<i64: 8, 32, 6>}]} {
    %c0_i32 = arith.constant 0 : i32
    %0 = arith.cmpi eq, %arg0, %c0_i32 : i32
    %1 = arith.extui %0 : i1 to i32
    %c0_i32_0 = arith.constant 0 : i32
    %2 = arith.cmpi ne, %1, %c0_i32_0 : i32
    scf.if %2 {
      %c0_155 = arith.constant 0 : index
      %c0_156 = arith.constant 0 : index
      %380 = vector.load %arg1[%c0_155, %c0_156] : memref<32x6xf32, #tpu.memory_space<vmem>>, vector<32x6xf32>
      %c0_157 = arith.constant 0 : index
      %c0_158 = arith.constant 0 : index
      %381 = vector.load %arg2[%c0_157, %c0_158] : memref<1x6xf32, #tpu.memory_space<vmem>>, vector<1x6xf32>
      %c0_159 = arith.constant 0 : index
      %c0_160 = arith.constant 0 : index
      %c0_161 = arith.constant 0 : index
      %382 = vector.load %arg4[%c0_159, %c0_160, %c0_161] : memref<8x8x16xf32, #tpu.memory_space<vmem>>, vector<1x8x16xf32>
      %383 = vector.shape_cast %382 : vector<1x8x16xf32> to vector<8x16xf32>
      %384 = vector.extract_strided_slice %383 {offsets = [0, 0], sizes = [1, 6], strides = [1, 1]} : vector<8x16xf32> to vector<1x6xf32>
      %c0_162 = arith.constant 0 : index
      %385 = memref.load %arg8[%c0_162] : memref<24xf32, #tpu.memory_space<smem>>
      %c0_163 = arith.constant 0 : index
      %386 = memref.load %arg9[%c0_163] : memref<24xf32, #tpu.memory_space<smem>>
      %c0_164 = arith.constant 0 : index
      %c0_165 = arith.constant 0 : index
      %c0_166 = arith.constant 0 : index
      %387 = vector.load %arg3[%c0_164, %c0_165, %c0_166] : memref<8x32x6xf32, #tpu.memory_space<vmem>>, vector<1x32x6xf32>
      %388 = vector.shape_cast %387 : vector<1x32x6xf32> to vector<32x6xf32>
      %389 = vector.broadcast %384 : vector<1x6xf32> to vector<32x6xf32>
      %390 = arith.subf %380, %389 : vector<32x6xf32>
      %391 = arith.mulf %390, %390 : vector<32x6xf32>
      %cst_167 = arith.constant dense<0.000000e+00> : vector<32xf32>
      %392 = vector.multi_reduction <add>, %391, %cst_167 [1] : vector<32x6xf32> to vector<32xf32>
      %393 = vector.shape_cast %392 : vector<32xf32> to vector<32x1xf32>
      %cst_168 = arith.constant 3.200000e-01 : f32
      %394 = vector.broadcast %cst_168 : f32 to vector<32x1xf32>
      %395 = arith.mulf %394, %393 : vector<32x1xf32>
      %396 = arith.mulf %381, %381 : vector<1x6xf32>
      %397 = vector.shape_cast %396 : vector<1x6xf32> to vector<1x1x6xf32>
      %cst_169 = arith.constant dense<0.000000e+00> : vector<1xf32>
      %398 = vector.multi_reduction <add>, %397, %cst_169 [1, 2] : vector<1x1x6xf32> to vector<1xf32>
      %399 = vector.shape_cast %398 : vector<1xf32> to vector<1x1x1xf32>
      %400 = vector.extract %399[0, 0, 0] : f32 from vector<1x1x1xf32>
      %cst_170 = arith.constant 5.000000e-01 : f32
      %401 = arith.mulf %cst_170, %400 : f32
      %402 = vector.broadcast %401 : f32 to vector<32x1xf32>
      %403 = arith.addf %395, %402 : vector<32x1xf32>
      %c0_171 = arith.constant 0 : index
      %404 = memref.load %arg10[%c0_171] : memref<1xf32, #tpu.memory_space<smem>>
      %405 = vector.broadcast %385 : f32 to vector<32x1xf32>
      %406 = arith.mulf %403, %405 : vector<32x1xf32>
      %407 = vector.broadcast %404 : f32 to vector<32x1xf32>
      %408 = arith.subf %407, %406 : vector<32x1xf32>
      %cst_172 = arith.constant 5.000000e-01 : f32
      %409 = arith.mulf %cst_172, %386 : f32
      %410 = vector.broadcast %381 : vector<1x6xf32> to vector<32x6xf32>
      %411 = arith.mulf %388, %410 : vector<32x6xf32>
      %cst_173 = arith.constant dense<0.000000e+00> : vector<32xf32>
      %412 = vector.multi_reduction <add>, %411, %cst_173 [1] : vector<32x6xf32> to vector<32xf32>
      %413 = vector.shape_cast %412 : vector<32xf32> to vector<32x1xf32>
      %414 = vector.broadcast %409 : f32 to vector<32x1xf32>
      %415 = arith.mulf %414, %413 : vector<32x1xf32>
      %416 = arith.addf %408, %415 : vector<32x1xf32>
      %417 = vector.broadcast %385 : f32 to vector<1x6xf32>
      %418 = arith.mulf %381, %417 : vector<1x6xf32>
      %419 = vector.broadcast %418 : vector<1x6xf32> to vector<32x6xf32>
      %420 = arith.subf %380, %419 : vector<32x6xf32>
      %cst_174 = arith.constant 5.000000e-01 : f32
      %421 = arith.mulf %cst_174, %386 : f32
      %422 = vector.broadcast %421 : f32 to vector<32x6xf32>
      %423 = arith.mulf %422, %388 : vector<32x6xf32>
      %424 = arith.addf %420, %423 : vector<32x6xf32>
      %c0_175 = arith.constant 0 : index
      %c0_176 = arith.constant 0 : index
      %425 = vector.load %arg11[%c0_175, %c0_176] : memref<32x1xf32, #tpu.memory_space<vmem>>, vector<32x1xf32>
      tpu.vector_store %arg11[%c0_175, %c0_176], %416 {strides = array<i32>} : memref<32x1xf32, #tpu.memory_space<vmem>>, vector<32x1xf32>,
      %c0_177 = arith.constant 0 : index
      %c0_178 = arith.constant 0 : index
      %426 = vector.load %arg12[%c0_177, %c0_178] : memref<32x6xf32, #tpu.memory_space<vmem>>, vector<32x6xf32>
      tpu.vector_store %arg12[%c0_177, %c0_178], %424 {strides = array<i32>} : memref<32x6xf32, #tpu.memory_space<vmem>>, vector<32x6xf32>,
      %c0_179 = arith.constant 0 : index
      %c0_180 = arith.constant 0 : index
      %c0_181 = arith.constant 0 : index
      %427 = vector.load %arg13[%c0_179, %c0_180, %c0_181] : memref<8x32x6xf32, #tpu.memory_space<vmem>>, vector<1x32x6xf32>
      %428 = vector.shape_cast %427 : vector<1x32x6xf32> to vector<32x6xf32>
      %429 = vector.shape_cast %424 : vector<32x6xf32> to vector<1x32x6xf32>
      tpu.vector_store %arg13[%c0_179, %c0_180, %c0_181], %429 {strides = array<i32>} : memref<8x32x6xf32, #tpu.memory_space<vmem>>, vector<1x32x6xf32>,
    } else {
    }
    %c0_i32_1 = arith.constant 0 : i32
    %3 = arith.cmpi sgt, %arg0, %c0_i32_1 : i32
    %4 = arith.extui %3 : i1 to i32
    %c0_i32_2 = arith.constant 0 : i32
    %5 = arith.cmpi ne, %4, %c0_i32_2 : i32
    scf.if %5 {
      %c8_i32_155 = arith.constant 8 : i32
      %380 = arith.muli %arg0, %c8_i32_155 : i32
      %c0_i32_156 = arith.constant 0 : i32
      %381 = arith.addi %380, %c0_i32_156 : i32
      %382 = arith.index_cast %381 : i32 to index
      %383 = memref.load %arg8[%382] : memref<24xf32, #tpu.memory_space<smem>>
      %384 = arith.index_cast %381 : i32 to index
      %385 = memref.load %arg9[%384] : memref<24xf32, #tpu.memory_space<smem>>
      %c0_157 = arith.constant 0 : index
      %c0_158 = arith.constant 0 : index
      %c0_159 = arith.constant 0 : index
      %386 = vector.load %arg3[%c0_157, %c0_158, %c0_159] : memref<8x32x6xf32, #tpu.memory_space<vmem>>, vector<1x32x6xf32>
      %387 = vector.shape_cast %386 : vector<1x32x6xf32> to vector<32x6xf32>
      %c0_160 = arith.constant 0 : index
      %c0_161 = arith.constant 0 : index
      %c0_162 = arith.constant 0 : index
      %388 = vector.load %arg4[%c0_160, %c0_161, %c0_162] : memref<8x8x16xf32, #tpu.memory_space<vmem>>, vector<1x8x16xf32>
      %389 = vector.shape_cast %388 : vector<1x8x16xf32> to vector<8x16xf32>
      %390 = vector.extract_strided_slice %389 {offsets = [0, 0], sizes = [1, 6], strides = [1, 1]} : vector<8x16xf32> to vector<1x6xf32>
      %391 = vector.extract_strided_slice %389 {offsets = [1, 0], sizes = [1, 16], strides = [1, 1]} : vector<8x16xf32> to vector<1x16xf32>
      %392 = vector.extract_strided_slice %389 {offsets = [2, 0], sizes = [1, 16], strides = [1, 1]} : vector<8x16xf32> to vector<1x16xf32>
      %393 = vector.extract_strided_slice %389 {offsets = [3, 0], sizes = [1, 16], strides = [1, 1]} : vector<8x16xf32> to vector<1x16xf32>
      %394 = vector.extract_strided_slice %389 {offsets = [4, 0], sizes = [1, 16], strides = [1, 1]} : vector<8x16xf32> to vector<1x16xf32>
      %395 = vector.extract_strided_slice %389 {offsets = [5, 0], sizes = [1, 16], strides = [1, 1]} : vector<8x16xf32> to vector<1x16xf32>
      %396 = vector.extract_strided_slice %389 {offsets = [6, 0], sizes = [1, 16], strides = [1, 1]} : vector<8x16xf32> to vector<1x16xf32>
      %397 = vector.extract_strided_slice %389 {offsets = [7, 0], sizes = [1, 6], strides = [1, 1]} : vector<8x16xf32> to vector<1x6xf32>
      %c0_163 = arith.constant 0 : index
      %c0_164 = arith.constant 0 : index
      %398 = vector.load %arg12[%c0_163, %c0_164] : memref<32x6xf32, #tpu.memory_space<vmem>>, vector<32x6xf32>
      %c0_165 = arith.constant 0 : index
      %c0_166 = arith.constant 0 : index
      %399 = vector.load %arg11[%c0_165, %c0_166] : memref<32x1xf32, #tpu.memory_space<vmem>>, vector<32x1xf32>
      %c0_167 = arith.constant 0 : index
      %c0_168 = arith.constant 0 : index
      %c0_169 = arith.constant 0 : index
      %400 = vector.load %arg5[%c0_167, %c0_168, %c0_169] : memref<8x6x16xf32, #tpu.memory_space<vmem>>, vector<1x6x16xf32>
      %401 = vector.shape_cast %400 : vector<1x6x16xf32> to vector<6x16xf32>
      %cst_170 = arith.constant dense<0.000000e+00> : vector<32x16xf32>
      %402 = tpu.matmul %398, %401, %cst_170 {dimension_numbers = #tpu.dot_dimension_numbers<[1], [0], [0], [1], [0, 0, 1, 1], [], []>} : vector<32x6xf32>, vector<6x16xf32>, vector<32x16xf32> -> vector<32x16xf32>
      %403 = vector.broadcast %391 : vector<1x16xf32> to vector<32x16xf32>
      %404 = arith.addf %402, %403 : vector<32x16xf32>
      %cst_171 = arith.constant dense<0.000000e+00> : vector<16xf32>
      %405 = vector.multi_reduction <add>, %404, %cst_171 [0] : vector<32x16xf32> to vector<16xf32>
      %406 = vector.shape_cast %405 : vector<16xf32> to vector<1x16xf32>
      %cst_172 = arith.constant 3.200000e+01 : f32
      %407 = vector.broadcast %cst_172 : f32 to vector<1x16xf32>
      %408 = arith.divf %406, %407 : vector<1x16xf32>
      %409 = arith.mulf %404, %404 : vector<32x16xf32>
      %cst_173 = arith.constant dense<0.000000e+00> : vector<16xf32>
      %410 = vector.multi_reduction <add>, %409, %cst_173 [0] : vector<32x16xf32> to vector<16xf32>
      %411 = vector.shape_cast %410 : vector<16xf32> to vector<1x16xf32>
      %cst_174 = arith.constant 3.200000e+01 : f32
      %412 = vector.broadcast %cst_174 : f32 to vector<1x16xf32>
      %413 = arith.divf %411, %412 : vector<1x16xf32>
      %414 = arith.mulf %408, %408 : vector<1x16xf32>
      %415 = arith.subf %413, %414 : vector<1x16xf32>
      %416 = vector.broadcast %408 : vector<1x16xf32> to vector<32x16xf32>
      %417 = arith.subf %404, %416 : vector<32x16xf32>
      %cst_175 = arith.constant 9.99999974E-6 : f32
      %418 = vector.broadcast %cst_175 : f32 to vector<1x16xf32>
      %419 = arith.addf %415, %418 : vector<1x16xf32>
      %420 = math.rsqrt %419 : vector<1x16xf32>
      %421 = vector.broadcast %420 : vector<1x16xf32> to vector<32x16xf32>
      %422 = arith.mulf %417, %421 : vector<32x16xf32>
      %423 = vector.broadcast %392 : vector<1x16xf32> to vector<32x16xf32>
      %424 = arith.mulf %422, %423 : vector<32x16xf32>
      %425 = vector.broadcast %393 : vector<1x16xf32> to vector<32x16xf32>
      %426 = arith.addf %424, %425 : vector<32x16xf32>
      %cst_176 = arith.constant 0.000000e+00 : f32
      %427 = vector.broadcast %cst_176 : f32 to vector<32x16xf32>
      %428 = arith.maximumf %426, %427 : vector<32x16xf32>
      %c0_177 = arith.constant 0 : index
      %c0_178 = arith.constant 0 : index
      %c0_179 = arith.constant 0 : index
      %429 = vector.load %arg6[%c0_177, %c0_178, %c0_179] : memref<8x16x16xf32, #tpu.memory_space<vmem>>, vector<1x16x16xf32>
      %430 = vector.shape_cast %429 : vector<1x16x16xf32> to vector<16x16xf32>
      %cst_180 = arith.constant dense<0.000000e+00> : vector<32x16xf32>
      %431 = tpu.matmul %428, %430, %cst_180 {dimension_numbers = #tpu.dot_dimension_numbers<[1], [0], [0], [1], [0, 0, 1, 1], [], []>} : vector<32x16xf32>, vector<16x16xf32>, vector<32x16xf32> -> vector<32x16xf32>
      %432 = vector.broadcast %394 : vector<1x16xf32> to vector<32x16xf32>
      %433 = arith.addf %431, %432 : vector<32x16xf32>
      %cst_181 = arith.constant dense<0.000000e+00> : vector<16xf32>
      %434 = vector.multi_reduction <add>, %433, %cst_181 [0] : vector<32x16xf32> to vector<16xf32>
      %435 = vector.shape_cast %434 : vector<16xf32> to vector<1x16xf32>
      %cst_182 = arith.constant 3.200000e+01 : f32
      %436 = vector.broadcast %cst_182 : f32 to vector<1x16xf32>
      %437 = arith.divf %435, %436 : vector<1x16xf32>
      %438 = arith.mulf %433, %433 : vector<32x16xf32>
      %cst_183 = arith.constant dense<0.000000e+00> : vector<16xf32>
      %439 = vector.multi_reduction <add>, %438, %cst_183 [0] : vector<32x16xf32> to vector<16xf32>
      %440 = vector.shape_cast %439 : vector<16xf32> to vector<1x16xf32>
      %cst_184 = arith.constant 3.200000e+01 : f32
      %441 = vector.broadcast %cst_184 : f32 to vector<1x16xf32>
      %442 = arith.divf %440, %441 : vector<1x16xf32>
      %443 = arith.mulf %437, %437 : vector<1x16xf32>
      %444 = arith.subf %442, %443 : vector<1x16xf32>
      %445 = vector.broadcast %437 : vector<1x16xf32> to vector<32x16xf32>
      %446 = arith.subf %433, %445 : vector<32x16xf32>
      %cst_185 = arith.constant 9.99999974E-6 : f32
      %447 = vector.broadcast %cst_185 : f32 to vector<1x16xf32>
      %448 = arith.addf %444, %447 : vector<1x16xf32>
      %449 = math.rsqrt %448 : vector<1x16xf32>
      %450 = vector.broadcast %449 : vector<1x16xf32> to vector<32x16xf32>
      %451 = arith.mulf %446, %450 : vector<32x16xf32>
      %452 = vector.broadcast %395 : vector<1x16xf32> to vector<32x16xf32>
      %453 = arith.mulf %451, %452 : vector<32x16xf32>
      %454 = vector.broadcast %396 : vector<1x16xf32> to vector<32x16xf32>
      %455 = arith.addf %453, %454 : vector<32x16xf32>
      %cst_186 = arith.constant 0.000000e+00 : f32
      %456 = vector.broadcast %cst_186 : f32 to vector<32x16xf32>
      %457 = arith.maximumf %455, %456 : vector<32x16xf32>
      %c0_187 = arith.constant 0 : index
      %c0_188 = arith.constant 0 : index
      %c0_189 = arith.constant 0 : index
      %458 = vector.load %arg7[%c0_187, %c0_188, %c0_189] : memref<8x16x6xf32, #tpu.memory_space<vmem>>, vector<1x16x6xf32>
      %459 = vector.shape_cast %458 : vector<1x16x6xf32> to vector<16x6xf32>
      %cst_190 = arith.constant dense<0.000000e+00> : vector<32x6xf32>
      %460 = tpu.matmul %457, %459, %cst_190 {dimension_numbers = #tpu.dot_dimension_numbers<[1], [0], [0], [1], [0, 0, 1, 1], [], []>} : vector<32x16xf32>, vector<16x6xf32>, vector<32x6xf32> -> vector<32x6xf32>
      %461 = vector.broadcast %397 : vector<1x6xf32> to vector<32x6xf32>
      %462 = arith.addf %460, %461 : vector<32x6xf32>
      %463 = vector.broadcast %390 : vector<1x6xf32> to vector<32x6xf32>
      %464 = arith.subf %398, %463 : vector<32x6xf32>
      %465 = arith.mulf %464, %464 : vector<32x6xf32>
      %cst_191 = arith.constant dense<0.000000e+00> : vector<32xf32>
      %466 = vector.multi_reduction <add>, %465, %cst_191 [1] : vector<32x6xf32> to vector<32xf32>
      %467 = vector.shape_cast %466 : vector<32xf32> to vector<32x1xf32>
      %cst_192 = arith.constant 3.200000e-01 : f32
      %468 = vector.broadcast %cst_192 : f32 to vector<32x1xf32>
      %469 = arith.mulf %468, %467 : vector<32x1xf32>
      %470 = arith.mulf %462, %462 : vector<32x6xf32>
      %cst_193 = arith.constant dense<0.000000e+00> : vector<32xf32>
      %471 = vector.multi_reduction <add>, %470, %cst_193 [1] : vector<32x6xf32> to vector<32xf32>
      %472 = vector.shape_cast %471 : vector<32xf32> to vector<32x1xf32>
      %cst_194 = arith.constant 5.000000e-01 : f32
      %473 = vector.broadcast %cst_194 : f32 to vector<32x1xf32>
      %474 = arith.mulf %473, %472 : vector<32x1xf32>
      %475 = arith.addf %469, %474 : vector<32x1xf32>
      %476 = vector.broadcast %383 : f32 to vector<32x1xf32>
      %477 = arith.mulf %475, %476 : vector<32x1xf32>
      %478 = arith.subf %399, %477 : vector<32x1xf32>
      %cst_195 = arith.constant 5.000000e-01 : f32
      %479 = arith.mulf %cst_195, %385 : f32
      %480 = arith.mulf %462, %387 : vector<32x6xf32>
      %cst_196 = arith.constant dense<0.000000e+00> : vector<32xf32>
      %481 = vector.multi_reduction <add>, %480, %cst_196 [1] : vector<32x6xf32> to vector<32xf32>
      %482 = vector.shape_cast %481 : vector<32xf32> to vector<32x1xf32>
      %483 = vector.broadcast %479 : f32 to vector<32x1xf32>
      %484 = arith.mulf %483, %482 : vector<32x1xf32>
      %485 = arith.addf %478, %484 : vector<32x1xf32>
      %486 = vector.broadcast %383 : f32 to vector<32x6xf32>
      %487 = arith.mulf %462, %486 : vector<32x6xf32>
      %488 = arith.subf %398, %487 : vector<32x6xf32>
      %cst_197 = arith.constant 5.000000e-01 : f32
      %489 = arith.mulf %cst_197, %385 : f32
      %490 = vector.broadcast %489 : f32 to vector<32x6xf32>
      %491 = arith.mulf %490, %387 : vector<32x6xf32>
      %492 = arith.addf %488, %491 : vector<32x6xf32>
      %c0_198 = arith.constant 0 : index
      %c0_199 = arith.constant 0 : index
      %493 = vector.load %arg11[%c0_198, %c0_199] : memref<32x1xf32, #tpu.memory_space<vmem>>, vector<32x1xf32>
      tpu.vector_store %arg11[%c0_198, %c0_199], %485 {strides = array<i32>} : memref<32x1xf32, #tpu.memory_space<vmem>>, vector<32x1xf32>,
      %c0_200 = arith.constant 0 : index
      %c0_201 = arith.constant 0 : index
      %494 = vector.load %arg12[%c0_200, %c0_201] : memref<32x6xf32, #tpu.memory_space<vmem>>, vector<32x6xf32>
      tpu.vector_store %arg12[%c0_200, %c0_201], %492 {strides = array<i32>} : memref<32x6xf32, #tpu.memory_space<vmem>>, vector<32x6xf32>,
      %c0_202 = arith.constant 0 : index
      %c0_203 = arith.constant 0 : index
      %c0_204 = arith.constant 0 : index
      %495 = vector.load %arg13[%c0_202, %c0_203, %c0_204] : memref<8x32x6xf32, #tpu.memory_space<vmem>>, vector<1x32x6xf32>
      %496 = vector.shape_cast %495 : vector<1x32x6xf32> to vector<32x6xf32>
      %497 = vector.shape_cast %492 : vector<32x6xf32> to vector<1x32x6xf32>
      tpu.vector_store %arg13[%c0_202, %c0_203, %c0_204], %497 {strides = array<i32>} : memref<8x32x6xf32, #tpu.memory_space<vmem>>, vector<1x32x6xf32>,
    } else {
    }
    %c8_i32 = arith.constant 8 : i32
    %6 = arith.muli %arg0, %c8_i32 : i32
    %c1_i32 = arith.constant 1 : i32
    %7 = arith.addi %6, %c1_i32 : i32
    %8 = arith.index_cast %7 : i32 to index
    %9 = memref.load %arg8[%8] : memref<24xf32, #tpu.memory_space<smem>>
    %10 = arith.index_cast %7 : i32 to index
    %11 = memref.load %arg9[%10] : memref<24xf32, #tpu.memory_space<smem>>
    %c1 = arith.constant 1 : index
    %c0 = arith.constant 0 : index
    %c0_3 = arith.constant 0 : index
    %12 = vector.load %arg3[%c1, %c0, %c0_3] : memref<8x32x6xf32, #tpu.memory_space<vmem>>, vector<1x32x6xf32>
    %13 = vector.shape_cast %12 : vector<1x32x6xf32> to vector<32x6xf32>
    %c1_4 = arith.constant 1 : index
    %c0_5 = arith.constant 0 : index
    %c0_6 = arith.constant 0 : index
    %14 = vector.load %arg4[%c1_4, %c0_5, %c0_6] : memref<8x8x16xf32, #tpu.memory_space<vmem>>, vector<1x8x16xf32>
    %15 = vector.shape_cast %14 : vector<1x8x16xf32> to vector<8x16xf32>
    %16 = vector.extract_strided_slice %15 {offsets = [0, 0], sizes = [1, 6], strides = [1, 1]} : vector<8x16xf32> to vector<1x6xf32>
    %17 = vector.extract_strided_slice %15 {offsets = [1, 0], sizes = [1, 16], strides = [1, 1]} : vector<8x16xf32> to vector<1x16xf32>
    %18 = vector.extract_strided_slice %15 {offsets = [2, 0], sizes = [1, 16], strides = [1, 1]} : vector<8x16xf32> to vector<1x16xf32>
    %19 = vector.extract_strided_slice %15 {offsets = [3, 0], sizes = [1, 16], strides = [1, 1]} : vector<8x16xf32> to vector<1x16xf32>
    %20 = vector.extract_strided_slice %15 {offsets = [4, 0], sizes = [1, 16], strides = [1, 1]} : vector<8x16xf32> to vector<1x16xf32>
    %21 = vector.extract_strided_slice %15 {offsets = [5, 0], sizes = [1, 16], strides = [1, 1]} : vector<8x16xf32> to vector<1x16xf32>
    %22 = vector.extract_strided_slice %15 {offsets = [6, 0], sizes = [1, 16], strides = [1, 1]} : vector<8x16xf32> to vector<1x16xf32>
    %23 = vector.extract_strided_slice %15 {offsets = [7, 0], sizes = [1, 6], strides = [1, 1]} : vector<8x16xf32> to vector<1x6xf32>
    %c0_7 = arith.constant 0 : index
    %c0_8 = arith.constant 0 : index
    %24 = vector.load %arg12[%c0_7, %c0_8] : memref<32x6xf32, #tpu.memory_space<vmem>>, vector<32x6xf32>
    %c0_9 = arith.constant 0 : index
    %c0_10 = arith.constant 0 : index
    %25 = vector.load %arg11[%c0_9, %c0_10] : memref<32x1xf32, #tpu.memory_space<vmem>>, vector<32x1xf32>
    %c1_11 = arith.constant 1 : index
    %c0_12 = arith.constant 0 : index
    %c0_13 = arith.constant 0 : index
    %26 = vector.load %arg5[%c1_11, %c0_12, %c0_13] : memref<8x6x16xf32, #tpu.memory_space<vmem>>, vector<1x6x16xf32>
    %27 = vector.shape_cast %26 : vector<1x6x16xf32> to vector<6x16xf32>
    %cst = arith.constant dense<0.000000e+00> : vector<32x16xf32>
    %28 = tpu.matmul %24, %27, %cst {dimension_numbers = #tpu.dot_dimension_numbers<[1], [0], [0], [1], [0, 0, 1, 1], [], []>} : vector<32x6xf32>, vector<6x16xf32>, vector<32x16xf32> -> vector<32x16xf32>
    %29 = vector.broadcast %17 : vector<1x16xf32> to vector<32x16xf32>
    %30 = arith.addf %28, %29 : vector<32x16xf32>
    %cst_14 = arith.constant dense<0.000000e+00> : vector<16xf32>
    %31 = vector.multi_reduction <add>, %30, %cst_14 [0] : vector<32x16xf32> to vector<16xf32>
    %32 = vector.shape_cast %31 : vector<16xf32> to vector<1x16xf32>
    %cst_15 = arith.constant 3.200000e+01 : f32
    %33 = vector.broadcast %cst_15 : f32 to vector<1x16xf32>
    %34 = arith.divf %32, %33 : vector<1x16xf32>
    %35 = arith.mulf %30, %30 : vector<32x16xf32>
    %cst_16 = arith.constant dense<0.000000e+00> : vector<16xf32>
    %36 = vector.multi_reduction <add>, %35, %cst_16 [0] : vector<32x16xf32> to vector<16xf32>
    %37 = vector.shape_cast %36 : vector<16xf32> to vector<1x16xf32>
    %cst_17 = arith.constant 3.200000e+01 : f32
    %38 = vector.broadcast %cst_17 : f32 to vector<1x16xf32>
    %39 = arith.divf %37, %38 : vector<1x16xf32>
    %40 = arith.mulf %34, %34 : vector<1x16xf32>
    %41 = arith.subf %39, %40 : vector<1x16xf32>
    %42 = vector.broadcast %34 : vector<1x16xf32> to vector<32x16xf32>
    %43 = arith.subf %30, %42 : vector<32x16xf32>
    %cst_18 = arith.constant 9.99999974E-6 : f32
    %44 = vector.broadcast %cst_18 : f32 to vector<1x16xf32>
    %45 = arith.addf %41, %44 : vector<1x16xf32>
    %46 = math.rsqrt %45 : vector<1x16xf32>
    %47 = vector.broadcast %46 : vector<1x16xf32> to vector<32x16xf32>
    %48 = arith.mulf %43, %47 : vector<32x16xf32>
    %49 = vector.broadcast %18 : vector<1x16xf32> to vector<32x16xf32>
    %50 = arith.mulf %48, %49 : vector<32x16xf32>
    %51 = vector.broadcast %19 : vector<1x16xf32> to vector<32x16xf32>
    %52 = arith.addf %50, %51 : vector<32x16xf32>
    %cst_19 = arith.constant 0.000000e+00 : f32
    %53 = vector.broadcast %cst_19 : f32 to vector<32x16xf32>
    %54 = arith.maximumf %52, %53 : vector<32x16xf32>
    %c1_20 = arith.constant 1 : index
    %c0_21 = arith.constant 0 : index
    %c0_22 = arith.constant 0 : index
    %55 = vector.load %arg6[%c1_20, %c0_21, %c0_22] : memref<8x16x16xf32, #tpu.memory_space<vmem>>, vector<1x16x16xf32>
    %56 = vector.shape_cast %55 : vector<1x16x16xf32> to vector<16x16xf32>
    %cst_23 = arith.constant dense<0.000000e+00> : vector<32x16xf32>
    %57 = tpu.matmul %54, %56, %cst_23 {dimension_numbers = #tpu.dot_dimension_numbers<[1], [0], [0], [1], [0, 0, 1, 1], [], []>} : vector<32x16xf32>, vector<16x16xf32>, vector<32x16xf32> -> vector<32x16xf32>
    %58 = vector.broadcast %20 : vector<1x16xf32> to vector<32x16xf32>
    %59 = arith.addf %57, %58 : vector<32x16xf32>
    %cst_24 = arith.constant dense<0.000000e+00> : vector<16xf32>
    %60 = vector.multi_reduction <add>, %59, %cst_24 [0] : vector<32x16xf32> to vector<16xf32>
    %61 = vector.shape_cast %60 : vector<16xf32> to vector<1x16xf32>
    %cst_25 = arith.constant 3.200000e+01 : f32
    %62 = vector.broadcast %cst_25 : f32 to vector<1x16xf32>
    %63 = arith.divf %61, %62 : vector<1x16xf32>
    %64 = arith.mulf %59, %59 : vector<32x16xf32>
    %cst_26 = arith.constant dense<0.000000e+00> : vector<16xf32>
    %65 = vector.multi_reduction <add>, %64, %cst_26 [0] : vector<32x16xf32> to vector<16xf32>
    %66 = vector.shape_cast %65 : vector<16xf32> to vector<1x16xf32>
    %cst_27 = arith.constant 3.200000e+01 : f32
    %67 = vector.broadcast %cst_27 : f32 to vector<1x16xf32>
    %68 = arith.divf %66, %67 : vector<1x16xf32>
    %69 = arith.mulf %63, %63 : vector<1x16xf32>
    %70 = arith.subf %68, %69 : vector<1x16xf32>
    %71 = vector.broadcast %63 : vector<1x16xf32> to vector<32x16xf32>
    %72 = arith.subf %59, %71 : vector<32x16xf32>
    %cst_28 = arith.constant 9.99999974E-6 : f32
    %73 = vector.broadcast %cst_28 : f32 to vector<1x16xf32>
    %74 = arith.addf %70, %73 : vector<1x16xf32>
    %75 = math.rsqrt %74 : vector<1x16xf32>
    %76 = vector.broadcast %75 : vector<1x16xf32> to vector<32x16xf32>
    %77 = arith.mulf %72, %76 : vector<32x16xf32>
    %78 = vector.broadcast %21 : vector<1x16xf32> to vector<32x16xf32>
    %79 = arith.mulf %77, %78 : vector<32x16xf32>
    %80 = vector.broadcast %22 : vector<1x16xf32> to vector<32x16xf32>
    %81 = arith.addf %79, %80 : vector<32x16xf32>
    %cst_29 = arith.constant 0.000000e+00 : f32
    %82 = vector.broadcast %cst_29 : f32 to vector<32x16xf32>
    %83 = arith.maximumf %81, %82 : vector<32x16xf32>
    %c1_30 = arith.constant 1 : index
    %c0_31 = arith.constant 0 : index
    %c0_32 = arith.constant 0 : index
    %84 = vector.load %arg7[%c1_30, %c0_31, %c0_32] : memref<8x16x6xf32, #tpu.memory_space<vmem>>, vector<1x16x6xf32>
    %85 = vector.shape_cast %84 : vector<1x16x6xf32> to vector<16x6xf32>
    %cst_33 = arith.constant dense<0.000000e+00> : vector<32x6xf32>
    %86 = tpu.matmul %83, %85, %cst_33 {dimension_numbers = #tpu.dot_dimension_numbers<[1], [0], [0], [1], [0, 0, 1, 1], [], []>} : vector<32x16xf32>, vector<16x6xf32>, vector<32x6xf32> -> vector<32x6xf32>
    %87 = vector.broadcast %23 : vector<1x6xf32> to vector<32x6xf32>
    %88 = arith.addf %86, %87 : vector<32x6xf32>
    %89 = vector.broadcast %16 : vector<1x6xf32> to vector<32x6xf32>
    %90 = arith.subf %24, %89 : vector<32x6xf32>
    %91 = arith.mulf %90, %90 : vector<32x6xf32>
    %cst_34 = arith.constant dense<0.000000e+00> : vector<32xf32>
    %92 = vector.multi_reduction <add>, %91, %cst_34 [1] : vector<32x6xf32> to vector<32xf32>
    %93 = vector.shape_cast %92 : vector<32xf32> to vector<32x1xf32>
    %cst_35 = arith.constant 3.200000e-01 : f32
    %94 = vector.broadcast %cst_35 : f32 to vector<32x1xf32>
    %95 = arith.mulf %94, %93 : vector<32x1xf32>
    %96 = arith.mulf %88, %88 : vector<32x6xf32>
    %cst_36 = arith.constant dense<0.000000e+00> : vector<32xf32>
    %97 = vector.multi_reduction <add>, %96, %cst_36 [1] : vector<32x6xf32> to vector<32xf32>
    %98 = vector.shape_cast %97 : vector<32xf32> to vector<32x1xf32>
    %cst_37 = arith.constant 5.000000e-01 : f32
    %99 = vector.broadcast %cst_37 : f32 to vector<32x1xf32>
    %100 = arith.mulf %99, %98 : vector<32x1xf32>
    %101 = arith.addf %95, %100 : vector<32x1xf32>
    %102 = vector.broadcast %9 : f32 to vector<32x1xf32>
    %103 = arith.mulf %101, %102 : vector<32x1xf32>
    %104 = arith.subf %25, %103 : vector<32x1xf32>
    %cst_38 = arith.constant 5.000000e-01 : f32
    %105 = arith.mulf %cst_38, %11 : f32
    %106 = arith.mulf %88, %13 : vector<32x6xf32>
    %cst_39 = arith.constant dense<0.000000e+00> : vector<32xf32>
    %107 = vector.multi_reduction <add>, %106, %cst_39 [1] : vector<32x6xf32> to vector<32xf32>
    %108 = vector.shape_cast %107 : vector<32xf32> to vector<32x1xf32>
    %109 = vector.broadcast %105 : f32 to vector<32x1xf32>
    %110 = arith.mulf %109, %108 : vector<32x1xf32>
    %111 = arith.addf %104, %110 : vector<32x1xf32>
    %112 = vector.broadcast %9 : f32 to vector<32x6xf32>
    %113 = arith.mulf %88, %112 : vector<32x6xf32>
    %114 = arith.subf %24, %113 : vector<32x6xf32>
    %cst_40 = arith.constant 5.000000e-01 : f32
    %115 = arith.mulf %cst_40, %11 : f32
    %116 = vector.broadcast %115 : f32 to vector<32x6xf32>
    %117 = arith.mulf %116, %13 : vector<32x6xf32>
    %118 = arith.addf %114, %117 : vector<32x6xf32>
    %c0_41 = arith.constant 0 : index
    %c0_42 = arith.constant 0 : index
    %119 = vector.load %arg11[%c0_41, %c0_42] : memref<32x1xf32, #tpu.memory_space<vmem>>, vector<32x1xf32>
    tpu.vector_store %arg11[%c0_41, %c0_42], %111 {strides = array<i32>} : memref<32x1xf32, #tpu.memory_space<vmem>>, vector<32x1xf32>,
    %c0_43 = arith.constant 0 : index
    %c0_44 = arith.constant 0 : index
    %120 = vector.load %arg12[%c0_43, %c0_44] : memref<32x6xf32, #tpu.memory_space<vmem>>, vector<32x6xf32>
    tpu.vector_store %arg12[%c0_43, %c0_44], %118 {strides = array<i32>} : memref<32x6xf32, #tpu.memory_space<vmem>>, vector<32x6xf32>,
    %c1_45 = arith.constant 1 : index
    %c0_46 = arith.constant 0 : index
    %c0_47 = arith.constant 0 : index
    %121 = vector.load %arg13[%c1_45, %c0_46, %c0_47] : memref<8x32x6xf32, #tpu.memory_space<vmem>>, vector<1x32x6xf32>
    %122 = vector.shape_cast %121 : vector<1x32x6xf32> to vector<32x6xf32>
    %123 = vector.shape_cast %118 : vector<32x6xf32> to vector<1x32x6xf32>
    tpu.vector_store %arg13[%c1_45, %c0_46, %c0_47], %123 {strides = array<i32>} : memref<8x32x6xf32, #tpu.memory_space<vmem>>, vector<1x32x6xf32>,
    %c8_i32_48 = arith.constant 8 : i32
    %124 = arith.muli %arg0, %c8_i32_48 : i32
    %c2_i32 = arith.constant 2 : i32
    %125 = arith.addi %124, %c2_i32 : i32
    %126 = arith.index_cast %125 : i32 to index
    %127 = memref.load %arg8[%126] : memref<24xf32, #tpu.memory_space<smem>>
    %128 = arith.index_cast %125 : i32 to index
    %129 = memref.load %arg9[%128] : memref<24xf32, #tpu.memory_space<smem>>
    %c2 = arith.constant 2 : index
    %c0_49 = arith.constant 0 : index
    %c0_50 = arith.constant 0 : index
    %130 = vector.load %arg3[%c2, %c0_49, %c0_50] : memref<8x32x6xf32, #tpu.memory_space<vmem>>, vector<1x32x6xf32>
    %131 = vector.shape_cast %130 : vector<1x32x6xf32> to vector<32x6xf32>
    %c2_51 = arith.constant 2 : index
    %c0_52 = arith.constant 0 : index
    %c0_53 = arith.constant 0 : index
    %132 = vector.load %arg4[%c2_51, %c0_52, %c0_53] : memref<8x8x16xf32, #tpu.memory_space<vmem>>, vector<1x8x16xf32>
    %133 = vector.shape_cast %132 : vector<1x8x16xf32> to vector<8x16xf32>
    %134 = vector.extract_strided_slice %133 {offsets = [0, 0], sizes = [1, 6], strides = [1, 1]} : vector<8x16xf32> to vector<1x6xf32>
    %135 = vector.extract_strided_slice %133 {offsets = [1, 0], sizes = [1, 16], strides = [1, 1]} : vector<8x16xf32> to vector<1x16xf32>
    %136 = vector.extract_strided_slice %133 {offsets = [2, 0], sizes = [1, 16], strides = [1, 1]} : vector<8x16xf32> to vector<1x16xf32>
    %137 = vector.extract_strided_slice %133 {offsets = [3, 0], sizes = [1, 16], strides = [1, 1]} : vector<8x16xf32> to vector<1x16xf32>
    %138 = vector.extract_strided_slice %133 {offsets = [4, 0], sizes = [1, 16], strides = [1, 1]} : vector<8x16xf32> to vector<1x16xf32>
    %139 = vector.extract_strided_slice %133 {offsets = [5, 0], sizes = [1, 16], strides = [1, 1]} : vector<8x16xf32> to vector<1x16xf32>
    %140 = vector.extract_strided_slice %133 {offsets = [6, 0], sizes = [1, 16], strides = [1, 1]} : vector<8x16xf32> to vector<1x16xf32>
    %141 = vector.extract_strided_slice %133 {offsets = [7, 0], sizes = [1, 6], strides = [1, 1]} : vector<8x16xf32> to vector<1x6xf32>
    %c0_54 = arith.constant 0 : index
    %c0_55 = arith.constant 0 : index
    %142 = vector.load %arg12[%c0_54, %c0_55] : memref<32x6xf32, #tpu.memory_space<vmem>>, vector<32x6xf32>
    %c0_56 = arith.constant 0 : index
    %c0_57 = arith.constant 0 : index
    %143 = vector.load %arg11[%c0_56, %c0_57] : memref<32x1xf32, #tpu.memory_space<vmem>>, vector<32x1xf32>
    %c2_58 = arith.constant 2 : index
    %c0_59 = arith.constant 0 : index
    %c0_60 = arith.constant 0 : index
    %144 = vector.load %arg5[%c2_58, %c0_59, %c0_60] : memref<8x6x16xf32, #tpu.memory_space<vmem>>, vector<1x6x16xf32>
    %145 = vector.shape_cast %144 : vector<1x6x16xf32> to vector<6x16xf32>
    %cst_61 = arith.constant dense<0.000000e+00> : vector<32x16xf32>
    %146 = tpu.matmul %142, %145, %cst_61 {dimension_numbers = #tpu.dot_dimension_numbers<[1], [0], [0], [1], [0, 0, 1, 1], [], []>} : vector<32x6xf32>, vector<6x16xf32>, vector<32x16xf32> -> vector<32x16xf32>
    %147 = vector.broadcast %135 : vector<1x16xf32> to vector<32x16xf32>
    %148 = arith.addf %146, %147 : vector<32x16xf32>
    %cst_62 = arith.constant dense<0.000000e+00> : vector<16xf32>
    %149 = vector.multi_reduction <add>, %148, %cst_62 [0] : vector<32x16xf32> to vector<16xf32>
    %150 = vector.shape_cast %149 : vector<16xf32> to vector<1x16xf32>
    %cst_63 = arith.constant 3.200000e+01 : f32
    %151 = vector.broadcast %cst_63 : f32 to vector<1x16xf32>
    %152 = arith.divf %150, %151 : vector<1x16xf32>
    %153 = arith.mulf %148, %148 : vector<32x16xf32>
    %cst_64 = arith.constant dense<0.000000e+00> : vector<16xf32>
    %154 = vector.multi_reduction <add>, %153, %cst_64 [0] : vector<32x16xf32> to vector<16xf32>
    %155 = vector.shape_cast %154 : vector<16xf32> to vector<1x16xf32>
    %cst_65 = arith.constant 3.200000e+01 : f32
    %156 = vector.broadcast %cst_65 : f32 to vector<1x16xf32>
    %157 = arith.divf %155, %156 : vector<1x16xf32>
    %158 = arith.mulf %152, %152 : vector<1x16xf32>
    %159 = arith.subf %157, %158 : vector<1x16xf32>
    %160 = vector.broadcast %152 : vector<1x16xf32> to vector<32x16xf32>
    %161 = arith.subf %148, %160 : vector<32x16xf32>
    %cst_66 = arith.constant 9.99999974E-6 : f32
    %162 = vector.broadcast %cst_66 : f32 to vector<1x16xf32>
    %163 = arith.addf %159, %162 : vector<1x16xf32>
    %164 = math.rsqrt %163 : vector<1x16xf32>
    %165 = vector.broadcast %164 : vector<1x16xf32> to vector<32x16xf32>
    %166 = arith.mulf %161, %165 : vector<32x16xf32>
    %167 = vector.broadcast %136 : vector<1x16xf32> to vector<32x16xf32>
    %168 = arith.mulf %166, %167 : vector<32x16xf32>
    %169 = vector.broadcast %137 : vector<1x16xf32> to vector<32x16xf32>
    %170 = arith.addf %168, %169 : vector<32x16xf32>
    %cst_67 = arith.constant 0.000000e+00 : f32
    %171 = vector.broadcast %cst_67 : f32 to vector<32x16xf32>
    %172 = arith.maximumf %170, %171 : vector<32x16xf32>
    %c2_68 = arith.constant 2 : index
    %c0_69 = arith.constant 0 : index
    %c0_70 = arith.constant 0 : index
    %173 = vector.load %arg6[%c2_68, %c0_69, %c0_70] : memref<8x16x16xf32, #tpu.memory_space<vmem>>, vector<1x16x16xf32>
    %174 = vector.shape_cast %173 : vector<1x16x16xf32> to vector<16x16xf32>
    %cst_71 = arith.constant dense<0.000000e+00> : vector<32x16xf32>
    %175 = tpu.matmul %172, %174, %cst_71 {dimension_numbers = #tpu.dot_dimension_numbers<[1], [0], [0], [1], [0, 0, 1, 1], [], []>} : vector<32x16xf32>, vector<16x16xf32>, vector<32x16xf32> -> vector<32x16xf32>
    %176 = vector.broadcast %138 : vector<1x16xf32> to vector<32x16xf32>
    %177 = arith.addf %175, %176 : vector<32x16xf32>
    %cst_72 = arith.constant dense<0.000000e+00> : vector<16xf32>
    %178 = vector.multi_reduction <add>, %177, %cst_72 [0] : vector<32x16xf32> to vector<16xf32>
    %179 = vector.shape_cast %178 : vector<16xf32> to vector<1x16xf32>
    %cst_73 = arith.constant 3.200000e+01 : f32
    %180 = vector.broadcast %cst_73 : f32 to vector<1x16xf32>
    %181 = arith.divf %179, %180 : vector<1x16xf32>
    %182 = arith.mulf %177, %177 : vector<32x16xf32>
    %cst_74 = arith.constant dense<0.000000e+00> : vector<16xf32>
    %183 = vector.multi_reduction <add>, %182, %cst_74 [0] : vector<32x16xf32> to vector<16xf32>
    %184 = vector.shape_cast %183 : vector<16xf32> to vector<1x16xf32>
    %cst_75 = arith.constant 3.200000e+01 : f32
    %185 = vector.broadcast %cst_75 : f32 to vector<1x16xf32>
    %186 = arith.divf %184, %185 : vector<1x16xf32>
    %187 = arith.mulf %181, %181 : vector<1x16xf32>
    %188 = arith.subf %186, %187 : vector<1x16xf32>
    %189 = vector.broadcast %181 : vector<1x16xf32> to vector<32x16xf32>
    %190 = arith.subf %177, %189 : vector<32x16xf32>
    %cst_76 = arith.constant 9.99999974E-6 : f32
    %191 = vector.broadcast %cst_76 : f32 to vector<1x16xf32>
    %192 = arith.addf %188, %191 : vector<1x16xf32>
    %193 = math.rsqrt %192 : vector<1x16xf32>
    %194 = vector.broadcast %193 : vector<1x16xf32> to vector<32x16xf32>
    %195 = arith.mulf %190, %194 : vector<32x16xf32>
    %196 = vector.broadcast %139 : vector<1x16xf32> to vector<32x16xf32>
    %197 = arith.mulf %195, %196 : vector<32x16xf32>
    %198 = vector.broadcast %140 : vector<1x16xf32> to vector<32x16xf32>
    %199 = arith.addf %197, %198 : vector<32x16xf32>
    %cst_77 = arith.constant 0.000000e+00 : f32
    %200 = vector.broadcast %cst_77 : f32 to vector<32x16xf32>
    %201 = arith.maximumf %199, %200 : vector<32x16xf32>
    %c2_78 = arith.constant 2 : index
    %c0_79 = arith.constant 0 : index
    %c0_80 = arith.constant 0 : index
    %202 = vector.load %arg7[%c2_78, %c0_79, %c0_80] : memref<8x16x6xf32, #tpu.memory_space<vmem>>, vector<1x16x6xf32>
    %203 = vector.shape_cast %202 : vector<1x16x6xf32> to vector<16x6xf32>
    %cst_81 = arith.constant dense<0.000000e+00> : vector<32x6xf32>
    %204 = tpu.matmul %201, %203, %cst_81 {dimension_numbers = #tpu.dot_dimension_numbers<[1], [0], [0], [1], [0, 0, 1, 1], [], []>} : vector<32x16xf32>, vector<16x6xf32>, vector<32x6xf32> -> vector<32x6xf32>
    %205 = vector.broadcast %141 : vector<1x6xf32> to vector<32x6xf32>
    %206 = arith.addf %204, %205 : vector<32x6xf32>
    %207 = vector.broadcast %134 : vector<1x6xf32> to vector<32x6xf32>
    %208 = arith.subf %142, %207 : vector<32x6xf32>
    %209 = arith.mulf %208, %208 : vector<32x6xf32>
    %cst_82 = arith.constant dense<0.000000e+00> : vector<32xf32>
    %210 = vector.multi_reduction <add>, %209, %cst_82 [1] : vector<32x6xf32> to vector<32xf32>
    %211 = vector.shape_cast %210 : vector<32xf32> to vector<32x1xf32>
    %cst_83 = arith.constant 3.200000e-01 : f32
    %212 = vector.broadcast %cst_83 : f32 to vector<32x1xf32>
    %213 = arith.mulf %212, %211 : vector<32x1xf32>
    %214 = arith.mulf %206, %206 : vector<32x6xf32>
    %cst_84 = arith.constant dense<0.000000e+00> : vector<32xf32>
    %215 = vector.multi_reduction <add>, %214, %cst_84 [1] : vector<32x6xf32> to vector<32xf32>
    %216 = vector.shape_cast %215 : vector<32xf32> to vector<32x1xf32>
    %cst_85 = arith.constant 5.000000e-01 : f32
    %217 = vector.broadcast %cst_85 : f32 to vector<32x1xf32>
    %218 = arith.mulf %217, %216 : vector<32x1xf32>
    %219 = arith.addf %213, %218 : vector<32x1xf32>
    %220 = vector.broadcast %127 : f32 to vector<32x1xf32>
    %221 = arith.mulf %219, %220 : vector<32x1xf32>
    %222 = arith.subf %143, %221 : vector<32x1xf32>
    %cst_86 = arith.constant 5.000000e-01 : f32
    %223 = arith.mulf %cst_86, %129 : f32
    %224 = arith.mulf %206, %131 : vector<32x6xf32>
    %cst_87 = arith.constant dense<0.000000e+00> : vector<32xf32>
    %225 = vector.multi_reduction <add>, %224, %cst_87 [1] : vector<32x6xf32> to vector<32xf32>
    %226 = vector.shape_cast %225 : vector<32xf32> to vector<32x1xf32>
    %227 = vector.broadcast %223 : f32 to vector<32x1xf32>
    %228 = arith.mulf %227, %226 : vector<32x1xf32>
    %229 = arith.addf %222, %228 : vector<32x1xf32>
    %230 = vector.broadcast %127 : f32 to vector<32x6xf32>
    %231 = arith.mulf %206, %230 : vector<32x6xf32>
    %232 = arith.subf %142, %231 : vector<32x6xf32>
    %cst_88 = arith.constant 5.000000e-01 : f32
    %233 = arith.mulf %cst_88, %129 : f32
    %234 = vector.broadcast %233 : f32 to vector<32x6xf32>
    %235 = arith.mulf %234, %131 : vector<32x6xf32>
    %236 = arith.addf %232, %235 : vector<32x6xf32>
    %c0_89 = arith.constant 0 : index
    %c0_90 = arith.constant 0 : index
    %237 = vector.load %arg11[%c0_89, %c0_90] : memref<32x1xf32, #tpu.memory_space<vmem>>, vector<32x1xf32>
    tpu.vector_store %arg11[%c0_89, %c0_90], %229 {strides = array<i32>} : memref<32x1xf32, #tpu.memory_space<vmem>>, vector<32x1xf32>,
    %c0_91 = arith.constant 0 : index
    %c0_92 = arith.constant 0 : index
    %238 = vector.load %arg12[%c0_91, %c0_92] : memref<32x6xf32, #tpu.memory_space<vmem>>, vector<32x6xf32>
    tpu.vector_store %arg12[%c0_91, %c0_92], %236 {strides = array<i32>} : memref<32x6xf32, #tpu.memory_space<vmem>>, vector<32x6xf32>,
    %c2_93 = arith.constant 2 : index
    %c0_94 = arith.constant 0 : index
    %c0_95 = arith.constant 0 : index
    %239 = vector.load %arg13[%c2_93, %c0_94, %c0_95] : memref<8x32x6xf32, #tpu.memory_space<vmem>>, vector<1x32x6xf32>
    %240 = vector.shape_cast %239 : vector<1x32x6xf32> to vector<32x6xf32>
    %241 = vector.shape_cast %236 : vector<32x6xf32> to vector<1x32x6xf32>
    tpu.vector_store %arg13[%c2_93, %c0_94, %c0_95], %241 {strides = array<i32>} : memref<8x32x6xf32, #tpu.memory_space<vmem>>, vector<1x32x6xf32>,
    %c8_i32_96 = arith.constant 8 : i32
    %242 = arith.muli %arg0, %c8_i32_96 : i32
    %c3_i32 = arith.constant 3 : i32
    %243 = arith.addi %242, %c3_i32 : i32
    %244 = arith.index_cast %243 : i32 to index
    %245 = memref.load %arg8[%244] : memref<24xf32, #tpu.memory_space<smem>>
    %246 = arith.index_cast %243 : i32 to index
    %247 = memref.load %arg9[%246] : memref<24xf32, #tpu.memory_space<smem>>
    %c3 = arith.constant 3 : index
    %c0_97 = arith.constant 0 : index
    %c0_98 = arith.constant 0 : index
    %248 = vector.load %arg3[%c3, %c0_97, %c0_98] : memref<8x32x6xf32, #tpu.memory_space<vmem>>, vector<1x32x6xf32>
    %249 = vector.shape_cast %248 : vector<1x32x6xf32> to vector<32x6xf32>
    %c3_99 = arith.constant 3 : index
    %c0_100 = arith.constant 0 : index
    %c0_101 = arith.constant 0 : index
    %250 = vector.load %arg4[%c3_99, %c0_100, %c0_101] : memref<8x8x16xf32, #tpu.memory_space<vmem>>, vector<1x8x16xf32>
    %251 = vector.shape_cast %250 : vector<1x8x16xf32> to vector<8x16xf32>
    %252 = vector.extract_strided_slice %251 {offsets = [0, 0], sizes = [1, 6], strides = [1, 1]} : vector<8x16xf32> to vector<1x6xf32>
    %253 = vector.extract_strided_slice %251 {offsets = [1, 0], sizes = [1, 16], strides = [1, 1]} : vector<8x16xf32> to vector<1x16xf32>
    %254 = vector.extract_strided_slice %251 {offsets = [2, 0], sizes = [1, 16], strides = [1, 1]} : vector<8x16xf32> to vector<1x16xf32>
    %255 = vector.extract_strided_slice %251 {offsets = [3, 0], sizes = [1, 16], strides = [1, 1]} : vector<8x16xf32> to vector<1x16xf32>
    %256 = vector.extract_strided_slice %251 {offsets = [4, 0], sizes = [1, 16], strides = [1, 1]} : vector<8x16xf32> to vector<1x16xf32>
    %257 = vector.extract_strided_slice %251 {offsets = [5, 0], sizes = [1, 16], strides = [1, 1]} : vector<8x16xf32> to vector<1x16xf32>
    %258 = vector.extract_strided_slice %251 {offsets = [6, 0], sizes = [1, 16], strides = [1, 1]} : vector<8x16xf32> to vector<1x16xf32>
    %259 = vector.extract_strided_slice %251 {offsets = [7, 0], sizes = [1, 6], strides = [1, 1]} : vector<8x16xf32> to vector<1x6xf32>
    %c0_102 = arith.constant 0 : index
    %c0_103 = arith.constant 0 : index
    %260 = vector.load %arg12[%c0_102, %c0_103] : memref<32x6xf32, #tpu.memory_space<vmem>>, vector<32x6xf32>
    %c0_104 = arith.constant 0 : index
    %c0_105 = arith.constant 0 : index
    %261 = vector.load %arg11[%c0_104, %c0_105] : memref<32x1xf32, #tpu.memory_space<vmem>>, vector<32x1xf32>
    %c3_106 = arith.constant 3 : index
    %c0_107 = arith.constant 0 : index
    %c0_108 = arith.constant 0 : index
    %262 = vector.load %arg5[%c3_106, %c0_107, %c0_108] : memref<8x6x16xf32, #tpu.memory_space<vmem>>, vector<1x6x16xf32>
    %263 = vector.shape_cast %262 : vector<1x6x16xf32> to vector<6x16xf32>
    %cst_109 = arith.constant dense<0.000000e+00> : vector<32x16xf32>
    %264 = tpu.matmul %260, %263, %cst_109 {dimension_numbers = #tpu.dot_dimension_numbers<[1], [0], [0], [1], [0, 0, 1, 1], [], []>} : vector<32x6xf32>, vector<6x16xf32>, vector<32x16xf32> -> vector<32x16xf32>
    %265 = vector.broadcast %253 : vector<1x16xf32> to vector<32x16xf32>
    %266 = arith.addf %264, %265 : vector<32x16xf32>
    %cst_110 = arith.constant dense<0.000000e+00> : vector<16xf32>
    %267 = vector.multi_reduction <add>, %266, %cst_110 [0] : vector<32x16xf32> to vector<16xf32>
    %268 = vector.shape_cast %267 : vector<16xf32> to vector<1x16xf32>
    %cst_111 = arith.constant 3.200000e+01 : f32
    %269 = vector.broadcast %cst_111 : f32 to vector<1x16xf32>
    %270 = arith.divf %268, %269 : vector<1x16xf32>
    %271 = arith.mulf %266, %266 : vector<32x16xf32>
    %cst_112 = arith.constant dense<0.000000e+00> : vector<16xf32>
    %272 = vector.multi_reduction <add>, %271, %cst_112 [0] : vector<32x16xf32> to vector<16xf32>
    %273 = vector.shape_cast %272 : vector<16xf32> to vector<1x16xf32>
    %cst_113 = arith.constant 3.200000e+01 : f32
    %274 = vector.broadcast %cst_113 : f32 to vector<1x16xf32>
    %275 = arith.divf %273, %274 : vector<1x16xf32>
    %276 = arith.mulf %270, %270 : vector<1x16xf32>
    %277 = arith.subf %275, %276 : vector<1x16xf32>
    %278 = vector.broadcast %270 : vector<1x16xf32> to vector<32x16xf32>
    %279 = arith.subf %266, %278 : vector<32x16xf32>
    %cst_114 = arith.constant 9.99999974E-6 : f32
    %280 = vector.broadcast %cst_114 : f32 to vector<1x16xf32>
    %281 = arith.addf %277, %280 : vector<1x16xf32>
    %282 = math.rsqrt %281 : vector<1x16xf32>
    %283 = vector.broadcast %282 : vector<1x16xf32> to vector<32x16xf32>
    %284 = arith.mulf %279, %283 : vector<32x16xf32>
    %285 = vector.broadcast %254 : vector<1x16xf32> to vector<32x16xf32>
    %286 = arith.mulf %284, %285 : vector<32x16xf32>
    %287 = vector.broadcast %255 : vector<1x16xf32> to vector<32x16xf32>
    %288 = arith.addf %286, %287 : vector<32x16xf32>
    %cst_115 = arith.constant 0.000000e+00 : f32
    %289 = vector.broadcast %cst_115 : f32 to vector<32x16xf32>
    %290 = arith.maximumf %288, %289 : vector<32x16xf32>
    %c3_116 = arith.constant 3 : index
    %c0_117 = arith.constant 0 : index
    %c0_118 = arith.constant 0 : index
    %291 = vector.load %arg6[%c3_116, %c0_117, %c0_118] : memref<8x16x16xf32, #tpu.memory_space<vmem>>, vector<1x16x16xf32>
    %292 = vector.shape_cast %291 : vector<1x16x16xf32> to vector<16x16xf32>
    %cst_119 = arith.constant dense<0.000000e+00> : vector<32x16xf32>
    %293 = tpu.matmul %290, %292, %cst_119 {dimension_numbers = #tpu.dot_dimension_numbers<[1], [0], [0], [1], [0, 0, 1, 1], [], []>} : vector<32x16xf32>, vector<16x16xf32>, vector<32x16xf32> -> vector<32x16xf32>
    %294 = vector.broadcast %256 : vector<1x16xf32> to vector<32x16xf32>
    %295 = arith.addf %293, %294 : vector<32x16xf32>
    %cst_120 = arith.constant dense<0.000000e+00> : vector<16xf32>
    %296 = vector.multi_reduction <add>, %295, %cst_120 [0] : vector<32x16xf32> to vector<16xf32>
    %297 = vector.shape_cast %296 : vector<16xf32> to vector<1x16xf32>
    %cst_121 = arith.constant 3.200000e+01 : f32
    %298 = vector.broadcast %cst_121 : f32 to vector<1x16xf32>
    %299 = arith.divf %297, %298 : vector<1x16xf32>
    %300 = arith.mulf %295, %295 : vector<32x16xf32>
    %cst_122 = arith.constant dense<0.000000e+00> : vector<16xf32>
    %301 = vector.multi_reduction <add>, %300, %cst_122 [0] : vector<32x16xf32> to vector<16xf32>
    %302 = vector.shape_cast %301 : vector<16xf32> to vector<1x16xf32>
    %cst_123 = arith.constant 3.200000e+01 : f32
    %303 = vector.broadcast %cst_123 : f32 to vector<1x16xf32>
    %304 = arith.divf %302, %303 : vector<1x16xf32>
    %305 = arith.mulf %299, %299 : vector<1x16xf32>
    %306 = arith.subf %304, %305 : vector<1x16xf32>
    %307 = vector.broadcast %299 : vector<1x16xf32> to vector<32x16xf32>
    %308 = arith.subf %295, %307 : vector<32x16xf32>
    %cst_124 = arith.constant 9.99999974E-6 : f32
    %309 = vector.broadcast %cst_124 : f32 to vector<1x16xf32>
    %310 = arith.addf %306, %309 : vector<1x16xf32>
    %311 = math.rsqrt %310 : vector<1x16xf32>
    %312 = vector.broadcast %311 : vector<1x16xf32> to vector<32x16xf32>
    %313 = arith.mulf %308, %312 : vector<32x16xf32>
    %314 = vector.broadcast %257 : vector<1x16xf32> to vector<32x16xf32>
    %315 = arith.mulf %313, %314 : vector<32x16xf32>
    %316 = vector.broadcast %258 : vector<1x16xf32> to vector<32x16xf32>
    %317 = arith.addf %315, %316 : vector<32x16xf32>
    %cst_125 = arith.constant 0.000000e+00 : f32
    %318 = vector.broadcast %cst_125 : f32 to vector<32x16xf32>
    %319 = arith.maximumf %317, %318 : vector<32x16xf32>
    %c3_126 = arith.constant 3 : index
    %c0_127 = arith.constant 0 : index
    %c0_128 = arith.constant 0 : index
    %320 = vector.load %arg7[%c3_126, %c0_127, %c0_128] : memref<8x16x6xf32, #tpu.memory_space<vmem>>, vector<1x16x6xf32>
    %321 = vector.shape_cast %320 : vector<1x16x6xf32> to vector<16x6xf32>
    %cst_129 = arith.constant dense<0.000000e+00> : vector<32x6xf32>
    %322 = tpu.matmul %319, %321, %cst_129 {dimension_numbers = #tpu.dot_dimension_numbers<[1], [0], [0], [1], [0, 0, 1, 1], [], []>} : vector<32x16xf32>, vector<16x6xf32>, vector<32x6xf32> -> vector<32x6xf32>
    %323 = vector.broadcast %259 : vector<1x6xf32> to vector<32x6xf32>
    %324 = arith.addf %322, %323 : vector<32x6xf32>
    %325 = vector.broadcast %252 : vector<1x6xf32> to vector<32x6xf32>
    %326 = arith.subf %260, %325 : vector<32x6xf32>
    %327 = arith.mulf %326, %326 : vector<32x6xf32>
    %cst_130 = arith.constant dense<0.000000e+00> : vector<32xf32>
    %328 = vector.multi_reduction <add>, %327, %cst_130 [1] : vector<32x6xf32> to vector<32xf32>
    %329 = vector.shape_cast %328 : vector<32xf32> to vector<32x1xf32>
    %cst_131 = arith.constant 3.200000e-01 : f32
    %330 = vector.broadcast %cst_131 : f32 to vector<32x1xf32>
    %331 = arith.mulf %330, %329 : vector<32x1xf32>
    %332 = arith.mulf %324, %324 : vector<32x6xf32>
    %cst_132 = arith.constant dense<0.000000e+00> : vector<32xf32>
    %333 = vector.multi_reduction <add>, %332, %cst_132 [1] : vector<32x6xf32> to vector<32xf32>
    %334 = vector.shape_cast %333 : vector<32xf32> to vector<32x1xf32>
    %cst_133 = arith.constant 5.000000e-01 : f32
    %335 = vector.broadcast %cst_133 : f32 to vector<32x1xf32>
    %336 = arith.mulf %335, %334 : vector<32x1xf32>
    %337 = arith.addf %331, %336 : vector<32x1xf32>
    %338 = vector.broadcast %245 : f32 to vector<32x1xf32>
    %339 = arith.mulf %337, %338 : vector<32x1xf32>
    %340 = arith.subf %261, %339 : vector<32x1xf32>
    %cst_134 = arith.constant 5.000000e-01 : f32
    %341 = arith.mulf %cst_134, %247 : f32
    %342 = arith.mulf %324, %249 : vector<32x6xf32>
    %cst_135 = arith.constant dense<0.000000e+00> : vector<32xf32>
    %343 = vector.multi_reduction <add>, %342, %cst_135 [1] : vector<32x6xf32> to vector<32xf32>
    %344 = vector.shape_cast %343 : vector<32xf32> to vector<32x1xf32>
    %345 = vector.broadcast %341 : f32 to vector<32x1xf32>
    %346 = arith.mulf %345, %344 : vector<32x1xf32>
    %347 = arith.addf %340, %346 : vector<32x1xf32>
    %348 = vector.broadcast %245 : f32 to vector<32x6xf32>
    %349 = arith.mulf %324, %348 : vector<32x6xf32>
    %350 = arith.subf %260, %349 : vector<32x6xf32>
    %cst_136 = arith.constant 5.000000e-01 : f32
    %351 = arith.mulf %cst_136, %247 : f32
    %352 = vector.broadcast %351 : f32 to vector<32x6xf32>
    %353 = arith.mulf %352, %249 : vector<32x6xf32>
    %354 = arith.addf %350, %353 : vector<32x6xf32>
    %c0_137 = arith.constant 0 : index
    %c0_138 = arith.constant 0 : index
    %355 = vector.load %arg11[%c0_137, %c0_138] : memref<32x1xf32, #tpu.memory_space<vmem>>, vector<32x1xf32>
    tpu.vector_store %arg11[%c0_137, %c0_138], %347 {strides = array<i32>} : memref<32x1xf32, #tpu.memory_space<vmem>>, vector<32x1xf32>,
    %c0_139 = arith.constant 0 : index
    %c0_140 = arith.constant 0 : index
    %356 = vector.load %arg12[%c0_139, %c0_140] : memref<32x6xf32, #tpu.memory_space<vmem>>, vector<32x6xf32>
    tpu.vector_store %arg12[%c0_139, %c0_140], %354 {strides = array<i32>} : memref<32x6xf32, #tpu.memory_space<vmem>>, vector<32x6xf32>,
    %c3_141 = arith.constant 3 : index
    %c0_142 = arith.constant 0 : index
    %c0_143 = arith.constant 0 : index
    %357 = vector.load %arg13[%c3_141, %c0_142, %c0_143] : memref<8x32x6xf32, #tpu.memory_space<vmem>>, vector<1x32x6xf32>
    %358 = vector.shape_cast %357 : vector<1x32x6xf32> to vector<32x6xf32>
    %359 = vector.shape_cast %354 : vector<32x6xf32> to vector<1x32x6xf32>
    tpu.vector_store %arg13[%c3_141, %c0_142, %c0_143], %359 {strides = array<i32>} : memref<8x32x6xf32, #tpu.memory_space<vmem>>, vector<1x32x6xf32>,
    %c8_i32_144 = arith.constant 8 : i32
    %360 = arith.muli %arg0, %c8_i32_144 : i32
    %c4_i32 = arith.constant 4 : i32
    %361 = arith.addi %360, %c4_i32 : i32
    %c20_i32 = arith.constant 20 : i32
    %362 = arith.cmpi slt, %361, %c20_i32 : i32
    %363 = arith.extui %362 : i1 to i32
    %c0_i32_145 = arith.constant 0 : i32
    %364 = arith.cmpi ne, %363, %c0_i32_145 : i32
    scf.if %364 {
      %c8_i32_155 = arith.constant 8 : i32
      %380 = arith.muli %arg0, %c8_i32_155 : i32
      %c4_i32_156 = arith.constant 4 : i32
      %381 = arith.addi %380, %c4_i32_156 : i32
      %382 = arith.index_cast %381 : i32 to index
      %383 = memref.load %arg8[%382] : memref<24xf32, #tpu.memory_space<smem>>
      %384 = arith.index_cast %381 : i32 to index
      %385 = memref.load %arg9[%384] : memref<24xf32, #tpu.memory_space<smem>>
      %c4 = arith.constant 4 : index
      %c0_157 = arith.constant 0 : index
      %c0_158 = arith.constant 0 : index
      %386 = vector.load %arg3[%c4, %c0_157, %c0_158] : memref<8x32x6xf32, #tpu.memory_space<vmem>>, vector<1x32x6xf32>
      %387 = vector.shape_cast %386 : vector<1x32x6xf32> to vector<32x6xf32>
      %c4_159 = arith.constant 4 : index
      %c0_160 = arith.constant 0 : index
      %c0_161 = arith.constant 0 : index
      %388 = vector.load %arg4[%c4_159, %c0_160, %c0_161] : memref<8x8x16xf32, #tpu.memory_space<vmem>>, vector<1x8x16xf32>
      %389 = vector.shape_cast %388 : vector<1x8x16xf32> to vector<8x16xf32>
      %390 = vector.extract_strided_slice %389 {offsets = [0, 0], sizes = [1, 6], strides = [1, 1]} : vector<8x16xf32> to vector<1x6xf32>
      %391 = vector.extract_strided_slice %389 {offsets = [1, 0], sizes = [1, 16], strides = [1, 1]} : vector<8x16xf32> to vector<1x16xf32>
      %392 = vector.extract_strided_slice %389 {offsets = [2, 0], sizes = [1, 16], strides = [1, 1]} : vector<8x16xf32> to vector<1x16xf32>
      %393 = vector.extract_strided_slice %389 {offsets = [3, 0], sizes = [1, 16], strides = [1, 1]} : vector<8x16xf32> to vector<1x16xf32>
      %394 = vector.extract_strided_slice %389 {offsets = [4, 0], sizes = [1, 16], strides = [1, 1]} : vector<8x16xf32> to vector<1x16xf32>
      %395 = vector.extract_strided_slice %389 {offsets = [5, 0], sizes = [1, 16], strides = [1, 1]} : vector<8x16xf32> to vector<1x16xf32>
      %396 = vector.extract_strided_slice %389 {offsets = [6, 0], sizes = [1, 16], strides = [1, 1]} : vector<8x16xf32> to vector<1x16xf32>
      %397 = vector.extract_strided_slice %389 {offsets = [7, 0], sizes = [1, 6], strides = [1, 1]} : vector<8x16xf32> to vector<1x6xf32>
      %c0_162 = arith.constant 0 : index
      %c0_163 = arith.constant 0 : index
      %398 = vector.load %arg12[%c0_162, %c0_163] : memref<32x6xf32, #tpu.memory_space<vmem>>, vector<32x6xf32>
      %c0_164 = arith.constant 0 : index
      %c0_165 = arith.constant 0 : index
      %399 = vector.load %arg11[%c0_164, %c0_165] : memref<32x1xf32, #tpu.memory_space<vmem>>, vector<32x1xf32>
      %c4_166 = arith.constant 4 : index
      %c0_167 = arith.constant 0 : index
      %c0_168 = arith.constant 0 : index
      %400 = vector.load %arg5[%c4_166, %c0_167, %c0_168] : memref<8x6x16xf32, #tpu.memory_space<vmem>>, vector<1x6x16xf32>
      %401 = vector.shape_cast %400 : vector<1x6x16xf32> to vector<6x16xf32>
      %cst_169 = arith.constant dense<0.000000e+00> : vector<32x16xf32>
      %402 = tpu.matmul %398, %401, %cst_169 {dimension_numbers = #tpu.dot_dimension_numbers<[1], [0], [0], [1], [0, 0, 1, 1], [], []>} : vector<32x6xf32>, vector<6x16xf32>, vector<32x16xf32> -> vector<32x16xf32>
      %403 = vector.broadcast %391 : vector<1x16xf32> to vector<32x16xf32>
      %404 = arith.addf %402, %403 : vector<32x16xf32>
      %cst_170 = arith.constant dense<0.000000e+00> : vector<16xf32>
      %405 = vector.multi_reduction <add>, %404, %cst_170 [0] : vector<32x16xf32> to vector<16xf32>
      %406 = vector.shape_cast %405 : vector<16xf32> to vector<1x16xf32>
      %cst_171 = arith.constant 3.200000e+01 : f32
      %407 = vector.broadcast %cst_171 : f32 to vector<1x16xf32>
      %408 = arith.divf %406, %407 : vector<1x16xf32>
      %409 = arith.mulf %404, %404 : vector<32x16xf32>
      %cst_172 = arith.constant dense<0.000000e+00> : vector<16xf32>
      %410 = vector.multi_reduction <add>, %409, %cst_172 [0] : vector<32x16xf32> to vector<16xf32>
      %411 = vector.shape_cast %410 : vector<16xf32> to vector<1x16xf32>
      %cst_173 = arith.constant 3.200000e+01 : f32
      %412 = vector.broadcast %cst_173 : f32 to vector<1x16xf32>
      %413 = arith.divf %411, %412 : vector<1x16xf32>
      %414 = arith.mulf %408, %408 : vector<1x16xf32>
      %415 = arith.subf %413, %414 : vector<1x16xf32>
      %416 = vector.broadcast %408 : vector<1x16xf32> to vector<32x16xf32>
      %417 = arith.subf %404, %416 : vector<32x16xf32>
      %cst_174 = arith.constant 9.99999974E-6 : f32
      %418 = vector.broadcast %cst_174 : f32 to vector<1x16xf32>
      %419 = arith.addf %415, %418 : vector<1x16xf32>
      %420 = math.rsqrt %419 : vector<1x16xf32>
      %421 = vector.broadcast %420 : vector<1x16xf32> to vector<32x16xf32>
      %422 = arith.mulf %417, %421 : vector<32x16xf32>
      %423 = vector.broadcast %392 : vector<1x16xf32> to vector<32x16xf32>
      %424 = arith.mulf %422, %423 : vector<32x16xf32>
      %425 = vector.broadcast %393 : vector<1x16xf32> to vector<32x16xf32>
      %426 = arith.addf %424, %425 : vector<32x16xf32>
      %cst_175 = arith.constant 0.000000e+00 : f32
      %427 = vector.broadcast %cst_175 : f32 to vector<32x16xf32>
      %428 = arith.maximumf %426, %427 : vector<32x16xf32>
      %c4_176 = arith.constant 4 : index
      %c0_177 = arith.constant 0 : index
      %c0_178 = arith.constant 0 : index
      %429 = vector.load %arg6[%c4_176, %c0_177, %c0_178] : memref<8x16x16xf32, #tpu.memory_space<vmem>>, vector<1x16x16xf32>
      %430 = vector.shape_cast %429 : vector<1x16x16xf32> to vector<16x16xf32>
      %cst_179 = arith.constant dense<0.000000e+00> : vector<32x16xf32>
      %431 = tpu.matmul %428, %430, %cst_179 {dimension_numbers = #tpu.dot_dimension_numbers<[1], [0], [0], [1], [0, 0, 1, 1], [], []>} : vector<32x16xf32>, vector<16x16xf32>, vector<32x16xf32> -> vector<32x16xf32>
      %432 = vector.broadcast %394 : vector<1x16xf32> to vector<32x16xf32>
      %433 = arith.addf %431, %432 : vector<32x16xf32>
      %cst_180 = arith.constant dense<0.000000e+00> : vector<16xf32>
      %434 = vector.multi_reduction <add>, %433, %cst_180 [0] : vector<32x16xf32> to vector<16xf32>
      %435 = vector.shape_cast %434 : vector<16xf32> to vector<1x16xf32>
      %cst_181 = arith.constant 3.200000e+01 : f32
      %436 = vector.broadcast %cst_181 : f32 to vector<1x16xf32>
      %437 = arith.divf %435, %436 : vector<1x16xf32>
      %438 = arith.mulf %433, %433 : vector<32x16xf32>
      %cst_182 = arith.constant dense<0.000000e+00> : vector<16xf32>
      %439 = vector.multi_reduction <add>, %438, %cst_182 [0] : vector<32x16xf32> to vector<16xf32>
      %440 = vector.shape_cast %439 : vector<16xf32> to vector<1x16xf32>
      %cst_183 = arith.constant 3.200000e+01 : f32
      %441 = vector.broadcast %cst_183 : f32 to vector<1x16xf32>
      %442 = arith.divf %440, %441 : vector<1x16xf32>
      %443 = arith.mulf %437, %437 : vector<1x16xf32>
      %444 = arith.subf %442, %443 : vector<1x16xf32>
      %445 = vector.broadcast %437 : vector<1x16xf32> to vector<32x16xf32>
      %446 = arith.subf %433, %445 : vector<32x16xf32>
      %cst_184 = arith.constant 9.99999974E-6 : f32
      %447 = vector.broadcast %cst_184 : f32 to vector<1x16xf32>
      %448 = arith.addf %444, %447 : vector<1x16xf32>
      %449 = math.rsqrt %448 : vector<1x16xf32>
      %450 = vector.broadcast %449 : vector<1x16xf32> to vector<32x16xf32>
      %451 = arith.mulf %446, %450 : vector<32x16xf32>
      %452 = vector.broadcast %395 : vector<1x16xf32> to vector<32x16xf32>
      %453 = arith.mulf %451, %452 : vector<32x16xf32>
      %454 = vector.broadcast %396 : vector<1x16xf32> to vector<32x16xf32>
      %455 = arith.addf %453, %454 : vector<32x16xf32>
      %cst_185 = arith.constant 0.000000e+00 : f32
      %456 = vector.broadcast %cst_185 : f32 to vector<32x16xf32>
      %457 = arith.maximumf %455, %456 : vector<32x16xf32>
      %c4_186 = arith.constant 4 : index
      %c0_187 = arith.constant 0 : index
      %c0_188 = arith.constant 0 : index
      %458 = vector.load %arg7[%c4_186, %c0_187, %c0_188] : memref<8x16x6xf32, #tpu.memory_space<vmem>>, vector<1x16x6xf32>
      %459 = vector.shape_cast %458 : vector<1x16x6xf32> to vector<16x6xf32>
      %cst_189 = arith.constant dense<0.000000e+00> : vector<32x6xf32>
      %460 = tpu.matmul %457, %459, %cst_189 {dimension_numbers = #tpu.dot_dimension_numbers<[1], [0], [0], [1], [0, 0, 1, 1], [], []>} : vector<32x16xf32>, vector<16x6xf32>, vector<32x6xf32> -> vector<32x6xf32>
      %461 = vector.broadcast %397 : vector<1x6xf32> to vector<32x6xf32>
      %462 = arith.addf %460, %461 : vector<32x6xf32>
      %463 = vector.broadcast %390 : vector<1x6xf32> to vector<32x6xf32>
      %464 = arith.subf %398, %463 : vector<32x6xf32>
      %465 = arith.mulf %464, %464 : vector<32x6xf32>
      %cst_190 = arith.constant dense<0.000000e+00> : vector<32xf32>
      %466 = vector.multi_reduction <add>, %465, %cst_190 [1] : vector<32x6xf32> to vector<32xf32>
      %467 = vector.shape_cast %466 : vector<32xf32> to vector<32x1xf32>
      %cst_191 = arith.constant 3.200000e-01 : f32
      %468 = vector.broadcast %cst_191 : f32 to vector<32x1xf32>
      %469 = arith.mulf %468, %467 : vector<32x1xf32>
      %470 = arith.mulf %462, %462 : vector<32x6xf32>
      %cst_192 = arith.constant dense<0.000000e+00> : vector<32xf32>
      %471 = vector.multi_reduction <add>, %470, %cst_192 [1] : vector<32x6xf32> to vector<32xf32>
      %472 = vector.shape_cast %471 : vector<32xf32> to vector<32x1xf32>
      %cst_193 = arith.constant 5.000000e-01 : f32
      %473 = vector.broadcast %cst_193 : f32 to vector<32x1xf32>
      %474 = arith.mulf %473, %472 : vector<32x1xf32>
      %475 = arith.addf %469, %474 : vector<32x1xf32>
      %476 = vector.broadcast %383 : f32 to vector<32x1xf32>
      %477 = arith.mulf %475, %476 : vector<32x1xf32>
      %478 = arith.subf %399, %477 : vector<32x1xf32>
      %cst_194 = arith.constant 5.000000e-01 : f32
      %479 = arith.mulf %cst_194, %385 : f32
      %480 = arith.mulf %462, %387 : vector<32x6xf32>
      %cst_195 = arith.constant dense<0.000000e+00> : vector<32xf32>
      %481 = vector.multi_reduction <add>, %480, %cst_195 [1] : vector<32x6xf32> to vector<32xf32>
      %482 = vector.shape_cast %481 : vector<32xf32> to vector<32x1xf32>
      %483 = vector.broadcast %479 : f32 to vector<32x1xf32>
      %484 = arith.mulf %483, %482 : vector<32x1xf32>
      %485 = arith.addf %478, %484 : vector<32x1xf32>
      %486 = vector.broadcast %383 : f32 to vector<32x6xf32>
      %487 = arith.mulf %462, %486 : vector<32x6xf32>
      %488 = arith.subf %398, %487 : vector<32x6xf32>
      %cst_196 = arith.constant 5.000000e-01 : f32
      %489 = arith.mulf %cst_196, %385 : f32
      %490 = vector.broadcast %489 : f32 to vector<32x6xf32>
      %491 = arith.mulf %490, %387 : vector<32x6xf32>
      %492 = arith.addf %488, %491 : vector<32x6xf32>
      %c0_197 = arith.constant 0 : index
      %c0_198 = arith.constant 0 : index
      %493 = vector.load %arg11[%c0_197, %c0_198] : memref<32x1xf32, #tpu.memory_space<vmem>>, vector<32x1xf32>
      tpu.vector_store %arg11[%c0_197, %c0_198], %485 {strides = array<i32>} : memref<32x1xf32, #tpu.memory_space<vmem>>, vector<32x1xf32>,
      %c0_199 = arith.constant 0 : index
      %c0_200 = arith.constant 0 : index
      %494 = vector.load %arg12[%c0_199, %c0_200] : memref<32x6xf32, #tpu.memory_space<vmem>>, vector<32x6xf32>
      tpu.vector_store %arg12[%c0_199, %c0_200], %492 {strides = array<i32>} : memref<32x6xf32, #tpu.memory_space<vmem>>, vector<32x6xf32>,
      %c4_201 = arith.constant 4 : index
      %c0_202 = arith.constant 0 : index
      %c0_203 = arith.constant 0 : index
      %495 = vector.load %arg13[%c4_201, %c0_202, %c0_203] : memref<8x32x6xf32, #tpu.memory_space<vmem>>, vector<1x32x6xf32>
      %496 = vector.shape_cast %495 : vector<1x32x6xf32> to vector<32x6xf32>
      %497 = vector.shape_cast %492 : vector<32x6xf32> to vector<1x32x6xf32>
      tpu.vector_store %arg13[%c4_201, %c0_202, %c0_203], %497 {strides = array<i32>} : memref<8x32x6xf32, #tpu.memory_space<vmem>>, vector<1x32x6xf32>,
    } else {
    }
    %c8_i32_146 = arith.constant 8 : i32
    %365 = arith.muli %arg0, %c8_i32_146 : i32
    %c5_i32 = arith.constant 5 : i32
    %366 = arith.addi %365, %c5_i32 : i32
    %c20_i32_147 = arith.constant 20 : i32
    %367 = arith.cmpi slt, %366, %c20_i32_147 : i32
    %368 = arith.extui %367 : i1 to i32
    %c0_i32_148 = arith.constant 0 : i32
    %369 = arith.cmpi ne, %368, %c0_i32_148 : i32
    scf.if %369 {
      %c8_i32_155 = arith.constant 8 : i32
      %380 = arith.muli %arg0, %c8_i32_155 : i32
      %c5_i32_156 = arith.constant 5 : i32
      %381 = arith.addi %380, %c5_i32_156 : i32
      %382 = arith.index_cast %381 : i32 to index
      %383 = memref.load %arg8[%382] : memref<24xf32, #tpu.memory_space<smem>>
      %384 = arith.index_cast %381 : i32 to index
      %385 = memref.load %arg9[%384] : memref<24xf32, #tpu.memory_space<smem>>
      %c5 = arith.constant 5 : index
      %c0_157 = arith.constant 0 : index
      %c0_158 = arith.constant 0 : index
      %386 = vector.load %arg3[%c5, %c0_157, %c0_158] : memref<8x32x6xf32, #tpu.memory_space<vmem>>, vector<1x32x6xf32>
      %387 = vector.shape_cast %386 : vector<1x32x6xf32> to vector<32x6xf32>
      %c5_159 = arith.constant 5 : index
      %c0_160 = arith.constant 0 : index
      %c0_161 = arith.constant 0 : index
      %388 = vector.load %arg4[%c5_159, %c0_160, %c0_161] : memref<8x8x16xf32, #tpu.memory_space<vmem>>, vector<1x8x16xf32>
      %389 = vector.shape_cast %388 : vector<1x8x16xf32> to vector<8x16xf32>
      %390 = vector.extract_strided_slice %389 {offsets = [0, 0], sizes = [1, 6], strides = [1, 1]} : vector<8x16xf32> to vector<1x6xf32>
      %391 = vector.extract_strided_slice %389 {offsets = [1, 0], sizes = [1, 16], strides = [1, 1]} : vector<8x16xf32> to vector<1x16xf32>
      %392 = vector.extract_strided_slice %389 {offsets = [2, 0], sizes = [1, 16], strides = [1, 1]} : vector<8x16xf32> to vector<1x16xf32>
      %393 = vector.extract_strided_slice %389 {offsets = [3, 0], sizes = [1, 16], strides = [1, 1]} : vector<8x16xf32> to vector<1x16xf32>
      %394 = vector.extract_strided_slice %389 {offsets = [4, 0], sizes = [1, 16], strides = [1, 1]} : vector<8x16xf32> to vector<1x16xf32>
      %395 = vector.extract_strided_slice %389 {offsets = [5, 0], sizes = [1, 16], strides = [1, 1]} : vector<8x16xf32> to vector<1x16xf32>
      %396 = vector.extract_strided_slice %389 {offsets = [6, 0], sizes = [1, 16], strides = [1, 1]} : vector<8x16xf32> to vector<1x16xf32>
      %397 = vector.extract_strided_slice %389 {offsets = [7, 0], sizes = [1, 6], strides = [1, 1]} : vector<8x16xf32> to vector<1x6xf32>
      %c0_162 = arith.constant 0 : index
      %c0_163 = arith.constant 0 : index
      %398 = vector.load %arg12[%c0_162, %c0_163] : memref<32x6xf32, #tpu.memory_space<vmem>>, vector<32x6xf32>
      %c0_164 = arith.constant 0 : index
      %c0_165 = arith.constant 0 : index
      %399 = vector.load %arg11[%c0_164, %c0_165] : memref<32x1xf32, #tpu.memory_space<vmem>>, vector<32x1xf32>
      %c5_166 = arith.constant 5 : index
      %c0_167 = arith.constant 0 : index
      %c0_168 = arith.constant 0 : index
      %400 = vector.load %arg5[%c5_166, %c0_167, %c0_168] : memref<8x6x16xf32, #tpu.memory_space<vmem>>, vector<1x6x16xf32>
      %401 = vector.shape_cast %400 : vector<1x6x16xf32> to vector<6x16xf32>
      %cst_169 = arith.constant dense<0.000000e+00> : vector<32x16xf32>
      %402 = tpu.matmul %398, %401, %cst_169 {dimension_numbers = #tpu.dot_dimension_numbers<[1], [0], [0], [1], [0, 0, 1, 1], [], []>} : vector<32x6xf32>, vector<6x16xf32>, vector<32x16xf32> -> vector<32x16xf32>
      %403 = vector.broadcast %391 : vector<1x16xf32> to vector<32x16xf32>
      %404 = arith.addf %402, %403 : vector<32x16xf32>
      %cst_170 = arith.constant dense<0.000000e+00> : vector<16xf32>
      %405 = vector.multi_reduction <add>, %404, %cst_170 [0] : vector<32x16xf32> to vector<16xf32>
      %406 = vector.shape_cast %405 : vector<16xf32> to vector<1x16xf32>
      %cst_171 = arith.constant 3.200000e+01 : f32
      %407 = vector.broadcast %cst_171 : f32 to vector<1x16xf32>
      %408 = arith.divf %406, %407 : vector<1x16xf32>
      %409 = arith.mulf %404, %404 : vector<32x16xf32>
      %cst_172 = arith.constant dense<0.000000e+00> : vector<16xf32>
      %410 = vector.multi_reduction <add>, %409, %cst_172 [0] : vector<32x16xf32> to vector<16xf32>
      %411 = vector.shape_cast %410 : vector<16xf32> to vector<1x16xf32>
      %cst_173 = arith.constant 3.200000e+01 : f32
      %412 = vector.broadcast %cst_173 : f32 to vector<1x16xf32>
      %413 = arith.divf %411, %412 : vector<1x16xf32>
      %414 = arith.mulf %408, %408 : vector<1x16xf32>
      %415 = arith.subf %413, %414 : vector<1x16xf32>
      %416 = vector.broadcast %408 : vector<1x16xf32> to vector<32x16xf32>
      %417 = arith.subf %404, %416 : vector<32x16xf32>
      %cst_174 = arith.constant 9.99999974E-6 : f32
      %418 = vector.broadcast %cst_174 : f32 to vector<1x16xf32>
      %419 = arith.addf %415, %418 : vector<1x16xf32>
      %420 = math.rsqrt %419 : vector<1x16xf32>
      %421 = vector.broadcast %420 : vector<1x16xf32> to vector<32x16xf32>
      %422 = arith.mulf %417, %421 : vector<32x16xf32>
      %423 = vector.broadcast %392 : vector<1x16xf32> to vector<32x16xf32>
      %424 = arith.mulf %422, %423 : vector<32x16xf32>
      %425 = vector.broadcast %393 : vector<1x16xf32> to vector<32x16xf32>
      %426 = arith.addf %424, %425 : vector<32x16xf32>
      %cst_175 = arith.constant 0.000000e+00 : f32
      %427 = vector.broadcast %cst_175 : f32 to vector<32x16xf32>
      %428 = arith.maximumf %426, %427 : vector<32x16xf32>
      %c5_176 = arith.constant 5 : index
      %c0_177 = arith.constant 0 : index
      %c0_178 = arith.constant 0 : index
      %429 = vector.load %arg6[%c5_176, %c0_177, %c0_178] : memref<8x16x16xf32, #tpu.memory_space<vmem>>, vector<1x16x16xf32>
      %430 = vector.shape_cast %429 : vector<1x16x16xf32> to vector<16x16xf32>
      %cst_179 = arith.constant dense<0.000000e+00> : vector<32x16xf32>
      %431 = tpu.matmul %428, %430, %cst_179 {dimension_numbers = #tpu.dot_dimension_numbers<[1], [0], [0], [1], [0, 0, 1, 1], [], []>} : vector<32x16xf32>, vector<16x16xf32>, vector<32x16xf32> -> vector<32x16xf32>
      %432 = vector.broadcast %394 : vector<1x16xf32> to vector<32x16xf32>
      %433 = arith.addf %431, %432 : vector<32x16xf32>
      %cst_180 = arith.constant dense<0.000000e+00> : vector<16xf32>
      %434 = vector.multi_reduction <add>, %433, %cst_180 [0] : vector<32x16xf32> to vector<16xf32>
      %435 = vector.shape_cast %434 : vector<16xf32> to vector<1x16xf32>
      %cst_181 = arith.constant 3.200000e+01 : f32
      %436 = vector.broadcast %cst_181 : f32 to vector<1x16xf32>
      %437 = arith.divf %435, %436 : vector<1x16xf32>
      %438 = arith.mulf %433, %433 : vector<32x16xf32>
      %cst_182 = arith.constant dense<0.000000e+00> : vector<16xf32>
      %439 = vector.multi_reduction <add>, %438, %cst_182 [0] : vector<32x16xf32> to vector<16xf32>
      %440 = vector.shape_cast %439 : vector<16xf32> to vector<1x16xf32>
      %cst_183 = arith.constant 3.200000e+01 : f32
      %441 = vector.broadcast %cst_183 : f32 to vector<1x16xf32>
      %442 = arith.divf %440, %441 : vector<1x16xf32>
      %443 = arith.mulf %437, %437 : vector<1x16xf32>
      %444 = arith.subf %442, %443 : vector<1x16xf32>
      %445 = vector.broadcast %437 : vector<1x16xf32> to vector<32x16xf32>
      %446 = arith.subf %433, %445 : vector<32x16xf32>
      %cst_184 = arith.constant 9.99999974E-6 : f32
      %447 = vector.broadcast %cst_184 : f32 to vector<1x16xf32>
      %448 = arith.addf %444, %447 : vector<1x16xf32>
      %449 = math.rsqrt %448 : vector<1x16xf32>
      %450 = vector.broadcast %449 : vector<1x16xf32> to vector<32x16xf32>
      %451 = arith.mulf %446, %450 : vector<32x16xf32>
      %452 = vector.broadcast %395 : vector<1x16xf32> to vector<32x16xf32>
      %453 = arith.mulf %451, %452 : vector<32x16xf32>
      %454 = vector.broadcast %396 : vector<1x16xf32> to vector<32x16xf32>
      %455 = arith.addf %453, %454 : vector<32x16xf32>
      %cst_185 = arith.constant 0.000000e+00 : f32
      %456 = vector.broadcast %cst_185 : f32 to vector<32x16xf32>
      %457 = arith.maximumf %455, %456 : vector<32x16xf32>
      %c5_186 = arith.constant 5 : index
      %c0_187 = arith.constant 0 : index
      %c0_188 = arith.constant 0 : index
      %458 = vector.load %arg7[%c5_186, %c0_187, %c0_188] : memref<8x16x6xf32, #tpu.memory_space<vmem>>, vector<1x16x6xf32>
      %459 = vector.shape_cast %458 : vector<1x16x6xf32> to vector<16x6xf32>
      %cst_189 = arith.constant dense<0.000000e+00> : vector<32x6xf32>
      %460 = tpu.matmul %457, %459, %cst_189 {dimension_numbers = #tpu.dot_dimension_numbers<[1], [0], [0], [1], [0, 0, 1, 1], [], []>} : vector<32x16xf32>, vector<16x6xf32>, vector<32x6xf32> -> vector<32x6xf32>
      %461 = vector.broadcast %397 : vector<1x6xf32> to vector<32x6xf32>
      %462 = arith.addf %460, %461 : vector<32x6xf32>
      %463 = vector.broadcast %390 : vector<1x6xf32> to vector<32x6xf32>
      %464 = arith.subf %398, %463 : vector<32x6xf32>
      %465 = arith.mulf %464, %464 : vector<32x6xf32>
      %cst_190 = arith.constant dense<0.000000e+00> : vector<32xf32>
      %466 = vector.multi_reduction <add>, %465, %cst_190 [1] : vector<32x6xf32> to vector<32xf32>
      %467 = vector.shape_cast %466 : vector<32xf32> to vector<32x1xf32>
      %cst_191 = arith.constant 3.200000e-01 : f32
      %468 = vector.broadcast %cst_191 : f32 to vector<32x1xf32>
      %469 = arith.mulf %468, %467 : vector<32x1xf32>
      %470 = arith.mulf %462, %462 : vector<32x6xf32>
      %cst_192 = arith.constant dense<0.000000e+00> : vector<32xf32>
      %471 = vector.multi_reduction <add>, %470, %cst_192 [1] : vector<32x6xf32> to vector<32xf32>
      %472 = vector.shape_cast %471 : vector<32xf32> to vector<32x1xf32>
      %cst_193 = arith.constant 5.000000e-01 : f32
      %473 = vector.broadcast %cst_193 : f32 to vector<32x1xf32>
      %474 = arith.mulf %473, %472 : vector<32x1xf32>
      %475 = arith.addf %469, %474 : vector<32x1xf32>
      %476 = vector.broadcast %383 : f32 to vector<32x1xf32>
      %477 = arith.mulf %475, %476 : vector<32x1xf32>
      %478 = arith.subf %399, %477 : vector<32x1xf32>
      %cst_194 = arith.constant 5.000000e-01 : f32
      %479 = arith.mulf %cst_194, %385 : f32
      %480 = arith.mulf %462, %387 : vector<32x6xf32>
      %cst_195 = arith.constant dense<0.000000e+00> : vector<32xf32>
      %481 = vector.multi_reduction <add>, %480, %cst_195 [1] : vector<32x6xf32> to vector<32xf32>
      %482 = vector.shape_cast %481 : vector<32xf32> to vector<32x1xf32>
      %483 = vector.broadcast %479 : f32 to vector<32x1xf32>
      %484 = arith.mulf %483, %482 : vector<32x1xf32>
      %485 = arith.addf %478, %484 : vector<32x1xf32>
      %486 = vector.broadcast %383 : f32 to vector<32x6xf32>
      %487 = arith.mulf %462, %486 : vector<32x6xf32>
      %488 = arith.subf %398, %487 : vector<32x6xf32>
      %cst_196 = arith.constant 5.000000e-01 : f32
      %489 = arith.mulf %cst_196, %385 : f32
      %490 = vector.broadcast %489 : f32 to vector<32x6xf32>
      %491 = arith.mulf %490, %387 : vector<32x6xf32>
      %492 = arith.addf %488, %491 : vector<32x6xf32>
      %c0_197 = arith.constant 0 : index
      %c0_198 = arith.constant 0 : index
      %493 = vector.load %arg11[%c0_197, %c0_198] : memref<32x1xf32, #tpu.memory_space<vmem>>, vector<32x1xf32>
      tpu.vector_store %arg11[%c0_197, %c0_198], %485 {strides = array<i32>} : memref<32x1xf32, #tpu.memory_space<vmem>>, vector<32x1xf32>,
      %c0_199 = arith.constant 0 : index
      %c0_200 = arith.constant 0 : index
      %494 = vector.load %arg12[%c0_199, %c0_200] : memref<32x6xf32, #tpu.memory_space<vmem>>, vector<32x6xf32>
      tpu.vector_store %arg12[%c0_199, %c0_200], %492 {strides = array<i32>} : memref<32x6xf32, #tpu.memory_space<vmem>>, vector<32x6xf32>,
      %c5_201 = arith.constant 5 : index
      %c0_202 = arith.constant 0 : index
      %c0_203 = arith.constant 0 : index
      %495 = vector.load %arg13[%c5_201, %c0_202, %c0_203] : memref<8x32x6xf32, #tpu.memory_space<vmem>>, vector<1x32x6xf32>
      %496 = vector.shape_cast %495 : vector<1x32x6xf32> to vector<32x6xf32>
      %497 = vector.shape_cast %492 : vector<32x6xf32> to vector<1x32x6xf32>
      tpu.vector_store %arg13[%c5_201, %c0_202, %c0_203], %497 {strides = array<i32>} : memref<8x32x6xf32, #tpu.memory_space<vmem>>, vector<1x32x6xf32>,
    } else {
    }
    %c8_i32_149 = arith.constant 8 : i32
    %370 = arith.muli %arg0, %c8_i32_149 : i32
    %c6_i32 = arith.constant 6 : i32
    %371 = arith.addi %370, %c6_i32 : i32
    %c20_i32_150 = arith.constant 20 : i32
    %372 = arith.cmpi slt, %371, %c20_i32_150 : i32
    %373 = arith.extui %372 : i1 to i32
    %c0_i32_151 = arith.constant 0 : i32
    %374 = arith.cmpi ne, %373, %c0_i32_151 : i32
    scf.if %374 {
      %c8_i32_155 = arith.constant 8 : i32
      %380 = arith.muli %arg0, %c8_i32_155 : i32
      %c6_i32_156 = arith.constant 6 : i32
      %381 = arith.addi %380, %c6_i32_156 : i32
      %382 = arith.index_cast %381 : i32 to index
      %383 = memref.load %arg8[%382] : memref<24xf32, #tpu.memory_space<smem>>
      %384 = arith.index_cast %381 : i32 to index
      %385 = memref.load %arg9[%384] : memref<24xf32, #tpu.memory_space<smem>>
      %c6 = arith.constant 6 : index
      %c0_157 = arith.constant 0 : index
      %c0_158 = arith.constant 0 : index
      %386 = vector.load %arg3[%c6, %c0_157, %c0_158] : memref<8x32x6xf32, #tpu.memory_space<vmem>>, vector<1x32x6xf32>
      %387 = vector.shape_cast %386 : vector<1x32x6xf32> to vector<32x6xf32>
      %c6_159 = arith.constant 6 : index
      %c0_160 = arith.constant 0 : index
      %c0_161 = arith.constant 0 : index
      %388 = vector.load %arg4[%c6_159, %c0_160, %c0_161] : memref<8x8x16xf32, #tpu.memory_space<vmem>>, vector<1x8x16xf32>
      %389 = vector.shape_cast %388 : vector<1x8x16xf32> to vector<8x16xf32>
      %390 = vector.extract_strided_slice %389 {offsets = [0, 0], sizes = [1, 6], strides = [1, 1]} : vector<8x16xf32> to vector<1x6xf32>
      %391 = vector.extract_strided_slice %389 {offsets = [1, 0], sizes = [1, 16], strides = [1, 1]} : vector<8x16xf32> to vector<1x16xf32>
      %392 = vector.extract_strided_slice %389 {offsets = [2, 0], sizes = [1, 16], strides = [1, 1]} : vector<8x16xf32> to vector<1x16xf32>
      %393 = vector.extract_strided_slice %389 {offsets = [3, 0], sizes = [1, 16], strides = [1, 1]} : vector<8x16xf32> to vector<1x16xf32>
      %394 = vector.extract_strided_slice %389 {offsets = [4, 0], sizes = [1, 16], strides = [1, 1]} : vector<8x16xf32> to vector<1x16xf32>
      %395 = vector.extract_strided_slice %389 {offsets = [5, 0], sizes = [1, 16], strides = [1, 1]} : vector<8x16xf32> to vector<1x16xf32>
      %396 = vector.extract_strided_slice %389 {offsets = [6, 0], sizes = [1, 16], strides = [1, 1]} : vector<8x16xf32> to vector<1x16xf32>
      %397 = vector.extract_strided_slice %389 {offsets = [7, 0], sizes = [1, 6], strides = [1, 1]} : vector<8x16xf32> to vector<1x6xf32>
      %c0_162 = arith.constant 0 : index
      %c0_163 = arith.constant 0 : index
      %398 = vector.load %arg12[%c0_162, %c0_163] : memref<32x6xf32, #tpu.memory_space<vmem>>, vector<32x6xf32>
      %c0_164 = arith.constant 0 : index
      %c0_165 = arith.constant 0 : index
      %399 = vector.load %arg11[%c0_164, %c0_165] : memref<32x1xf32, #tpu.memory_space<vmem>>, vector<32x1xf32>
      %c6_166 = arith.constant 6 : index
      %c0_167 = arith.constant 0 : index
      %c0_168 = arith.constant 0 : index
      %400 = vector.load %arg5[%c6_166, %c0_167, %c0_168] : memref<8x6x16xf32, #tpu.memory_space<vmem>>, vector<1x6x16xf32>
      %401 = vector.shape_cast %400 : vector<1x6x16xf32> to vector<6x16xf32>
      %cst_169 = arith.constant dense<0.000000e+00> : vector<32x16xf32>
      %402 = tpu.matmul %398, %401, %cst_169 {dimension_numbers = #tpu.dot_dimension_numbers<[1], [0], [0], [1], [0, 0, 1, 1], [], []>} : vector<32x6xf32>, vector<6x16xf32>, vector<32x16xf32> -> vector<32x16xf32>
      %403 = vector.broadcast %391 : vector<1x16xf32> to vector<32x16xf32>
      %404 = arith.addf %402, %403 : vector<32x16xf32>
      %cst_170 = arith.constant dense<0.000000e+00> : vector<16xf32>
      %405 = vector.multi_reduction <add>, %404, %cst_170 [0] : vector<32x16xf32> to vector<16xf32>
      %406 = vector.shape_cast %405 : vector<16xf32> to vector<1x16xf32>
      %cst_171 = arith.constant 3.200000e+01 : f32
      %407 = vector.broadcast %cst_171 : f32 to vector<1x16xf32>
      %408 = arith.divf %406, %407 : vector<1x16xf32>
      %409 = arith.mulf %404, %404 : vector<32x16xf32>
      %cst_172 = arith.constant dense<0.000000e+00> : vector<16xf32>
      %410 = vector.multi_reduction <add>, %409, %cst_172 [0] : vector<32x16xf32> to vector<16xf32>
      %411 = vector.shape_cast %410 : vector<16xf32> to vector<1x16xf32>
      %cst_173 = arith.constant 3.200000e+01 : f32
      %412 = vector.broadcast %cst_173 : f32 to vector<1x16xf32>
      %413 = arith.divf %411, %412 : vector<1x16xf32>
      %414 = arith.mulf %408, %408 : vector<1x16xf32>
      %415 = arith.subf %413, %414 : vector<1x16xf32>
      %416 = vector.broadcast %408 : vector<1x16xf32> to vector<32x16xf32>
      %417 = arith.subf %404, %416 : vector<32x16xf32>
      %cst_174 = arith.constant 9.99999974E-6 : f32
      %418 = vector.broadcast %cst_174 : f32 to vector<1x16xf32>
      %419 = arith.addf %415, %418 : vector<1x16xf32>
      %420 = math.rsqrt %419 : vector<1x16xf32>
      %421 = vector.broadcast %420 : vector<1x16xf32> to vector<32x16xf32>
      %422 = arith.mulf %417, %421 : vector<32x16xf32>
      %423 = vector.broadcast %392 : vector<1x16xf32> to vector<32x16xf32>
      %424 = arith.mulf %422, %423 : vector<32x16xf32>
      %425 = vector.broadcast %393 : vector<1x16xf32> to vector<32x16xf32>
      %426 = arith.addf %424, %425 : vector<32x16xf32>
      %cst_175 = arith.constant 0.000000e+00 : f32
      %427 = vector.broadcast %cst_175 : f32 to vector<32x16xf32>
      %428 = arith.maximumf %426, %427 : vector<32x16xf32>
      %c6_176 = arith.constant 6 : index
      %c0_177 = arith.constant 0 : index
      %c0_178 = arith.constant 0 : index
      %429 = vector.load %arg6[%c6_176, %c0_177, %c0_178] : memref<8x16x16xf32, #tpu.memory_space<vmem>>, vector<1x16x16xf32>
      %430 = vector.shape_cast %429 : vector<1x16x16xf32> to vector<16x16xf32>
      %cst_179 = arith.constant dense<0.000000e+00> : vector<32x16xf32>
      %431 = tpu.matmul %428, %430, %cst_179 {dimension_numbers = #tpu.dot_dimension_numbers<[1], [0], [0], [1], [0, 0, 1, 1], [], []>} : vector<32x16xf32>, vector<16x16xf32>, vector<32x16xf32> -> vector<32x16xf32>
      %432 = vector.broadcast %394 : vector<1x16xf32> to vector<32x16xf32>
      %433 = arith.addf %431, %432 : vector<32x16xf32>
      %cst_180 = arith.constant dense<0.000000e+00> : vector<16xf32>
      %434 = vector.multi_reduction <add>, %433, %cst_180 [0] : vector<32x16xf32> to vector<16xf32>
      %435 = vector.shape_cast %434 : vector<16xf32> to vector<1x16xf32>
      %cst_181 = arith.constant 3.200000e+01 : f32
      %436 = vector.broadcast %cst_181 : f32 to vector<1x16xf32>
      %437 = arith.divf %435, %436 : vector<1x16xf32>
      %438 = arith.mulf %433, %433 : vector<32x16xf32>
      %cst_182 = arith.constant dense<0.000000e+00> : vector<16xf32>
      %439 = vector.multi_reduction <add>, %438, %cst_182 [0] : vector<32x16xf32> to vector<16xf32>
      %440 = vector.shape_cast %439 : vector<16xf32> to vector<1x16xf32>
      %cst_183 = arith.constant 3.200000e+01 : f32
      %441 = vector.broadcast %cst_183 : f32 to vector<1x16xf32>
      %442 = arith.divf %440, %441 : vector<1x16xf32>
      %443 = arith.mulf %437, %437 : vector<1x16xf32>
      %444 = arith.subf %442, %443 : vector<1x16xf32>
      %445 = vector.broadcast %437 : vector<1x16xf32> to vector<32x16xf32>
      %446 = arith.subf %433, %445 : vector<32x16xf32>
      %cst_184 = arith.constant 9.99999974E-6 : f32
      %447 = vector.broadcast %cst_184 : f32 to vector<1x16xf32>
      %448 = arith.addf %444, %447 : vector<1x16xf32>
      %449 = math.rsqrt %448 : vector<1x16xf32>
      %450 = vector.broadcast %449 : vector<1x16xf32> to vector<32x16xf32>
      %451 = arith.mulf %446, %450 : vector<32x16xf32>
      %452 = vector.broadcast %395 : vector<1x16xf32> to vector<32x16xf32>
      %453 = arith.mulf %451, %452 : vector<32x16xf32>
      %454 = vector.broadcast %396 : vector<1x16xf32> to vector<32x16xf32>
      %455 = arith.addf %453, %454 : vector<32x16xf32>
      %cst_185 = arith.constant 0.000000e+00 : f32
      %456 = vector.broadcast %cst_185 : f32 to vector<32x16xf32>
      %457 = arith.maximumf %455, %456 : vector<32x16xf32>
      %c6_186 = arith.constant 6 : index
      %c0_187 = arith.constant 0 : index
      %c0_188 = arith.constant 0 : index
      %458 = vector.load %arg7[%c6_186, %c0_187, %c0_188] : memref<8x16x6xf32, #tpu.memory_space<vmem>>, vector<1x16x6xf32>
      %459 = vector.shape_cast %458 : vector<1x16x6xf32> to vector<16x6xf32>
      %cst_189 = arith.constant dense<0.000000e+00> : vector<32x6xf32>
      %460 = tpu.matmul %457, %459, %cst_189 {dimension_numbers = #tpu.dot_dimension_numbers<[1], [0], [0], [1], [0, 0, 1, 1], [], []>} : vector<32x16xf32>, vector<16x6xf32>, vector<32x6xf32> -> vector<32x6xf32>
      %461 = vector.broadcast %397 : vector<1x6xf32> to vector<32x6xf32>
      %462 = arith.addf %460, %461 : vector<32x6xf32>
      %463 = vector.broadcast %390 : vector<1x6xf32> to vector<32x6xf32>
      %464 = arith.subf %398, %463 : vector<32x6xf32>
      %465 = arith.mulf %464, %464 : vector<32x6xf32>
      %cst_190 = arith.constant dense<0.000000e+00> : vector<32xf32>
      %466 = vector.multi_reduction <add>, %465, %cst_190 [1] : vector<32x6xf32> to vector<32xf32>
      %467 = vector.shape_cast %466 : vector<32xf32> to vector<32x1xf32>
      %cst_191 = arith.constant 3.200000e-01 : f32
      %468 = vector.broadcast %cst_191 : f32 to vector<32x1xf32>
      %469 = arith.mulf %468, %467 : vector<32x1xf32>
      %470 = arith.mulf %462, %462 : vector<32x6xf32>
      %cst_192 = arith.constant dense<0.000000e+00> : vector<32xf32>
      %471 = vector.multi_reduction <add>, %470, %cst_192 [1] : vector<32x6xf32> to vector<32xf32>
      %472 = vector.shape_cast %471 : vector<32xf32> to vector<32x1xf32>
      %cst_193 = arith.constant 5.000000e-01 : f32
      %473 = vector.broadcast %cst_193 : f32 to vector<32x1xf32>
      %474 = arith.mulf %473, %472 : vector<32x1xf32>
      %475 = arith.addf %469, %474 : vector<32x1xf32>
      %476 = vector.broadcast %383 : f32 to vector<32x1xf32>
      %477 = arith.mulf %475, %476 : vector<32x1xf32>
      %478 = arith.subf %399, %477 : vector<32x1xf32>
      %cst_194 = arith.constant 5.000000e-01 : f32
      %479 = arith.mulf %cst_194, %385 : f32
      %480 = arith.mulf %462, %387 : vector<32x6xf32>
      %cst_195 = arith.constant dense<0.000000e+00> : vector<32xf32>
      %481 = vector.multi_reduction <add>, %480, %cst_195 [1] : vector<32x6xf32> to vector<32xf32>
      %482 = vector.shape_cast %481 : vector<32xf32> to vector<32x1xf32>
      %483 = vector.broadcast %479 : f32 to vector<32x1xf32>
      %484 = arith.mulf %483, %482 : vector<32x1xf32>
      %485 = arith.addf %478, %484 : vector<32x1xf32>
      %486 = vector.broadcast %383 : f32 to vector<32x6xf32>
      %487 = arith.mulf %462, %486 : vector<32x6xf32>
      %488 = arith.subf %398, %487 : vector<32x6xf32>
      %cst_196 = arith.constant 5.000000e-01 : f32
      %489 = arith.mulf %cst_196, %385 : f32
      %490 = vector.broadcast %489 : f32 to vector<32x6xf32>
      %491 = arith.mulf %490, %387 : vector<32x6xf32>
      %492 = arith.addf %488, %491 : vector<32x6xf32>
      %c0_197 = arith.constant 0 : index
      %c0_198 = arith.constant 0 : index
      %493 = vector.load %arg11[%c0_197, %c0_198] : memref<32x1xf32, #tpu.memory_space<vmem>>, vector<32x1xf32>
      tpu.vector_store %arg11[%c0_197, %c0_198], %485 {strides = array<i32>} : memref<32x1xf32, #tpu.memory_space<vmem>>, vector<32x1xf32>,
      %c0_199 = arith.constant 0 : index
      %c0_200 = arith.constant 0 : index
      %494 = vector.load %arg12[%c0_199, %c0_200] : memref<32x6xf32, #tpu.memory_space<vmem>>, vector<32x6xf32>
      tpu.vector_store %arg12[%c0_199, %c0_200], %492 {strides = array<i32>} : memref<32x6xf32, #tpu.memory_space<vmem>>, vector<32x6xf32>,
      %c6_201 = arith.constant 6 : index
      %c0_202 = arith.constant 0 : index
      %c0_203 = arith.constant 0 : index
      %495 = vector.load %arg13[%c6_201, %c0_202, %c0_203] : memref<8x32x6xf32, #tpu.memory_space<vmem>>, vector<1x32x6xf32>
      %496 = vector.shape_cast %495 : vector<1x32x6xf32> to vector<32x6xf32>
      %497 = vector.shape_cast %492 : vector<32x6xf32> to vector<1x32x6xf32>
      tpu.vector_store %arg13[%c6_201, %c0_202, %c0_203], %497 {strides = array<i32>} : memref<8x32x6xf32, #tpu.memory_space<vmem>>, vector<1x32x6xf32>,
    } else {
    }
    %c8_i32_152 = arith.constant 8 : i32
    %375 = arith.muli %arg0, %c8_i32_152 : i32
    %c7_i32 = arith.constant 7 : i32
    %376 = arith.addi %375, %c7_i32 : i32
    %c20_i32_153 = arith.constant 20 : i32
    %377 = arith.cmpi slt, %376, %c20_i32_153 : i32
    %378 = arith.extui %377 : i1 to i32
    %c0_i32_154 = arith.constant 0 : i32
    %379 = arith.cmpi ne, %378, %c0_i32_154 : i32
    scf.if %379 {
      %c8_i32_155 = arith.constant 8 : i32
      %380 = arith.muli %arg0, %c8_i32_155 : i32
      %c7_i32_156 = arith.constant 7 : i32
      %381 = arith.addi %380, %c7_i32_156 : i32
      %382 = arith.index_cast %381 : i32 to index
      %383 = memref.load %arg8[%382] : memref<24xf32, #tpu.memory_space<smem>>
      %384 = arith.index_cast %381 : i32 to index
      %385 = memref.load %arg9[%384] : memref<24xf32, #tpu.memory_space<smem>>
      %c7 = arith.constant 7 : index
      %c0_157 = arith.constant 0 : index
      %c0_158 = arith.constant 0 : index
      %386 = vector.load %arg3[%c7, %c0_157, %c0_158] : memref<8x32x6xf32, #tpu.memory_space<vmem>>, vector<1x32x6xf32>
      %387 = vector.shape_cast %386 : vector<1x32x6xf32> to vector<32x6xf32>
      %c7_159 = arith.constant 7 : index
      %c0_160 = arith.constant 0 : index
      %c0_161 = arith.constant 0 : index
      %388 = vector.load %arg4[%c7_159, %c0_160, %c0_161] : memref<8x8x16xf32, #tpu.memory_space<vmem>>, vector<1x8x16xf32>
      %389 = vector.shape_cast %388 : vector<1x8x16xf32> to vector<8x16xf32>
      %390 = vector.extract_strided_slice %389 {offsets = [0, 0], sizes = [1, 6], strides = [1, 1]} : vector<8x16xf32> to vector<1x6xf32>
      %391 = vector.extract_strided_slice %389 {offsets = [1, 0], sizes = [1, 16], strides = [1, 1]} : vector<8x16xf32> to vector<1x16xf32>
      %392 = vector.extract_strided_slice %389 {offsets = [2, 0], sizes = [1, 16], strides = [1, 1]} : vector<8x16xf32> to vector<1x16xf32>
      %393 = vector.extract_strided_slice %389 {offsets = [3, 0], sizes = [1, 16], strides = [1, 1]} : vector<8x16xf32> to vector<1x16xf32>
      %394 = vector.extract_strided_slice %389 {offsets = [4, 0], sizes = [1, 16], strides = [1, 1]} : vector<8x16xf32> to vector<1x16xf32>
      %395 = vector.extract_strided_slice %389 {offsets = [5, 0], sizes = [1, 16], strides = [1, 1]} : vector<8x16xf32> to vector<1x16xf32>
      %396 = vector.extract_strided_slice %389 {offsets = [6, 0], sizes = [1, 16], strides = [1, 1]} : vector<8x16xf32> to vector<1x16xf32>
      %397 = vector.extract_strided_slice %389 {offsets = [7, 0], sizes = [1, 6], strides = [1, 1]} : vector<8x16xf32> to vector<1x6xf32>
      %c0_162 = arith.constant 0 : index
      %c0_163 = arith.constant 0 : index
      %398 = vector.load %arg12[%c0_162, %c0_163] : memref<32x6xf32, #tpu.memory_space<vmem>>, vector<32x6xf32>
      %c0_164 = arith.constant 0 : index
      %c0_165 = arith.constant 0 : index
      %399 = vector.load %arg11[%c0_164, %c0_165] : memref<32x1xf32, #tpu.memory_space<vmem>>, vector<32x1xf32>
      %c7_166 = arith.constant 7 : index
      %c0_167 = arith.constant 0 : index
      %c0_168 = arith.constant 0 : index
      %400 = vector.load %arg5[%c7_166, %c0_167, %c0_168] : memref<8x6x16xf32, #tpu.memory_space<vmem>>, vector<1x6x16xf32>
      %401 = vector.shape_cast %400 : vector<1x6x16xf32> to vector<6x16xf32>
      %cst_169 = arith.constant dense<0.000000e+00> : vector<32x16xf32>
      %402 = tpu.matmul %398, %401, %cst_169 {dimension_numbers = #tpu.dot_dimension_numbers<[1], [0], [0], [1], [0, 0, 1, 1], [], []>} : vector<32x6xf32>, vector<6x16xf32>, vector<32x16xf32> -> vector<32x16xf32>
      %403 = vector.broadcast %391 : vector<1x16xf32> to vector<32x16xf32>
      %404 = arith.addf %402, %403 : vector<32x16xf32>
      %cst_170 = arith.constant dense<0.000000e+00> : vector<16xf32>
      %405 = vector.multi_reduction <add>, %404, %cst_170 [0] : vector<32x16xf32> to vector<16xf32>
      %406 = vector.shape_cast %405 : vector<16xf32> to vector<1x16xf32>
      %cst_171 = arith.constant 3.200000e+01 : f32
      %407 = vector.broadcast %cst_171 : f32 to vector<1x16xf32>
      %408 = arith.divf %406, %407 : vector<1x16xf32>
      %409 = arith.mulf %404, %404 : vector<32x16xf32>
      %cst_172 = arith.constant dense<0.000000e+00> : vector<16xf32>
      %410 = vector.multi_reduction <add>, %409, %cst_172 [0] : vector<32x16xf32> to vector<16xf32>
      %411 = vector.shape_cast %410 : vector<16xf32> to vector<1x16xf32>
      %cst_173 = arith.constant 3.200000e+01 : f32
      %412 = vector.broadcast %cst_173 : f32 to vector<1x16xf32>
      %413 = arith.divf %411, %412 : vector<1x16xf32>
      %414 = arith.mulf %408, %408 : vector<1x16xf32>
      %415 = arith.subf %413, %414 : vector<1x16xf32>
      %416 = vector.broadcast %408 : vector<1x16xf32> to vector<32x16xf32>
      %417 = arith.subf %404, %416 : vector<32x16xf32>
      %cst_174 = arith.constant 9.99999974E-6 : f32
      %418 = vector.broadcast %cst_174 : f32 to vector<1x16xf32>
      %419 = arith.addf %415, %418 : vector<1x16xf32>
      %420 = math.rsqrt %419 : vector<1x16xf32>
      %421 = vector.broadcast %420 : vector<1x16xf32> to vector<32x16xf32>
      %422 = arith.mulf %417, %421 : vector<32x16xf32>
      %423 = vector.broadcast %392 : vector<1x16xf32> to vector<32x16xf32>
      %424 = arith.mulf %422, %423 : vector<32x16xf32>
      %425 = vector.broadcast %393 : vector<1x16xf32> to vector<32x16xf32>
      %426 = arith.addf %424, %425 : vector<32x16xf32>
      %cst_175 = arith.constant 0.000000e+00 : f32
      %427 = vector.broadcast %cst_175 : f32 to vector<32x16xf32>
      %428 = arith.maximumf %426, %427 : vector<32x16xf32>
      %c7_176 = arith.constant 7 : index
      %c0_177 = arith.constant 0 : index
      %c0_178 = arith.constant 0 : index
      %429 = vector.load %arg6[%c7_176, %c0_177, %c0_178] : memref<8x16x16xf32, #tpu.memory_space<vmem>>, vector<1x16x16xf32>
      %430 = vector.shape_cast %429 : vector<1x16x16xf32> to vector<16x16xf32>
      %cst_179 = arith.constant dense<0.000000e+00> : vector<32x16xf32>
      %431 = tpu.matmul %428, %430, %cst_179 {dimension_numbers = #tpu.dot_dimension_numbers<[1], [0], [0], [1], [0, 0, 1, 1], [], []>} : vector<32x16xf32>, vector<16x16xf32>, vector<32x16xf32> -> vector<32x16xf32>
      %432 = vector.broadcast %394 : vector<1x16xf32> to vector<32x16xf32>
      %433 = arith.addf %431, %432 : vector<32x16xf32>
      %cst_180 = arith.constant dense<0.000000e+00> : vector<16xf32>
      %434 = vector.multi_reduction <add>, %433, %cst_180 [0] : vector<32x16xf32> to vector<16xf32>
      %435 = vector.shape_cast %434 : vector<16xf32> to vector<1x16xf32>
      %cst_181 = arith.constant 3.200000e+01 : f32
      %436 = vector.broadcast %cst_181 : f32 to vector<1x16xf32>
      %437 = arith.divf %435, %436 : vector<1x16xf32>
      %438 = arith.mulf %433, %433 : vector<32x16xf32>
      %cst_182 = arith.constant dense<0.000000e+00> : vector<16xf32>
      %439 = vector.multi_reduction <add>, %438, %cst_182 [0] : vector<32x16xf32> to vector<16xf32>
      %440 = vector.shape_cast %439 : vector<16xf32> to vector<1x16xf32>
      %cst_183 = arith.constant 3.200000e+01 : f32
      %441 = vector.broadcast %cst_183 : f32 to vector<1x16xf32>
      %442 = arith.divf %440, %441 : vector<1x16xf32>
      %443 = arith.mulf %437, %437 : vector<1x16xf32>
      %444 = arith.subf %442, %443 : vector<1x16xf32>
      %445 = vector.broadcast %437 : vector<1x16xf32> to vector<32x16xf32>
      %446 = arith.subf %433, %445 : vector<32x16xf32>
      %cst_184 = arith.constant 9.99999974E-6 : f32
      %447 = vector.broadcast %cst_184 : f32 to vector<1x16xf32>
      %448 = arith.addf %444, %447 : vector<1x16xf32>
      %449 = math.rsqrt %448 : vector<1x16xf32>
      %450 = vector.broadcast %449 : vector<1x16xf32> to vector<32x16xf32>
      %451 = arith.mulf %446, %450 : vector<32x16xf32>
      %452 = vector.broadcast %395 : vector<1x16xf32> to vector<32x16xf32>
      %453 = arith.mulf %451, %452 : vector<32x16xf32>
      %454 = vector.broadcast %396 : vector<1x16xf32> to vector<32x16xf32>
      %455 = arith.addf %453, %454 : vector<32x16xf32>
      %cst_185 = arith.constant 0.000000e+00 : f32
      %456 = vector.broadcast %cst_185 : f32 to vector<32x16xf32>
      %457 = arith.maximumf %455, %456 : vector<32x16xf32>
      %c7_186 = arith.constant 7 : index
      %c0_187 = arith.constant 0 : index
      %c0_188 = arith.constant 0 : index
      %458 = vector.load %arg7[%c7_186, %c0_187, %c0_188] : memref<8x16x6xf32, #tpu.memory_space<vmem>>, vector<1x16x6xf32>
      %459 = vector.shape_cast %458 : vector<1x16x6xf32> to vector<16x6xf32>
      %cst_189 = arith.constant dense<0.000000e+00> : vector<32x6xf32>
      %460 = tpu.matmul %457, %459, %cst_189 {dimension_numbers = #tpu.dot_dimension_numbers<[1], [0], [0], [1], [0, 0, 1, 1], [], []>} : vector<32x16xf32>, vector<16x6xf32>, vector<32x6xf32> -> vector<32x6xf32>
      %461 = vector.broadcast %397 : vector<1x6xf32> to vector<32x6xf32>
      %462 = arith.addf %460, %461 : vector<32x6xf32>
      %463 = vector.broadcast %390 : vector<1x6xf32> to vector<32x6xf32>
      %464 = arith.subf %398, %463 : vector<32x6xf32>
      %465 = arith.mulf %464, %464 : vector<32x6xf32>
      %cst_190 = arith.constant dense<0.000000e+00> : vector<32xf32>
      %466 = vector.multi_reduction <add>, %465, %cst_190 [1] : vector<32x6xf32> to vector<32xf32>
      %467 = vector.shape_cast %466 : vector<32xf32> to vector<32x1xf32>
      %cst_191 = arith.constant 3.200000e-01 : f32
      %468 = vector.broadcast %cst_191 : f32 to vector<32x1xf32>
      %469 = arith.mulf %468, %467 : vector<32x1xf32>
      %470 = arith.mulf %462, %462 : vector<32x6xf32>
      %cst_192 = arith.constant dense<0.000000e+00> : vector<32xf32>
      %471 = vector.multi_reduction <add>, %470, %cst_192 [1] : vector<32x6xf32> to vector<32xf32>
      %472 = vector.shape_cast %471 : vector<32xf32> to vector<32x1xf32>
      %cst_193 = arith.constant 5.000000e-01 : f32
      %473 = vector.broadcast %cst_193 : f32 to vector<32x1xf32>
      %474 = arith.mulf %473, %472 : vector<32x1xf32>
      %475 = arith.addf %469, %474 : vector<32x1xf32>
      %476 = vector.broadcast %383 : f32 to vector<32x1xf32>
      %477 = arith.mulf %475, %476 : vector<32x1xf32>
      %478 = arith.subf %399, %477 : vector<32x1xf32>
      %cst_194 = arith.constant 5.000000e-01 : f32
      %479 = arith.mulf %cst_194, %385 : f32
      %480 = arith.mulf %462, %387 : vector<32x6xf32>
      %cst_195 = arith.constant dense<0.000000e+00> : vector<32xf32>
      %481 = vector.multi_reduction <add>, %480, %cst_195 [1] : vector<32x6xf32> to vector<32xf32>
      %482 = vector.shape_cast %481 : vector<32xf32> to vector<32x1xf32>
      %483 = vector.broadcast %479 : f32 to vector<32x1xf32>
      %484 = arith.mulf %483, %482 : vector<32x1xf32>
      %485 = arith.addf %478, %484 : vector<32x1xf32>
      %486 = vector.broadcast %383 : f32 to vector<32x6xf32>
      %487 = arith.mulf %462, %486 : vector<32x6xf32>
      %488 = arith.subf %398, %487 : vector<32x6xf32>
      %cst_196 = arith.constant 5.000000e-01 : f32
      %489 = arith.mulf %cst_196, %385 : f32
      %490 = vector.broadcast %489 : f32 to vector<32x6xf32>
      %491 = arith.mulf %490, %387 : vector<32x6xf32>
      %492 = arith.addf %488, %491 : vector<32x6xf32>
      %c0_197 = arith.constant 0 : index
      %c0_198 = arith.constant 0 : index
      %493 = vector.load %arg11[%c0_197, %c0_198] : memref<32x1xf32, #tpu.memory_space<vmem>>, vector<32x1xf32>
      tpu.vector_store %arg11[%c0_197, %c0_198], %485 {strides = array<i32>} : memref<32x1xf32, #tpu.memory_space<vmem>>, vector<32x1xf32>,
      %c0_199 = arith.constant 0 : index
      %c0_200 = arith.constant 0 : index
      %494 = vector.load %arg12[%c0_199, %c0_200] : memref<32x6xf32, #tpu.memory_space<vmem>>, vector<32x6xf32>
      tpu.vector_store %arg12[%c0_199, %c0_200], %492 {strides = array<i32>} : memref<32x6xf32, #tpu.memory_space<vmem>>, vector<32x6xf32>,
      %c7_201 = arith.constant 7 : index
      %c0_202 = arith.constant 0 : index
      %c0_203 = arith.constant 0 : index
      %495 = vector.load %arg13[%c7_201, %c0_202, %c0_203] : memref<8x32x6xf32, #tpu.memory_space<vmem>>, vector<1x32x6xf32>
      %496 = vector.shape_cast %495 : vector<1x32x6xf32> to vector<32x6xf32>
      %497 = vector.shape_cast %492 : vector<32x6xf32> to vector<1x32x6xf32>
      tpu.vector_store %arg13[%c7_201, %c0_202, %c0_203], %497 {strides = array<i32>} : memref<8x32x6xf32, #tpu.memory_space<vmem>>, vector<1x32x6xf32>,
    } else {
    }
    return
  }
  func.func @transform_0(%arg0: i32) -> (i32, i32) {
    %c0_i32 = arith.constant 0 : i32
    %c0_i32_0 = arith.constant 0 : i32
    %c0_i32_1 = arith.constant 0 : i32
    return %c0_i32, %c0_i32_0 : i32, i32
  }
  func.func @transform_1(%arg0: i32) -> (i32, i32) {
    %c0_i32 = arith.constant 0 : i32
    %c0_i32_0 = arith.constant 0 : i32
    %c0_i32_1 = arith.constant 0 : i32
    return %c0_i32, %c0_i32_0 : i32, i32
  }
  func.func @transform_2(%arg0: i32) -> (i32, i32, i32) {
    %c0_i32 = arith.constant 0 : i32
    %c0_i32_0 = arith.constant 0 : i32
    %c0_i32_1 = arith.constant 0 : i32
    return %arg0, %c0_i32, %c0_i32_0 : i32, i32, i32
  }
  func.func @transform_3(%arg0: i32) -> (i32, i32, i32) {
    %c0_i32 = arith.constant 0 : i32
    %c0_i32_0 = arith.constant 0 : i32
    %c0_i32_1 = arith.constant 0 : i32
    return %arg0, %c0_i32, %c0_i32_0 : i32, i32, i32
  }
  func.func @transform_4(%arg0: i32) -> (i32, i32, i32) {
    %c0_i32 = arith.constant 0 : i32
    %c0_i32_0 = arith.constant 0 : i32
    %c0_i32_1 = arith.constant 0 : i32
    return %arg0, %c0_i32, %c0_i32_0 : i32, i32, i32
  }
  func.func @transform_5(%arg0: i32) -> (i32, i32, i32) {
    %c0_i32 = arith.constant 0 : i32
    %c0_i32_0 = arith.constant 0 : i32
    %c0_i32_1 = arith.constant 0 : i32
    return %arg0, %c0_i32, %c0_i32_0 : i32, i32, i32
  }
  func.func @transform_6(%arg0: i32) -> (i32, i32, i32) {
    %c0_i32 = arith.constant 0 : i32
    %c0_i32_0 = arith.constant 0 : i32
    %c0_i32_1 = arith.constant 0 : i32
    return %arg0, %c0_i32, %c0_i32_0 : i32, i32, i32
  }
  func.func @transform_7(%arg0: i32) -> i32 {
    %c0_i32 = arith.constant 0 : i32
    %c0_i32_0 = arith.constant 0 : i32
    return %c0_i32 : i32
  }
  func.func @transform_8(%arg0: i32) -> i32 {
    %c0_i32 = arith.constant 0 : i32
    %c0_i32_0 = arith.constant 0 : i32
    return %c0_i32 : i32
  }
  func.func @transform_9(%arg0: i32) -> i32 {
    %c0_i32 = arith.constant 0 : i32
    %c0_i32_0 = arith.constant 0 : i32
    return %c0_i32 : i32
  }
  func.func @transform_10(%arg0: i32) -> (i32, i32) {
    %c0_i32 = arith.constant 0 : i32
    %c0_i32_0 = arith.constant 0 : i32
    %c0_i32_1 = arith.constant 0 : i32
    return %c0_i32, %c0_i32_0 : i32, i32
  }
  func.func @transform_11(%arg0: i32) -> (i32, i32) {
    %c0_i32 = arith.constant 0 : i32
    %c0_i32_0 = arith.constant 0 : i32
    %c0_i32_1 = arith.constant 0 : i32
    return %c0_i32, %c0_i32_0 : i32, i32
  }
  func.func @transform_12(%arg0: i32) -> (i32, i32, i32) {
    %c0_i32 = arith.constant 0 : i32
    %c0_i32_0 = arith.constant 0 : i32
    %c0_i32_1 = arith.constant 0 : i32
    return %arg0, %c0_i32, %c0_i32_0 : i32, i32, i32
  }
}

</mosaic_0001>

<llo_original>
// kernel: tpu_custom_call.1
$region0: #{tpu_custom_call.1}
  #allocation0 [shape = 'u32[]', space=smem, size = 0x4, offset = 0x4, fixed_abs, tag = 'smem constant byte address 0x4 - core index']
  #allocation1 [shape = 'u32[72,128]{1,0:T(1,128)}', space=vmem, size = 0x9000, scoped, tag = 'internal scratch']
  #allocation2 [shape = 'f32[1]{0:T(128)S(6)}', space=smem, size = 0x200, scoped, tag = 'scoped memory for tpu_custom_call.1']
  %s0 = inlined_call_operand.vmem [shape: f32[32,6], index: 0, kind: input, shape index: {}]
  %s1 = inlined_call_operand.vmem [shape: f32[1,6], index: 1, kind: input, shape index: {}]
  %s2 = inlined_call_operand.vmem [shape: f32[24,32,6], index: 2, kind: input, shape index: {}]
  %s3 = inlined_call_operand.vmem [shape: f32[24,8,16], index: 3, kind: input, shape index: {}]
  %s4 = inlined_call_operand.vmem [shape: f32[24,6,16], index: 4, kind: input, shape index: {}]
  %s5 = inlined_call_operand.vmem [shape: f32[24,16,16], index: 5, kind: input, shape index: {}]
  %s6 = inlined_call_operand.vmem [shape: f32[24,16,6], index: 6, kind: input, shape index: {}]
  %s7 = inlined_call_operand.vmem [shape: f32[24], index: 7, kind: input, shape index: {}]
  %s8 = inlined_call_operand.vmem [shape: f32[24], index: 8, kind: input, shape index: {}]
  %s9 = inlined_call_operand.<no memory space> [shape: f32[1], index: 9, kind: input, shape index: {}]
  %s10 = inlined_call_operand.vmem [shape: f32[32,1], index: 10, kind: output, shape index: {0}]
  %s11 = inlined_call_operand.vmem [shape: f32[32,6], index: 11, kind: output, shape index: {1}]
  %s12 = inlined_call_operand.vmem [shape: f32[24,32,6], index: 12, kind: output, shape index: {2}]
  %13 = xla_tuple %s10, %s11, %s12
  %s14 = sld [smem:[#allocation0]]
  $region121: #{tpu_custom_call.1} parent=0
    _
  %s16 = ssub.s32 1, %s14
  %s17 = scalar_select 0, %s16, %s14
  %18 = sst [smem:[#allocation2]] %s9
  $region1: #{tpu_custom_call.1} parent=0
    #allocation3 [shape = 'u8[512]{0}', space=smem, size = 0x200, scoped, tag = 'input window, operand 7, single buffered']
    #allocation4 [shape = 's32[2]{0}', space=sflag, size = 0x8, scoped, tag = 'scoped memory for tpu_custom_call.1']
    #allocation5 [shape = 'u8[512]{0}', space=smem, size = 0x200, scoped, tag = 'input window, operand 8, single buffered']
    #allocation6 [shape = 's32[1]{0}', space=sflag, size = 0x4, scoped, tag = 'scoped memory for tpu_custom_call.1']
    %19 = vsyncpa [#allocation4], 0
    %20 = vsyncpa [#allocation6], 0
    loop: start=0, step=1, limit=5
    $region2: #{tpu_custom_call.1} parent=1 // loop_pre_header
      _
    $region3: #{tpu_custom_call.1} parent=1 // loop_header
      %s22 = sphi 0, %s26
      %p23 = scmp.ge.s32.totalorder %s22, 5
      %s30 = sphi 0, %s30
      %s32 = sphi 0, %s30
      %s33 = sphi 0, %s32
      %s47 = sphi 0, %s33
      %s51 = sphi 0, %s51
      %s53 = sphi 0, %s51
      %s54 = sphi 0, %s53
      %s68 = sphi 0, %s54
      %s74 = sphi 0, %s76
      %s77 = sphi 0, %s74
      %s78 = sphi 0, %s77
      %s94 = sphi 0, %s78
      %s100 = sphi 0, %s102
      %s103 = sphi 0, %s100
      %s104 = sphi 0, %s103
      %s120 = sphi 0, %s104
      %s126 = sphi 0, %s128
      %s129 = sphi 0, %s126
      %s130 = sphi 0, %s129
      %s146 = sphi 0, %s130
      %s152 = sphi 0, %s154
      %s155 = sphi 0, %s152
      %s156 = sphi 0, %s155
      %s172 = sphi 0, %s156
      %s178 = sphi 0, %s180
      %s181 = sphi 0, %s178
      %s182 = sphi 0, %s181
      %s198 = sphi 0, %s182
      %s202 = sphi 0, %s202
      %s204 = sphi 0, %s202
      %s205 = sphi 0, %s204
      %s219 = sphi 0, %s205
      %s223 = sphi 0, %s223
      %s225 = sphi 0, %s223
      %s226 = sphi 0, %s225
      %s240 = sphi 0, %s226
      %s244 = sphi 0, %s244
      %s246 = sphi 0, %s244
      %s247 = sphi 0, %s246
      %s261 = sphi 0, %s247
      %s265 = sphi 0, %s265
      %s267 = sphi 0, %s265
      %s268 = sphi 0, %s267
      %s282 = sphi 0, %s268
      %s286 = sphi 0, %s286
      %s288 = sphi 0, %s286
      %s289 = sphi 0, %s288
      %s303 = sphi 0, %s289
      %s309 = sphi 0, %s311
      %s312 = sphi 0, %s309
      %s313 = sphi 0, %s312
      %s329 = sphi 0, %s313
    $region4: #{tpu_custom_call.1} parent=1 // loop_header_branch
      %25 = sbr.rel (%p23) target = $region8
    $region5: #{tpu_custom_call.1} parent=1 // loop_body
      %s27 = ssub.s32 %s22, 1
      %s28 = ssub.s32 %s22, 2
      %s29 = sadd.s32 %s22, 1
      %s31 = sadd.s32 %s30, 1
      %p34 = scmp.eq.s32.totalorder %s22, 2
      %p35 = scmp.ne.s32.totalorder %s30, %s32
      %p36 = scmp.eq.s32.totalorder %s22, 0
      %p37 = por %p35, %p36
      %p38 = scmp.ne.s32.totalorder %s30, %s32
      %p39 = scmp.eq.s32.totalorder %s27, 2
      %p40 = por %p38, %p39
      %p41 = scmp.ne.s32.totalorder %s32, %s33
      %p42 = scmp.eq.s32.totalorder %s27, 0
      %p43 = por %p41, %p42
      %p44 = scmp.ne.s32.totalorder %s32, %s33
      %p45 = scmp.eq.s32.totalorder %s28, 2
      %p46 = por %p44, %p45
      %p48 = scmp.ne.s32.totalorder %s33, %s47
      %p49 = scmp.eq.s32.totalorder %s28, 0
      %p50 = por %p48, %p49
      %s52 = sadd.s32 %s51, 1
      %p55 = scmp.eq.s32.totalorder %s22, 2
      %p56 = scmp.ne.s32.totalorder %s51, %s53
      %p57 = scmp.eq.s32.totalorder %s22, 0
      %p58 = por %p56, %p57
      %p59 = scmp.ne.s32.totalorder %s51, %s53
      %p60 = scmp.eq.s32.totalorder %s27, 2
      %p61 = por %p59, %p60
      %p62 = scmp.ne.s32.totalorder %s53, %s54
      %p63 = scmp.eq.s32.totalorder %s27, 0
      %p64 = por %p62, %p63
      %p65 = scmp.ne.s32.totalorder %s53, %s54
      %p66 = scmp.eq.s32.totalorder %s28, 2
      %p67 = por %p65, %p66
      %p69 = scmp.ne.s32.totalorder %s54, %s68
      %p70 = scmp.eq.s32.totalorder %s28, 0
      %p71 = por %p69, %p70
      %s72 = ssub.s32 %s22, %s29
      %p73 = scmp.eq.s32.totalorder %s72, 0
      %s75 = sadd.s32 %s74, 1
      %s76 = scalar_select %p73, %s74, %s75
      %p79 = pneg %p73
      %p80 = scmp.eq.s32.totalorder %s22, 2
      %p81 = por %p79, %p80
      %p82 = scmp.ne.s32.totalorder %s74, %s77
      %p83 = scmp.eq.s32.totalorder %s22, 0
      %p84 = por %p82, %p83
      %p85 = scmp.ne.s32.totalorder %s74, %s77
      %p86 = scmp.eq.s32.totalorder %s27, 2
      %p87 = por %p85, %p86
      %p88 = scmp.ne.s32.totalorder %s77, %s78
      %p89 = scmp.eq.s32.totalorder %s27, 0
      %p90 = por %p88, %p89
      %p91 = scmp.ne.s32.totalorder %s77, %s78
      %p92 = scmp.eq.s32.totalorder %s28, 2
      %p93 = por %p91, %p92
      %p95 = scmp.ne.s32.totalorder %s78, %s94
      %p96 = scmp.eq.s32.totalorder %s28, 0
      %p97 = por %p95, %p96
      %s98 = ssub.s32 %s22, %s29
      %p99 = scmp.eq.s32.totalorder %s98, 0
      %s101 = sadd.s32 %s100, 1
      %s102 = scalar_select %p99, %s100, %s101
      %p105 = pneg %p99
      %p106 = scmp.eq.s32.totalorder %s22, 2
      %p107 = por %p105, %p106
      %p108 = scmp.ne.s32.totalorder %s100, %s103
      %p109 = scmp.eq.s32.totalorder %s22, 0
      %p110 = por %p108, %p109
      %p111 = scmp.ne.s32.totalorder %s100, %s103
      %p112 = scmp.eq.s32.totalorder %s27, 2
      %p113 = por %p111, %p112
      %p114 = scmp.ne.s32.totalorder %s103, %s104
      %p115 = scmp.eq.s32.totalorder %s27, 0
      %p116 = por %p114, %p115
      %p117 = scmp.ne.s32.totalorder %s103, %s104
      %p118 = scmp.eq.s32.totalorder %s28, 2
      %p119 = por %p117, %p118
      %p121 = scmp.ne.s32.totalorder %s104, %s120
      %p122 = scmp.eq.s32.totalorder %s28, 0
      %p123 = por %p121, %p122
      %s124 = ssub.s32 %s22, %s29
      %p125 = scmp.eq.s32.totalorder %s124, 0
      %s127 = sadd.s32 %s126, 1
      %s128 = scalar_select %p125, %s126, %s127
      %p131 = pneg %p125
      %p132 = scmp.eq.s32.totalorder %s22, 2
      %p133 = por %p131, %p132
      %p134 = scmp.ne.s32.totalorder %s126, %s129
      %p135 = scmp.eq.s32.totalorder %s22, 0
      %p136 = por %p134, %p135
      %p137 = scmp.ne.s32.totalorder %s126, %s129
      %p138 = scmp.eq.s32.totalorder %s27, 2
      %p139 = por %p137, %p138
      %p140 = scmp.ne.s32.totalorder %s129, %s130
      %p141 = scmp.eq.s32.totalorder %s27, 0
      %p142 = por %p140, %p141
      %p143 = scmp.ne.s32.totalorder %s129, %s130
      %p144 = scmp.eq.s32.totalorder %s28, 2
      %p145 = por %p143, %p144
      %p147 = scmp.ne.s32.totalorder %s130, %s146
      %p148 = scmp.eq.s32.totalorder %s28, 0
      %p149 = por %p147, %p148
      %s150 = ssub.s32 %s22, %s29
      %p151 = scmp.eq.s32.totalorder %s150, 0
      %s153 = sadd.s32 %s152, 1
      %s154 = scalar_select %p151, %s152, %s153
      %p157 = pneg %p151
      %p158 = scmp.eq.s32.totalorder %s22, 2
      %p159 = por %p157, %p158
      %p160 = scmp.ne.s32.totalorder %s152, %s155
      %p161 = scmp.eq.s32.totalorder %s22, 0
      %p162 = por %p160, %p161
      %p163 = scmp.ne.s32.totalorder %s152, %s155
      %p164 = scmp.eq.s32.totalorder %s27, 2
      %p165 = por %p163, %p164
      %p166 = scmp.ne.s32.totalorder %s155, %s156
      %p167 = scmp.eq.s32.totalorder %s27, 0
      %p168 = por %p166, %p167
      %p169 = scmp.ne.s32.totalorder %s155, %s156
      %p170 = scmp.eq.s32.totalorder %s28, 2
      %p171 = por %p169, %p170
      %p173 = scmp.ne.s32.totalorder %s156, %s172
      %p174 = scmp.eq.s32.totalorder %s28, 0
      %p175 = por %p173, %p174
      %s176 = ssub.s32 %s22, %s29
      %p177 = scmp.eq.s32.totalorder %s176, 0
      %s179 = sadd.s32 %s178, 1
      %s180 = scalar_select %p177, %s178, %s179
      %p183 = pneg %p177
      %p184 = scmp.eq.s32.totalorder %s22, 2
      %p185 = por %p183, %p184
      %p186 = scmp.ne.s32.totalorder %s178, %s181
      %p187 = scmp.eq.s32.totalorder %s22, 0
      %p188 = por %p186, %p187
      %p189 = scmp.ne.s32.totalorder %s178, %s181
      %p190 = scmp.eq.s32.totalorder %s27, 2
      %p191 = por %p189, %p190
      %p192 = scmp.ne.s32.totalorder %s181, %s182
      %p193 = scmp.eq.s32.totalorder %s27, 0
      %p194 = por %p192, %p193
      %p195 = scmp.ne.s32.totalorder %s181, %s182
      %p196 = scmp.eq.s32.totalorder %s28, 2
      %p197 = por %p195, %p196
      %p199 = scmp.ne.s32.totalorder %s182, %s198
      %p200 = scmp.eq.s32.totalorder %s28, 0
      %p201 = por %p199, %p200
      %s203 = sadd.s32 %s202, 1
      %p206 = scmp.eq.s32.totalorder %s22, 2
      %p207 = scmp.ne.s32.totalorder %s202, %s204
      %p208 = scmp.eq.s32.totalorder %s22, 0
      %p209 = por %p207, %p208
      %p210 = scmp.ne.s32.totalorder %s202, %s204
      %p211 = scmp.eq.s32.totalorder %s27, 2
      %p212 = por %p210, %p211
      %p213 = scmp.ne.s32.totalorder %s204, %s205
      %p214 = scmp.eq.s32.totalorder %s27, 0
      %p215 = por %p213, %p214
      %p216 = scmp.ne.s32.totalorder %s204, %s205
      %p217 = scmp.eq.s32.totalorder %s28, 2
      %p218 = por %p216, %p217
      %p220 = scmp.ne.s32.totalorder %s205, %s219
      %p221 = scmp.eq.s32.totalorder %s28, 0
      %p222 = por %p220, %p221
      %s224 = sadd.s32 %s223, 1
      %p227 = scmp.eq.s32.totalorder %s22, 2
      %p228 = scmp.ne.s32.totalorder %s223, %s225
      %p229 = scmp.eq.s32.totalorder %s22, 0
      %p230 = por %p228, %p229
      %p231 = scmp.ne.s32.totalorder %s223, %s225
      %p232 = scmp.eq.s32.totalorder %s27, 2
      %p233 = por %p231, %p232
      %p234 = scmp.ne.s32.totalorder %s225, %s226
      %p235 = scmp.eq.s32.totalorder %s27, 0
      %p236 = por %p234, %p235
      %p237 = scmp.ne.s32.totalorder %s225, %s226
      %p238 = scmp.eq.s32.totalorder %s28, 2
      %p239 = por %p237, %p238
      %p241 = scmp.ne.s32.totalorder %s226, %s240
      %p242 = scmp.eq.s32.totalorder %s28, 0
      %p243 = por %p241, %p242
      %s245 = sadd.s32 %s244, 1
      %p248 = scmp.eq.s32.totalorder %s22, 2
      %p249 = scmp.ne.s32.totalorder %s244, %s246
      %p250 = scmp.eq.s32.totalorder %s22, 0
      %p251 = por %p249, %p250
      %p252 = scmp.ne.s32.totalorder %s244, %s246
      %p253 = scmp.eq.s32.totalorder %s27, 2
      %p254 = por %p252, %p253
      %p255 = scmp.ne.s32.totalorder %s246, %s247
      %p256 = scmp.eq.s32.totalorder %s27, 0
      %p257 = por %p255, %p256
      %p258 = scmp.ne.s32.totalorder %s246, %s247
      %p259 = scmp.eq.s32.totalorder %s28, 2
      %p260 = por %p258, %p259
      %p262 = scmp.ne.s32.totalorder %s247, %s261
      %p263 = scmp.eq.s32.totalorder %s28, 0
      %p264 = por %p262, %p263
      %s266 = sadd.s32 %s265, 1
      %p269 = scmp.eq.s32.totalorder %s22, 2
      %p270 = scmp.ne.s32.totalorder %s265, %s267
      %p271 = scmp.eq.s32.totalorder %s22, 0
      %p272 = por %p270, %p271
      %p273 = scmp.ne.s32.totalorder %s265, %s267
      %p274 = scmp.eq.s32.totalorder %s27, 2
      %p275 = por %p273, %p274
      %p276 = scmp.ne.s32.totalorder %s267, %s268
      %p277 = scmp.eq.s32.totalorder %s27, 0
      %p278 = por %p276, %p277
      %p279 = scmp.ne.s32.totalorder %s267, %s268
      %p280 = scmp.eq.s32.totalorder %s28, 2
      %p281 = por %p279, %p280
      %p283 = scmp.ne.s32.totalorder %s268, %s282
      %p284 = scmp.eq.s32.totalorder %s28, 0
      %p285 = por %p283, %p284
      %s287 = sadd.s32 %s286, 1
      %p290 = scmp.eq.s32.totalorder %s22, 2
      %p291 = scmp.ne.s32.totalorder %s286, %s288
      %p292 = scmp.eq.s32.totalorder %s22, 0
      %p293 = por %p291, %p292
      %p294 = scmp.ne.s32.totalorder %s286, %s288
      %p295 = scmp.eq.s32.totalorder %s27, 2
      %p296 = por %p294, %p295
      %p297 = scmp.ne.s32.totalorder %s288, %s289
      %p298 = scmp.eq.s32.totalorder %s27, 0
      %p299 = por %p297, %p298
      %p300 = scmp.ne.s32.totalorder %s288, %s289
      %p301 = scmp.eq.s32.totalorder %s28, 2
      %p302 = por %p300, %p301
      %p304 = scmp.ne.s32.totalorder %s289, %s303
      %p305 = scmp.eq.s32.totalorder %s28, 0
      %p306 = por %p304, %p305
      %s307 = ssub.s32 %s22, %s29
      %p308 = scmp.eq.s32.totalorder %s307, 0
      %s310 = sadd.s32 %s309, 1
      %s311 = scalar_select %p308, %s309, %s310
      %p314 = pneg %p308
      %p315 = scmp.eq.s32.totalorder %s22, 2
      %p316 = por %p314, %p315
      %p317 = scmp.ne.s32.totalorder %s309, %s312
      %p318 = scmp.eq.s32.totalorder %s22, 0
      %p319 = por %p317, %p318
      %p320 = scmp.ne.s32.totalorder %s309, %s312
      %p321 = scmp.eq.s32.totalorder %s27, 2
      %p322 = por %p320, %p321
      %p323 = scmp.ne.s32.totalorder %s312, %s313
      %p324 = scmp.eq.s32.totalorder %s27, 0
      %p325 = por %p323, %p324
      %p326 = scmp.ne.s32.totalorder %s312, %s313
      %p327 = scmp.eq.s32.totalorder %s28, 2
      %p328 = por %p326, %p327
      %p330 = scmp.ne.s32.totalorder %s313, %s329
      %p331 = scmp.eq.s32.totalorder %s28, 0
      %p332 = por %p330, %p331
      %p333 = scmp.le.s32.totalorder 1, %s22
      %p334 = scmp.lt.s32.totalorder %s22, 4
      %p335 = pnand %p333, %p334
      %p336 = pneg %p335
      // Predicated region
      $region9: #{tpu_custom_call.1} parent=5 // pred_check
        _
      $region10: #{tpu_custom_call.1} parent=5 // pred_check_branch
        %338 = sbr.rel (%p335) target = $region12
      $region11: #{tpu_custom_call.1} parent=5 // pred_region
        %s339 = ssub.s32 %s22, 1
        // Predicated region
        $region13: #{tpu_custom_call.1} parent=11 // pred_check
          %p340 = pneg %p43
        $region14: #{tpu_custom_call.1} parent=11 // pred_check_branch
          %342 = sbr.rel (%p340) target = $region16
        $region15: #{tpu_custom_call.1} parent=11 // pred_region
          _
        $region16: #{tpu_custom_call.1} parent=11 // pred_fallthru
          _
        // Predicated region
        $region17: #{tpu_custom_call.1} parent=11 // pred_check
          %p343 = pneg %p64
        $region18: #{tpu_custom_call.1} parent=11 // pred_check_branch
          %345 = sbr.rel (%p343) target = $region20
        $region19: #{tpu_custom_call.1} parent=11 // pred_region
          _
        $region20: #{tpu_custom_call.1} parent=11 // pred_fallthru
          _
        // Predicated region
        $region21: #{tpu_custom_call.1} parent=11 // pred_check
          %p346 = pneg %p215
        $region22: #{tpu_custom_call.1} parent=11 // pred_check_branch
          %348 = sbr.rel (%p346) target = $region24
        $region23: #{tpu_custom_call.1} parent=11 // pred_region
          %350 = vsyncadd [#allocation4], 0
          %s352 = sshll.u32 %s7, 4
          %s353 = int_to_ptr.vmem [resolvable:$true] %s352
          %355 = dma.vmem_to_smem %s353, 16, [#allocation3], [#allocation4]
        $region24: #{tpu_custom_call.1} parent=11 // pred_fallthru
          _
        // Predicated region
        $region25: #{tpu_custom_call.1} parent=11 // pred_check
          %p356 = pneg %p236
        $region26: #{tpu_custom_call.1} parent=11 // pred_check_branch
          %358 = sbr.rel (%p356) target = $region28
        $region27: #{tpu_custom_call.1} parent=11 // pred_region
          %360 = vsyncadd [#allocation6], 0
          %s362 = sshll.u32 %s8, 4
          %s363 = int_to_ptr.vmem [resolvable:$true] %s362
          %365 = dma.vmem_to_smem %s363, 16, [#allocation5], [#allocation6]
        $region28: #{tpu_custom_call.1} parent=11 // pred_fallthru
          _
        // Predicated region
        $region29: #{tpu_custom_call.1} parent=11 // pred_check
          %p366 = pneg %p257
        $region30: #{tpu_custom_call.1} parent=11 // pred_check_branch
          %368 = sbr.rel (%p366) target = $region32
        $region31: #{tpu_custom_call.1} parent=11 // pred_region
          _
        $region32: #{tpu_custom_call.1} parent=11 // pred_fallthru
          _
      $region12: #{tpu_custom_call.1} parent=5 // pred_fallthru
        _
      %p369 = scmp.lt.s32.totalorder %s22, 3
      // Predicated region
      $region33: #{tpu_custom_call.1} parent=5 // pred_check
        %p370 = pneg %p369
      $region34: #{tpu_custom_call.1} parent=5 // pred_check_branch
        %372 = sbr.rel (%p370) target = $region36
      $region35: #{tpu_custom_call.1} parent=5 // pred_region
        // Predicated region
        $region37: #{tpu_custom_call.1} parent=35 // pred_check
          %p373 = pneg %p84
        $region38: #{tpu_custom_call.1} parent=35 // pred_check_branch
          %375 = sbr.rel (%p373) target = $region40
        $region39: #{tpu_custom_call.1} parent=35 // pred_region
          %s376 = smul.u32 8, %s22
          %p377 = scmp.lt.s32.totalorder %s376, 23
          %s378 = scalar_select %p377, %s376, 23
          %s379 = smul.addr %s378, 4
          %s380 = smul.addr %s379, 8
          %s381 = scalar_lea.vmem %s2, %s380
          %s382 = smul.u32 8, %s22
        $region40: #{tpu_custom_call.1} parent=35 // pred_fallthru
          _
        // Predicated region
        $region41: #{tpu_custom_call.1} parent=35 // pred_check
          %p383 = pneg %p110
        $region42: #{tpu_custom_call.1} parent=35 // pred_check_branch
          %385 = sbr.rel (%p383) target = $region44
        $region43: #{tpu_custom_call.1} parent=35 // pred_region
          %s386 = smul.u32 8, %s22
          %p387 = scmp.lt.s32.totalorder %s386, 23
          %s388 = scalar_select %p387, %s386, 23
          %s389 = smul.addr %s388, 8
          %s390 = scalar_lea.vmem %s3, %s389
          %s391 = smul.u32 8, %s22
        $region44: #{tpu_custom_call.1} parent=35 // pred_fallthru
          _
        // Predicated region
        $region45: #{tpu_custom_call.1} parent=35 // pred_check
          %p392 = pneg %p136
        $region46: #{tpu_custom_call.1} parent=35 // pred_check_branch
          %394 = sbr.rel (%p392) target = $region48
        $region47: #{tpu_custom_call.1} parent=35 // pred_region
          %s395 = smul.u32 8, %s22
          %p396 = scmp.lt.s32.totalorder %s395, 23
          %s397 = scalar_select %p396, %s395, 23
          %s398 = smul.addr %s397, 8
          %s399 = scalar_lea.vmem %s4, %s398
          %s400 = smul.u32 8, %s22
        $region48: #{tpu_custom_call.1} parent=35 // pred_fallthru
          _
        // Predicated region
        $region49: #{tpu_custom_call.1} parent=35 // pred_check
          %p401 = pneg %p162
        $region50: #{tpu_custom_call.1} parent=35 // pred_check_branch
          %403 = sbr.rel (%p401) target = $region52
        $region51: #{tpu_custom_call.1} parent=35 // pred_region
          %s404 = smul.u32 8, %s22
          %p405 = scmp.lt.s32.totalorder %s404, 23
          %s406 = scalar_select %p405, %s404, 23
          %s407 = smul.addr %s406, 2
          %s408 = smul.addr %s407, 8
          %s409 = scalar_lea.vmem %s5, %s408
          %s410 = smul.u32 8, %s22
        $region52: #{tpu_custom_call.1} parent=35 // pred_fallthru
          _
        // Predicated region
        $region53: #{tpu_custom_call.1} parent=35 // pred_check
          %p411 = pneg %p188
        $region54: #{tpu_custom_call.1} parent=35 // pred_check_branch
          %413 = sbr.rel (%p411) target = $region56
        $region55: #{tpu_custom_call.1} parent=35 // pred_region
          %s414 = smul.u32 8, %s22
          %p415 = scmp.lt.s32.totalorder %s414, 23
          %s416 = scalar_select %p415, %s414, 23
          %s417 = smul.addr %s416, 2
          %s418 = smul.addr %s417, 8
          %s419 = scalar_lea.vmem %s6, %s418
          %s420 = smul.u32 8, %s22
        $region56: #{tpu_custom_call.1} parent=35 // pred_fallthru
          _
      $region36: #{tpu_custom_call.1} parent=5 // pred_fallthru
        _
      %p421 = scmp.le.s32.totalorder 1, %s22
      %p422 = scmp.lt.s32.totalorder %s22, 4
      %p423 = pnand %p421, %p422
      %p424 = pneg %p423
      // Predicated region
      $region57: #{tpu_custom_call.1} parent=5 // pred_check
        _
      $region58: #{tpu_custom_call.1} parent=5 // pred_check_branch
        %426 = sbr.rel (%p423) target = $region60
      $region59: #{tpu_custom_call.1} parent=5 // pred_region
        %s427 = ssub.s32 %s22, 1
        // Predicated region
        $region61: #{tpu_custom_call.1} parent=59 // pred_check
          %p428 = pneg %p215
        $region62: #{tpu_custom_call.1} parent=59 // pred_check_branch
          %430 = sbr.rel (%p428) target = $region64
        $region63: #{tpu_custom_call.1} parent=59 // pred_region
          %432 = dma.done [#allocation4], 16
        $region64: #{tpu_custom_call.1} parent=59 // pred_fallthru
          _
        // Predicated region
        $region65: #{tpu_custom_call.1} parent=59 // pred_check
          %p433 = pneg %p236
        $region66: #{tpu_custom_call.1} parent=59 // pred_check_branch
          %435 = sbr.rel (%p433) target = $region68
        $region67: #{tpu_custom_call.1} parent=59 // pred_region
          %437 = dma.done [#allocation6], 16
        $region68: #{tpu_custom_call.1} parent=59 // pred_fallthru
          _
        %438 = sfence
        %p439 = pneg %p43
        %p440 = pneg %p40
        %p441 = pneg %p64
        %p442 = pneg %p61
        %s443 = smul.u32 8, %s27
        %p444 = scmp.lt.s32.totalorder %s443, 23
        %s445 = scalar_select %p444, %s443, 23
        %s446 = smul.addr %s445, 4
        %s447 = smul.addr %s446, 8
        %s448 = scalar_lea.vmem %s2, %s447
        %p449 = pneg %p90
        %p450 = pneg %p87
        %s451 = smul.u32 8, %s27
        %p452 = scmp.lt.s32.totalorder %s451, 23
        %s453 = scalar_select %p452, %s451, 23
        %s454 = smul.addr %s453, 8
        %s455 = scalar_lea.vmem %s3, %s454
        %p456 = pneg %p116
        %p457 = pneg %p113
        %s458 = smul.u32 8, %s27
        %p459 = scmp.lt.s32.totalorder %s458, 23
        %s460 = scalar_select %p459, %s458, 23
        %s461 = smul.addr %s460, 8
        %s462 = scalar_lea.vmem %s4, %s461
        %p463 = pneg %p142
        %p464 = pneg %p139
        %s465 = smul.u32 8, %s27
        %p466 = scmp.lt.s32.totalorder %s465, 23
        %s467 = scalar_select %p466, %s465, 23
        %s468 = smul.addr %s467, 2
        %s469 = smul.addr %s468, 8
        %s470 = scalar_lea.vmem %s5, %s469
        %p471 = pneg %p168
        %p472 = pneg %p165
        %s473 = smul.u32 8, %s27
        %p474 = scmp.lt.s32.totalorder %s473, 23
        %s475 = scalar_select %p474, %s473, 23
        %s476 = smul.addr %s475, 2
        %s477 = smul.addr %s476, 8
        %s478 = scalar_lea.vmem %s6, %s477
        %p479 = pneg %p194
        %p480 = pneg %p191
        %p481 = pneg %p215
        %p482 = pneg %p212
        %p483 = pneg %p236
        %p484 = pneg %p233
        %p485 = pneg %p257
        %p486 = pneg %p254
        %p487 = pneg %p278
        %p488 = pneg %p275
        %p489 = pneg %p299
        %p490 = pneg %p296
        %p491 = pneg %p325
        %p492 = pneg %p322
        %s493 = smul.u32 8, %s27
        %p494 = scmp.lt.s32.totalorder %s493, 23
        %s495 = scalar_select %p494, %s493, 23
        %s496 = smul.addr %s495, 4
        %s497 = smul.addr %s496, 8
        %s498 = scalar_lea.vmem %s12, %s497
        %s499 = smul.u32 8, %s27
        %p500 = scmp.lt.s32.totalorder %s499, 23
        %s501 = scalar_select %p500, %s499, 23
        %s502 = smul.addr %s501, 4
        %s503 = smul.addr %s502, 8
        %s504 = scalar_lea.vmem %s2, %s503
        %s505 = smul.u32 8, %s27
        %s506 = smul.u32 8, %s27
        %p507 = scmp.lt.s32.totalorder %s506, 23
        %s508 = scalar_select %p507, %s506, 23
        %s509 = smul.addr %s508, 8
        %s510 = scalar_lea.vmem %s3, %s509
        %s511 = smul.u32 8, %s27
        %s512 = smul.u32 8, %s27
        %p513 = scmp.lt.s32.totalorder %s512, 23
        %s514 = scalar_select %p513, %s512, 23
        %s515 = smul.addr %s514, 8
        %s516 = scalar_lea.vmem %s4, %s515
        %s517 = smul.u32 8, %s27
        %s518 = smul.u32 8, %s27
        %p519 = scmp.lt.s32.totalorder %s518, 23
        %s520 = scalar_select %p519, %s518, 23
        %s521 = smul.addr %s520, 2
        %s522 = smul.addr %s521, 8
        %s523 = scalar_lea.vmem %s5, %s522
        %s524 = smul.u32 8, %s27
        %s525 = smul.u32 8, %s27
        %p526 = scmp.lt.s32.totalorder %s525, 23
        %s527 = scalar_select %p526, %s525, 23
        %s528 = smul.addr %s527, 2
        %s529 = smul.addr %s528, 8
        %s530 = scalar_lea.vmem %s6, %s529
        %s531 = smul.u32 8, %s27
        %s532 = smul.u32 8, %s27
        %p533 = scmp.lt.s32.totalorder %s532, 23
        %s534 = scalar_select %p533, %s532, 23
        %s535 = smul.addr %s534, 4
        %s536 = smul.addr %s535, 8
        %s537 = scalar_lea.vmem %s12, %s536
        %s538 = smul.u32 8, %s27
        %p539 = scmp.eq.s32.totalorder %s27, 0
        // Predicated region
        $region69: #{tpu_custom_call.1} parent=59 // pred_check
          %p540 = pneg %p539
        $region70: #{tpu_custom_call.1} parent=59 // pred_check_branch
          %542 = sbr.rel (%p540) target = $region72
        $region71: #{tpu_custom_call.1} parent=59 // pred_region
          %v543 = vld [vmem:[%s0] sm:$0xff]
          %v544 = vld [vmem:[%s0 + $0x8] sm:$0xff]
          %v545 = vld [vmem:[%s0 + $0x10] sm:$0xff]
          %v546 = vld [vmem:[%s0 + $0x18] sm:$0xff]
          %v547 = vld [vmem:[%s1] sm:$0x1]
          %v548 = vld [vmem:[%s510] sm:$0xff]
          %s549 = sld [smem:[#allocation3]]
          %s550 = sld [smem:[#allocation5]]
          %v551 = vld [vmem:[%s504] sm:$0xff]
          %v552 = vld [vmem:[%s504 + $0x8] sm:$0xff]
          %v553 = vld [vmem:[%s504 + $0x10] sm:$0xff]
          %v554 = vld [vmem:[%s504 + $0x18] sm:$0xff]
          %v555 = vperm.slane %v548, 0
          %v556 = vsub.f32 %v543, %v555
          %v557 = vsub.f32 %v544, %v555
          %v558 = vsub.f32 %v545, %v555
          %v559 = vsub.f32 %v546, %v555
          %v560 = vmul.f32 %v556, %v556
          %v561 = vmul.f32 %v557, %v557
          %v562 = vmul.f32 %v558, %v558
          %v563 = vmul.f32 %v559, %v559
          %vm564 = vcmask 48128
          %v565 = vsel %vm564, %v560, 0.0
          %566 = vadd.xlane.f32.xlu0 %v565
          %v567 = vpop.xlane.xlu0 %566
          %v568 = vsel %vm564, %v561, 0.0
          %569 = vadd.xlane.f32.xlu0 %v568
          %v570 = vpop.xlane.xlu0 %569
          %v571 = vsel %vm564, %v562, 0.0
          %572 = vadd.xlane.f32.xlu0 %v571
          %v573 = vpop.xlane.xlu0 %572
          %v574 = vsel %vm564, %v563, 0.0
          %575 = vadd.xlane.f32.xlu0 %v574
          %v576 = vpop.xlane.xlu0 %575
          %v577 = vmul.f32 %v567, 0.32
          %v578 = vmul.f32 %v570, 0.32
          %v579 = vmul.f32 %v573, 0.32
          %v580 = vmul.f32 %v576, 0.32
          %v581 = vmul.f32 %v547, %v547
          %vm582 = vcmask 40960
          %v583 = vsel %vm582, %v581, 0.0
          %584 = vadd.xlane.f32.xlu0 %v583
          %v585 = vpop.xlane.xlu0 %584
          %v586 = vrot.slane %v585, 4
          %v587 = vadd.f32 %v585, %v586
          %v588 = vrot.slane %v587, 2
          %v589 = vadd.f32 %v587, %v588
          %v590 = vrot.slane %v589, 1
          %v591 = vadd.f32 %v589, %v590
          %s592 = vtos %v591
          %s593 = smul.f32 %s592, 0.5
          %v594 = vstv %s593
          %v595 = vadd.f32 %v577, %v594
          %v596 = vadd.f32 %v578, %v594
          %v597 = vadd.f32 %v579, %v594
          %v598 = vadd.f32 %v580, %v594
          %s599 = sld [smem:[#allocation2]]
          %v600 = vstv %s549
          %v601 = vmul.f32 %v595, %v600
          %v602 = vmul.f32 %v596, %v600
          %v603 = vmul.f32 %v597, %v600
          %v604 = vmul.f32 %v598, %v600
          %v605 = vstv %s599
          %v606 = vsub.f32 %v605, %v601
          %v607 = vsub.f32 %v605, %v602
          %v608 = vsub.f32 %v605, %v603
          %v609 = vsub.f32 %v605, %v604
          %s610 = smul.f32 %s550, 0.5
          %v612 = vperm.slane %v547, 0
          %v614 = vmul.f32 %v551, %v612
          %v615 = vmul.f32 %v552, %v612
          %v616 = vmul.f32 %v553, %v612
          %v617 = vmul.f32 %v554, %v612
          %v618 = vsel %vm564, %v614, 0.0
          %619 = vadd.xlane.f32.xlu0 %v618
          %v620 = vpop.xlane.xlu0 %619
          %v621 = vsel %vm564, %v615, 0.0
          %622 = vadd.xlane.f32.xlu0 %v621
          %v623 = vpop.xlane.xlu0 %622
          %v624 = vsel %vm564, %v616, 0.0
          %625 = vadd.xlane.f32.xlu0 %v624
          %v626 = vpop.xlane.xlu0 %625
          %v627 = vsel %vm564, %v617, 0.0
          %628 = vadd.xlane.f32.xlu0 %v627
          %v629 = vpop.xlane.xlu0 %628
          %v630 = vstv %s610
          %v631 = vmul.f32 %v630, %v620
          %v632 = vmul.f32 %v630, %v623
          %v633 = vmul.f32 %v630, %v626
          %v634 = vmul.f32 %v630, %v629
          %v635 = vadd.f32 %v606, %v631
          %v636 = vadd.f32 %v607, %v632
          %v637 = vadd.f32 %v608, %v633
          %v638 = vadd.f32 %v609, %v634
          %v639 = vmul.f32 %v547, %v600
          %v641 = vperm.slane %v639, 0
          %v643 = vsub.f32 %v543, %v641
          %v644 = vsub.f32 %v544, %v641
          %v645 = vsub.f32 %v545, %v641
          %v646 = vsub.f32 %v546, %v641
          %v647 = vmul.f32 %v630, %v551
          %v648 = vmul.f32 %v630, %v552
          %v649 = vmul.f32 %v630, %v553
          %v650 = vmul.f32 %v630, %v554
          %v651 = vadd.f32 %v643, %v647
          %v652 = vadd.f32 %v644, %v648
          %v653 = vadd.f32 %v645, %v649
          %v654 = vadd.f32 %v646, %v650
          %vm655 = vcmask 7168
          %656 = vst.msk [vmem:[%s10] sm:$0xff] %vm655, %v635
          %657 = vst.msk [vmem:[%s10 + $0x8] sm:$0xff] %vm655, %v636
          %658 = vst.msk [vmem:[%s10 + $0x10] sm:$0xff] %vm655, %v637
          %659 = vst.msk [vmem:[%s10 + $0x18] sm:$0xff] %vm655, %v638
          %660 = vst.msk [vmem:[%s11] sm:$0xff] %vm564, %v651
          %661 = vst.msk [vmem:[%s11 + $0x8] sm:$0xff] %vm564, %v652
          %662 = vst.msk [vmem:[%s11 + $0x10] sm:$0xff] %vm564, %v653
          %663 = vst.msk [vmem:[%s11 + $0x18] sm:$0xff] %vm564, %v654
          %664 = vst.msk [vmem:[%s537] sm:$0xff] %vm564, %v651
          %665 = vst.msk [vmem:[%s537 + $0x8] sm:$0xff] %vm564, %v652
          %666 = vst.msk [vmem:[%s537 + $0x10] sm:$0xff] %vm564, %v653
          %667 = vst.msk [vmem:[%s537 + $0x18] sm:$0xff] %vm564, %v654
        $region72: #{tpu_custom_call.1} parent=59 // pred_fallthru
          _
        %p668 = scmp.gt.s32.totalorder %s27, 0
        // Predicated region
        $region73: #{tpu_custom_call.1} parent=59 // pred_check
          %p669 = pneg %p668
        $region74: #{tpu_custom_call.1} parent=59 // pred_check_branch
          %671 = sbr.rel (%p669) target = $region76
        $region75: #{tpu_custom_call.1} parent=59 // pred_region
          %s672 = smul.u32 %s27, 8
          %s673 = sld [smem:[#allocation3 + %s672]]
          %s674 = sld [smem:[#allocation5 + %s672]]
          %v675 = vld [vmem:[%s504] sm:$0xff]
          %v676 = vld [vmem:[%s504 + $0x8] sm:$0xff]
          %v677 = vld [vmem:[%s504 + $0x10] sm:$0xff]
          %v678 = vld [vmem:[%s504 + $0x18] sm:$0xff]
          %v679 = vld [vmem:[%s510] sm:$0xff]
          %v680 = vld [vmem:[%s11] sm:$0xff]
          %v681 = vld [vmem:[%s11 + $0x8] sm:$0xff]
          %v682 = vld [vmem:[%s11 + $0x10] sm:$0xff]
          %v683 = vld [vmem:[%s11 + $0x18] sm:$0xff]
          %v684 = vld [vmem:[%s10] sm:$0xff]
          %v685 = vld [vmem:[%s10 + $0x8] sm:$0xff]
          %v686 = vld [vmem:[%s10 + $0x10] sm:$0xff]
          %v687 = vld [vmem:[%s10 + $0x18] sm:$0xff]
          %v688 = vld [vmem:[%s516] sm:$0x3f]
          %v689 = vperm.slane %v679, 1
          %vm690 = vcmask 48128
          %v692 = vsel %vm690, %v680, 0
          %v695 = vsel %vm690, %v681, 0
          %v698 = vsel %vm690, %v682, 0
          %v701 = vsel %vm690, %v683, 0
          %vm703 = vcmask 1045504
          %v705 = vsel %vm703, %v688, 0
          %707 = vmatpush.msra.mxu0 0.0
          %708 = vmatpush.msra.mxu0 0.0
          %709 = vmatpush.msra.mxu0 0.0
          %710 = vmatpush.msra.mxu0 0.0
          %711 = vmatpush.msra.mxu0 0.0
          %712 = vmatpush.msra.mxu0 0.0
          %713 = vmatpush.msra.mxu0 0.0
          %714 = vmatpush.msra.mxu0 0.0
          %715 = vmatpush.msra.mxu0 0.0
          %716 = vmatpush.msra.mxu0 0.0
          %717 = vmatpush.msra.mxu0 0.0
          %718 = vmatpush.msra.mxu0 0.0
          %719 = vmatpush.msra.mxu0 0.0
          %720 = vmatpush.msra.mxu0 0.0
          %721 = vmatpush.msra.mxu0 0.0
          %722 = vmatpush.msra.mxu0 %v705
          %723 = vmatmul.f32.gmra.mxu0 %v692
          %v724 = vpop.f32.mrf.mxu0
          %v725 = vadd.f32 %v689, %v724
          %726 = vmatmul.f32.gmra.mxu0 %v695
          %v727 = vpop.f32.mrf.mxu0
          %v728 = vadd.f32 %v689, %v727
          %729 = vmatmul.f32.gmra.mxu0 %v698
          %v730 = vpop.f32.mrf.mxu0
          %v731 = vadd.f32 %v689, %v730
          %732 = vmatmul.f32.gmra.mxu0 %v701
          %v733 = vpop.f32.mrf.mxu0
          %v734 = vadd.f32 %v689, %v733
          %735 = vdwg.mxu0
          %vm736 = vcmask 130048
          %v737 = vsel %vm736, %v725, 0.0
          %v738 = vsel %vm736, %v728, 0.0
          %v739 = vadd.f32 %v737, %v738
          %v740 = vsel %vm736, %v731, 0.0
          %v741 = vadd.f32 %v739, %v740
          %v742 = vsel %vm736, %v734, 0.0
          %v743 = vadd.f32 %v741, %v742
          %v744 = vrot.slane %v743, 4
          %v745 = vadd.f32 %v743, %v744
          %v746 = vrot.slane %v745, 2
          %v747 = vadd.f32 %v745, %v746
          %v748 = vrot.slane %v747, 1
          %v749 = vadd.f32 %v747, %v748
          %v750 = vrcp.pop 32.0
          %v751 = vmul.f32 32.0, %v750
          %v752 = vsub.f32 1.0, %v751
          %v753 = vmul.f32 %v750, %v752
          %v754 = vadd.f32 %v750, %v753
          %vm755 = vweird.f32 %v750
          %v756 = vsel %vm755, %v750, %v754
          %v757 = vmul.f32 %v749, %v756
          %v758 = vmul.f32 %v725, %v725
          %v759 = vmul.f32 %v728, %v728
          %v760 = vmul.f32 %v731, %v731
          %v761 = vmul.f32 %v734, %v734
          %v762 = vsel %vm736, %v758, 0.0
          %v763 = vsel %vm736, %v759, 0.0
          %v764 = vadd.f32 %v762, %v763
          %v765 = vsel %vm736, %v760, 0.0
          %v766 = vadd.f32 %v764, %v765
          %v767 = vsel %vm736, %v761, 0.0
          %v768 = vadd.f32 %v766, %v767
          %v769 = vrot.slane %v768, 4
          %v770 = vadd.f32 %v768, %v769
          %v771 = vrot.slane %v770, 2
          %v772 = vadd.f32 %v770, %v771
          %v773 = vrot.slane %v772, 1
          %v774 = vadd.f32 %v772, %v773
          %v775 = vmul.f32 %v774, %v756
          %v776 = vmul.f32 %v757, %v757
          %v777 = vsub.f32 %v775, %v776
          %v778 = vsub.f32 %v725, %v757
          %v779 = vsub.f32 %v728, %v757
          %v780 = vsub.f32 %v731, %v757
          %v781 = vsub.f32 %v734, %v757
          %v782 = vadd.f32 %v777, 1e-05
          %v783 = vrsqrt.pop %v782
          %v784 = vmul.f32 %v783, %v782
          %v785 = vmul.f32 %v784, %v783
          %v786 = vmul.f32 0.5, %v785
          %v787 = vsub.f32 1.5, %v786
          %v788 = vmul.f32 %v783, %v787
          %vm789 = vweird.f32 %v782
          %vm790 = vweird.f32 %v783
          %vm791 = vmor %vm789, %vm790
          %v792 = vsel %vm791, %v783, %v788
          %v793 = vmul.f32 %v778, %v792
          %v794 = vmul.f32 %v779, %v792
          %v795 = vmul.f32 %v780, %v792
          %v796 = vmul.f32 %v781, %v792
          %v797 = vperm.slane %v679, 2
          %v798 = vmul.f32 %v793, %v797
          %v799 = vmul.f32 %v794, %v797
          %v800 = vmul.f32 %v795, %v797
          %v801 = vmul.f32 %v796, %v797
          %v802 = vperm.slane %v679, 3
          %v803 = vadd.f32 %v798, %v802
          %v804 = vadd.f32 %v799, %v802
          %v805 = vadd.f32 %v800, %v802
          %v806 = vadd.f32 %v801, %v802
          %v807 = vmax.f32 %v803, 0.0
          %v808 = vmax.f32 %v804, 0.0
          %v809 = vmax.f32 %v805, 0.0
          %v810 = vmax.f32 %v806, 0.0
          %v811 = vld [vmem:[%s523] sm:$0xff]
          %v812 = vld [vmem:[%s523 + $0x8] sm:$0xff]
          %v813 = vperm.slane %v679, 4
          %v815 = vsel %vm736, %v807, 0
          %v818 = vsel %vm736, %v808, 0
          %v821 = vsel %vm736, %v809, 0
          %v824 = vsel %vm736, %v810, 0
          %826 = vmatpush.msra.mxu0 0.0
          %827 = vmatpush.msra.mxu0 0.0
          %828 = vmatpush.msra.mxu0 0.0
          %829 = vmatpush.msra.mxu0 0.0
          %830 = vmatpush.msra.mxu0 0.0
          %831 = vmatpush.msra.mxu0 0.0
          %832 = vmatpush.msra.mxu0 0.0
          %833 = vmatpush.msra.mxu0 0.0
          %834 = vmatpush.msra.mxu0 0.0
          %835 = vmatpush.msra.mxu0 0.0
          %836 = vmatpush.msra.mxu0 0.0
          %837 = vmatpush.msra.mxu0 0.0
          %838 = vmatpush.msra.mxu0 0.0
          %839 = vmatpush.msra.mxu0 0.0
          %840 = vmatpush.msra.mxu0 %v812
          %841 = vmatpush.msra.mxu0 %v811
          %842 = vmatmul.f32.gmra.mxu0 %v815
          %v843 = vpop.f32.mrf.mxu0
          %v844 = vadd.f32 %v813, %v843
          %845 = vmatmul.f32.gmra.mxu0 %v818
          %v846 = vpop.f32.mrf.mxu0
          %v847 = vadd.f32 %v813, %v846
          %848 = vmatmul.f32.gmra.mxu0 %v821
          %v849 = vpop.f32.mrf.mxu0
          %v850 = vadd.f32 %v813, %v849
          %851 = vmatmul.f32.gmra.mxu0 %v824
          %v852 = vpop.f32.mrf.mxu0
          %v853 = vadd.f32 %v813, %v852
          %854 = vdwg.mxu0
          %v855 = vsel %vm736, %v844, 0.0
          %v856 = vsel %vm736, %v847, 0.0
          %v857 = vadd.f32 %v855, %v856
          %v858 = vsel %vm736, %v850, 0.0
          %v859 = vadd.f32 %v857, %v858
          %v860 = vsel %vm736, %v853, 0.0
          %v861 = vadd.f32 %v859, %v860
          %v862 = vrot.slane %v861, 4
          %v863 = vadd.f32 %v861, %v862
          %v864 = vrot.slane %v863, 2
          %v865 = vadd.f32 %v863, %v864
          %v866 = vrot.slane %v865, 1
          %v867 = vadd.f32 %v865, %v866
          %v868 = vmul.f32 %v867, %v756
          %v869 = vmul.f32 %v844, %v844
          %v870 = vmul.f32 %v847, %v847
          %v871 = vmul.f32 %v850, %v850
          %v872 = vmul.f32 %v853, %v853
          %v873 = vsel %vm736, %v869, 0.0
          %v874 = vsel %vm736, %v870, 0.0
          %v875 = vadd.f32 %v873, %v874
          %v876 = vsel %vm736, %v871, 0.0
          %v877 = vadd.f32 %v875, %v876
          %v878 = vsel %vm736, %v872, 0.0
          %v879 = vadd.f32 %v877, %v878
          %v880 = vrot.slane %v879, 4
          %v881 = vadd.f32 %v879, %v880
          %v882 = vrot.slane %v881, 2
          %v883 = vadd.f32 %v881, %v882
          %v884 = vrot.slane %v883, 1
          %v885 = vadd.f32 %v883, %v884
          %v886 = vmul.f32 %v885, %v756
          %v887 = vmul.f32 %v868, %v868
          %v888 = vsub.f32 %v886, %v887
          %v889 = vsub.f32 %v844, %v868
          %v890 = vsub.f32 %v847, %v868
          %v891 = vsub.f32 %v850, %v868
          %v892 = vsub.f32 %v853, %v868
          %v893 = vadd.f32 %v888, 1e-05
          %v894 = vrsqrt.pop %v893
          %v895 = vmul.f32 %v894, %v893
          %v896 = vmul.f32 %v895, %v894
          %v897 = vmul.f32 0.5, %v896
          %v898 = vsub.f32 1.5, %v897
          %v899 = vmul.f32 %v894, %v898
          %vm900 = vweird.f32 %v893
          %vm901 = vweird.f32 %v894
          %vm902 = vmor %vm900, %vm901
          %v903 = vsel %vm902, %v894, %v899
          %v904 = vmul.f32 %v889, %v903
          %v905 = vmul.f32 %v890, %v903
          %v906 = vmul.f32 %v891, %v903
          %v907 = vmul.f32 %v892, %v903
          %v908 = vperm.slane %v679, 5
          %v909 = vmul.f32 %v904, %v908
          %v910 = vmul.f32 %v905, %v908
          %v911 = vmul.f32 %v906, %v908
          %v912 = vmul.f32 %v907, %v908
          %v913 = vperm.slane %v679, 6
          %v914 = vadd.f32 %v909, %v913
          %v915 = vadd.f32 %v910, %v913
          %v916 = vadd.f32 %v911, %v913
          %v917 = vadd.f32 %v912, %v913
          %v918 = vmax.f32 %v914, 0.0
          %v919 = vmax.f32 %v915, 0.0
          %v920 = vmax.f32 %v916, 0.0
          %v921 = vmax.f32 %v917, 0.0
          %v922 = vld [vmem:[%s530] sm:$0xff]
          %v923 = vld [vmem:[%s530 + $0x8] sm:$0xff]
          %v924 = vperm.slane %v679, 7
          %v926 = vsel %vm736, %v918, 0
          %v929 = vsel %vm736, %v919, 0
          %v932 = vsel %vm736, %v920, 0
          %v935 = vsel %vm736, %v921, 0
          %937 = vmatpush.msra.mxu0 0.0
          %938 = vmatpush.msra.mxu0 0.0
          %939 = vmatpush.msra.mxu0 0.0
          %940 = vmatpush.msra.mxu0 0.0
          %941 = vmatpush.msra.mxu0 0.0
          %942 = vmatpush.msra.mxu0 0.0
          %943 = vmatpush.msra.mxu0 0.0
          %944 = vmatpush.msra.mxu0 0.0
          %945 = vmatpush.msra.mxu0 0.0
          %946 = vmatpush.msra.mxu0 0.0
          %947 = vmatpush.msra.mxu0 0.0
          %948 = vmatpush.msra.mxu0 0.0
          %949 = vmatpush.msra.mxu0 0.0
          %950 = vmatpush.msra.mxu0 0.0
          %951 = vmatpush.msra.mxu0 %v923
          %952 = vmatpush.msra.mxu0 %v922
          %953 = vmatmul.f32.gmra.mxu0 %v926
          %v954 = vpop.f32.mrf.mxu0
          %v955 = vadd.f32 %v924, %v954
          %956 = vmatmul.f32.gmra.mxu0 %v929
          %v957 = vpop.f32.mrf.mxu0
          %v958 = vadd.f32 %v924, %v957
          %959 = vmatmul.f32.gmra.mxu0 %v932
          %v960 = vpop.f32.mrf.mxu0
          %v961 = vadd.f32 %v924, %v960
          %962 = vmatmul.f32.gmra.mxu0 %v935
          %v963 = vpop.f32.mrf.mxu0
          %v964 = vadd.f32 %v924, %v963
          %965 = vdwg.mxu0
          %v966 = vperm.slane %v679, 0
          %v967 = vsub.f32 %v680, %v966
          %v968 = vsub.f32 %v681, %v966
          %v969 = vsub.f32 %v682, %v966
          %v970 = vsub.f32 %v683, %v966
          %v971 = vmul.f32 %v967, %v967
          %v972 = vmul.f32 %v968, %v968
          %v973 = vmul.f32 %v969, %v969
          %v974 = vmul.f32 %v970, %v970
          %v975 = vsel %vm690, %v971, 0.0
          %976 = vadd.xlane.f32.xlu0 %v975
          %v977 = vpop.xlane.xlu0 %976
          %v978 = vsel %vm690, %v972, 0.0
          %979 = vadd.xlane.f32.xlu0 %v978
          %v980 = vpop.xlane.xlu0 %979
          %v981 = vsel %vm690, %v973, 0.0
          %982 = vadd.xlane.f32.xlu0 %v981
          %v983 = vpop.xlane.xlu0 %982
          %v984 = vsel %vm690, %v974, 0.0
          %985 = vadd.xlane.f32.xlu0 %v984
          %v986 = vpop.xlane.xlu0 %985
          %v987 = vmul.f32 %v977, 0.32
          %v988 = vmul.f32 %v980, 0.32
          %v989 = vmul.f32 %v983, 0.32
          %v990 = vmul.f32 %v986, 0.32
          %v991 = vmul.f32 %v955, %v955
          %v992 = vmul.f32 %v958, %v958
          %v993 = vmul.f32 %v961, %v961
          %v994 = vmul.f32 %v964, %v964
          %v995 = vsel %vm690, %v991, 0.0
          %996 = vadd.xlane.f32.xlu0 %v995
          %v997 = vpop.xlane.xlu0 %996
          %v998 = vsel %vm690, %v992, 0.0
          %999 = vadd.xlane.f32.xlu0 %v998
          %v1000 = vpop.xlane.xlu0 %999
          %v1001 = vsel %vm690, %v993, 0.0
          %1002 = vadd.xlane.f32.xlu0 %v1001
          %v1003 = vpop.xlane.xlu0 %1002
          %v1004 = vsel %vm690, %v994, 0.0
          %1005 = vadd.xlane.f32.xlu0 %v1004
          %v1006 = vpop.xlane.xlu0 %1005
          %v1007 = vmul.f32 %v997, 0.5
          %v1008 = vmul.f32 %v1000, 0.5
          %v1009 = vmul.f32 %v1003, 0.5
          %v1010 = vmul.f32 %v1006, 0.5
          %v1011 = vadd.f32 %v987, %v1007
          %v1012 = vadd.f32 %v988, %v1008
          %v1013 = vadd.f32 %v989, %v1009
          %v1014 = vadd.f32 %v990, %v1010
          %v1015 = vstv %s673
          %v1016 = vmul.f32 %v1011, %v1015
          %v1017 = vmul.f32 %v1012, %v1015
          %v1018 = vmul.f32 %v1013, %v1015
          %v1019 = vmul.f32 %v1014, %v1015
          %v1020 = vsub.f32 %v684, %v1016
          %v1021 = vsub.f32 %v685, %v1017
          %v1022 = vsub.f32 %v686, %v1018
          %v1023 = vsub.f32 %v687, %v1019
          %s1024 = smul.f32 %s674, 0.5
          %v1025 = vmul.f32 %v955, %v675
          %v1026 = vmul.f32 %v958, %v676
          %v1027 = vmul.f32 %v961, %v677
          %v1028 = vmul.f32 %v964, %v678
          %v1029 = vsel %vm690, %v1025, 0.0
          %1030 = vadd.xlane.f32.xlu0 %v1029
          %v1031 = vpop.xlane.xlu0 %1030
          %v1032 = vsel %vm690, %v1026, 0.0
          %1033 = vadd.xlane.f32.xlu0 %v1032
          %v1034 = vpop.xlane.xlu0 %1033
          %v1035 = vsel %vm690, %v1027, 0.0
          %1036 = vadd.xlane.f32.xlu0 %v1035
          %v1037 = vpop.xlane.xlu0 %1036
          %v1038 = vsel %vm690, %v1028, 0.0
          %1039 = vadd.xlane.f32.xlu0 %v1038
          %v1040 = vpop.xlane.xlu0 %1039
          %v1041 = vstv %s1024
          %v1042 = vmul.f32 %v1041, %v1031
          %v1043 = vmul.f32 %v1041, %v1034
          %v1044 = vmul.f32 %v1041, %v1037
          %v1045 = vmul.f32 %v1041, %v1040
          %v1046 = vadd.f32 %v1020, %v1042
          %v1047 = vadd.f32 %v1021, %v1043
          %v1048 = vadd.f32 %v1022, %v1044
          %v1049 = vadd.f32 %v1023, %v1045
          %v1050 = vmul.f32 %v955, %v1015
          %v1051 = vmul.f32 %v958, %v1015
          %v1052 = vmul.f32 %v961, %v1015
          %v1053 = vmul.f32 %v964, %v1015
          %v1054 = vsub.f32 %v680, %v1050
          %v1055 = vsub.f32 %v681, %v1051
          %v1056 = vsub.f32 %v682, %v1052
          %v1057 = vsub.f32 %v683, %v1053
          %v1058 = vmul.f32 %v1041, %v675
          %v1059 = vmul.f32 %v1041, %v676
          %v1060 = vmul.f32 %v1041, %v677
          %v1061 = vmul.f32 %v1041, %v678
          %v1062 = vadd.f32 %v1054, %v1058
          %v1063 = vadd.f32 %v1055, %v1059
          %v1064 = vadd.f32 %v1056, %v1060
          %v1065 = vadd.f32 %v1057, %v1061
          %vm1066 = vcmask 7168
          %1067 = vst.msk [vmem:[%s10] sm:$0xff] %vm1066, %v1046
          %1068 = vst.msk [vmem:[%s10 + $0x8] sm:$0xff] %vm1066, %v1047
          %1069 = vst.msk [vmem:[%s10 + $0x10] sm:$0xff] %vm1066, %v1048
          %1070 = vst.msk [vmem:[%s10 + $0x18] sm:$0xff] %vm1066, %v1049
          %1071 = vst.msk [vmem:[%s11] sm:$0xff] %vm690, %v1062
          %1072 = vst.msk [vmem:[%s11 + $0x8] sm:$0xff] %vm690, %v1063
          %1073 = vst.msk [vmem:[%s11 + $0x10] sm:$0xff] %vm690, %v1064
          %1074 = vst.msk [vmem:[%s11 + $0x18] sm:$0xff] %vm690, %v1065
          %1075 = vst.msk [vmem:[%s537] sm:$0xff] %vm690, %v1062
          %1076 = vst.msk [vmem:[%s537 + $0x8] sm:$0xff] %vm690, %v1063
          %1077 = vst.msk [vmem:[%s537 + $0x10] sm:$0xff] %vm690, %v1064
          %1078 = vst.msk [vmem:[%s537 + $0x18] sm:$0xff] %vm690, %v1065
        $region76: #{tpu_custom_call.1} parent=59 // pred_fallthru
          _
        %s1079 = smul.u32 %s27, 8
        %s1080 = sadd.s32 %s1079, 1
        %s1081 = sld [smem:[#allocation3 + %s1080]]
        %s1082 = sld [smem:[#allocation5 + %s1080]]
        %s1083 = scalar_lea.vmem %s504, 32
        %v1084 = vld [vmem:[%s1083] sm:$0xff]
        %v1085 = vld [vmem:[%s1083 + $0x8] sm:$0xff]
        %v1086 = vld [vmem:[%s1083 + $0x10] sm:$0xff]
        %v1087 = vld [vmem:[%s1083 + $0x18] sm:$0xff]
        %s1088 = scalar_lea.vmem %s510, 8
        %v1089 = vld [vmem:[%s1088] sm:$0xff]
        %v1090 = vld [vmem:[%s11] sm:$0xff]
        %v1091 = vld [vmem:[%s11 + $0x8] sm:$0xff]
        %v1092 = vld [vmem:[%s11 + $0x10] sm:$0xff]
        %v1093 = vld [vmem:[%s11 + $0x18] sm:$0xff]
        %v1094 = vld [vmem:[%s10] sm:$0xff]
        %v1095 = vld [vmem:[%s10 + $0x8] sm:$0xff]
        %v1096 = vld [vmem:[%s10 + $0x10] sm:$0xff]
        %v1097 = vld [vmem:[%s10 + $0x18] sm:$0xff]
        %s1098 = scalar_lea.vmem %s516, 8
        %v1099 = vld [vmem:[%s1098] sm:$0x3f]
        %v1100 = vperm.slane %v1089, 1
        %vm1101 = vcmask 48128
        %v1103 = vsel %vm1101, %v1090, 0
        %v1106 = vsel %vm1101, %v1091, 0
        %v1109 = vsel %vm1101, %v1092, 0
        %v1112 = vsel %vm1101, %v1093, 0
        %vm1114 = vcmask 1045504
        %v1116 = vsel %vm1114, %v1099, 0
        %1118 = vmatpush.msra.mxu0 0.0
        %1119 = vmatpush.msra.mxu0 0.0
        %1120 = vmatpush.msra.mxu0 0.0
        %1121 = vmatpush.msra.mxu0 0.0
        %1122 = vmatpush.msra.mxu0 0.0
        %1123 = vmatpush.msra.mxu0 0.0
        %1124 = vmatpush.msra.mxu0 0.0
        %1125 = vmatpush.msra.mxu0 0.0
        %1126 = vmatpush.msra.mxu0 0.0
        %1127 = vmatpush.msra.mxu0 0.0
        %1128 = vmatpush.msra.mxu0 0.0
        %1129 = vmatpush.msra.mxu0 0.0
        %1130 = vmatpush.msra.mxu0 0.0
        %1131 = vmatpush.msra.mxu0 0.0
        %1132 = vmatpush.msra.mxu0 0.0
        %1133 = vmatpush.msra.mxu0 %v1116
        %1134 = vmatmul.f32.gmra.mxu0 %v1103
        %v1135 = vpop.f32.mrf.mxu0
        %v1136 = vadd.f32 %v1100, %v1135
        %1137 = vmatmul.f32.gmra.mxu0 %v1106
        %v1138 = vpop.f32.mrf.mxu0
        %v1139 = vadd.f32 %v1100, %v1138
        %1140 = vmatmul.f32.gmra.mxu0 %v1109
        %v1141 = vpop.f32.mrf.mxu0
        %v1142 = vadd.f32 %v1100, %v1141
        %1143 = vmatmul.f32.gmra.mxu0 %v1112
        %v1144 = vpop.f32.mrf.mxu0
        %v1145 = vadd.f32 %v1100, %v1144
        %1146 = vdwg.mxu0
        %vm1147 = vcmask 130048
        %v1148 = vsel %vm1147, %v1136, 0.0
        %v1149 = vsel %vm1147, %v1139, 0.0
        %v1150 = vadd.f32 %v1148, %v1149
        %v1151 = vsel %vm1147, %v1142, 0.0
        %v1152 = vadd.f32 %v1150, %v1151
        %v1153 = vsel %vm1147, %v1145, 0.0
        %v1154 = vadd.f32 %v1152, %v1153
        %v1155 = vrot.slane %v1154, 4
        %v1156 = vadd.f32 %v1154, %v1155
        %v1157 = vrot.slane %v1156, 2
        %v1158 = vadd.f32 %v1156, %v1157
        %v1159 = vrot.slane %v1158, 1
        %v1160 = vadd.f32 %v1158, %v1159
        %v1161 = vrcp.pop 32.0
        %v1162 = vmul.f32 32.0, %v1161
        %v1163 = vsub.f32 1.0, %v1162
        %v1164 = vmul.f32 %v1161, %v1163
        %v1165 = vadd.f32 %v1161, %v1164
        %vm1166 = vweird.f32 %v1161
        %v1167 = vsel %vm1166, %v1161, %v1165
        %v1168 = vmul.f32 %v1160, %v1167
        %v1169 = vmul.f32 %v1136, %v1136
        %v1170 = vmul.f32 %v1139, %v1139
        %v1171 = vmul.f32 %v1142, %v1142
        %v1172 = vmul.f32 %v1145, %v1145
        %v1173 = vsel %vm1147, %v1169, 0.0
        %v1174 = vsel %vm1147, %v1170, 0.0
        %v1175 = vadd.f32 %v1173, %v1174
        %v1176 = vsel %vm1147, %v1171, 0.0
        %v1177 = vadd.f32 %v1175, %v1176
        %v1178 = vsel %vm1147, %v1172, 0.0
        %v1179 = vadd.f32 %v1177, %v1178
        %v1180 = vrot.slane %v1179, 4
        %v1181 = vadd.f32 %v1179, %v1180
        %v1182 = vrot.slane %v1181, 2
        %v1183 = vadd.f32 %v1181, %v1182
        %v1184 = vrot.slane %v1183, 1
        %v1185 = vadd.f32 %v1183, %v1184
        %v1186 = vmul.f32 %v1185, %v1167
        %v1187 = vmul.f32 %v1168, %v1168
        %v1188 = vsub.f32 %v1186, %v1187
        %v1189 = vsub.f32 %v1136, %v1168
        %v1190 = vsub.f32 %v1139, %v1168
        %v1191 = vsub.f32 %v1142, %v1168
        %v1192 = vsub.f32 %v1145, %v1168
        %v1193 = vadd.f32 %v1188, 1e-05
        %v1194 = vrsqrt.pop %v1193
        %v1195 = vmul.f32 %v1194, %v1193
        %v1196 = vmul.f32 %v1195, %v1194
        %v1197 = vmul.f32 0.5, %v1196
        %v1198 = vsub.f32 1.5, %v1197
        %v1199 = vmul.f32 %v1194, %v1198
        %vm1200 = vweird.f32 %v1193
        %vm1201 = vweird.f32 %v1194
        %vm1202 = vmor %vm1200, %vm1201
        %v1203 = vsel %vm1202, %v1194, %v1199
        %v1204 = vmul.f32 %v1189, %v1203
        %v1205 = vmul.f32 %v1190, %v1203
        %v1206 = vmul.f32 %v1191, %v1203
        %v1207 = vmul.f32 %v1192, %v1203
        %v1208 = vperm.slane %v1089, 2
        %v1209 = vmul.f32 %v1204, %v1208
        %v1210 = vmul.f32 %v1205, %v1208
        %v1211 = vmul.f32 %v1206, %v1208
        %v1212 = vmul.f32 %v1207, %v1208
        %v1213 = vperm.slane %v1089, 3
        %v1214 = vadd.f32 %v1209, %v1213
        %v1215 = vadd.f32 %v1210, %v1213
        %v1216 = vadd.f32 %v1211, %v1213
        %v1217 = vadd.f32 %v1212, %v1213
        %v1218 = vmax.f32 %v1214, 0.0
        %v1219 = vmax.f32 %v1215, 0.0
        %v1220 = vmax.f32 %v1216, 0.0
        %v1221 = vmax.f32 %v1217, 0.0
        %s1222 = scalar_lea.vmem %s523, 16
        %v1223 = vld [vmem:[%s1222] sm:$0xff]
        %v1224 = vld [vmem:[%s1222 + $0x8] sm:$0xff]
        %v1225 = vperm.slane %v1089, 4
        %v1227 = vsel %vm1147, %v1218, 0
        %v1230 = vsel %vm1147, %v1219, 0
        %v1233 = vsel %vm1147, %v1220, 0
        %v1236 = vsel %vm1147, %v1221, 0
        %1238 = vmatpush.msra.mxu0 0.0
        %1239 = vmatpush.msra.mxu0 0.0
        %1240 = vmatpush.msra.mxu0 0.0
        %1241 = vmatpush.msra.mxu0 0.0
        %1242 = vmatpush.msra.mxu0 0.0
        %1243 = vmatpush.msra.mxu0 0.0
        %1244 = vmatpush.msra.mxu0 0.0
        %1245 = vmatpush.msra.mxu0 0.0
        %1246 = vmatpush.msra.mxu0 0.0
        %1247 = vmatpush.msra.mxu0 0.0
        %1248 = vmatpush.msra.mxu0 0.0
        %1249 = vmatpush.msra.mxu0 0.0
        %1250 = vmatpush.msra.mxu0 0.0
        %1251 = vmatpush.msra.mxu0 0.0
        %1252 = vmatpush.msra.mxu0 %v1224
        %1253 = vmatpush.msra.mxu0 %v1223
        %1254 = vmatmul.f32.gmra.mxu0 %v1227
        %v1255 = vpop.f32.mrf.mxu0
        %v1256 = vadd.f32 %v1225, %v1255
        %1257 = vmatmul.f32.gmra.mxu0 %v1230
        %v1258 = vpop.f32.mrf.mxu0
        %v1259 = vadd.f32 %v1225, %v1258
        %1260 = vmatmul.f32.gmra.mxu0 %v1233
        %v1261 = vpop.f32.mrf.mxu0
        %v1262 = vadd.f32 %v1225, %v1261
        %1263 = vmatmul.f32.gmra.mxu0 %v1236
        %v1264 = vpop.f32.mrf.mxu0
        %v1265 = vadd.f32 %v1225, %v1264
        %1266 = vdwg.mxu0
        %v1267 = vsel %vm1147, %v1256, 0.0
        %v1268 = vsel %vm1147, %v1259, 0.0
        %v1269 = vadd.f32 %v1267, %v1268
        %v1270 = vsel %vm1147, %v1262, 0.0
        %v1271 = vadd.f32 %v1269, %v1270
        %v1272 = vsel %vm1147, %v1265, 0.0
        %v1273 = vadd.f32 %v1271, %v1272
        %v1274 = vrot.slane %v1273, 4
        %v1275 = vadd.f32 %v1273, %v1274
        %v1276 = vrot.slane %v1275, 2
        %v1277 = vadd.f32 %v1275, %v1276
        %v1278 = vrot.slane %v1277, 1
        %v1279 = vadd.f32 %v1277, %v1278
        %v1280 = vmul.f32 %v1279, %v1167
        %v1281 = vmul.f32 %v1256, %v1256
        %v1282 = vmul.f32 %v1259, %v1259
        %v1283 = vmul.f32 %v1262, %v1262
        %v1284 = vmul.f32 %v1265, %v1265
        %v1285 = vsel %vm1147, %v1281, 0.0
        %v1286 = vsel %vm1147, %v1282, 0.0
        %v1287 = vadd.f32 %v1285, %v1286
        %v1288 = vsel %vm1147, %v1283, 0.0
        %v1289 = vadd.f32 %v1287, %v1288
        %v1290 = vsel %vm1147, %v1284, 0.0
        %v1291 = vadd.f32 %v1289, %v1290
        %v1292 = vrot.slane %v1291, 4
        %v1293 = vadd.f32 %v1291, %v1292
        %v1294 = vrot.slane %v1293, 2
        %v1295 = vadd.f32 %v1293, %v1294
        %v1296 = vrot.slane %v1295, 1
        %v1297 = vadd.f32 %v1295, %v1296
        %v1298 = vmul.f32 %v1297, %v1167
        %v1299 = vmul.f32 %v1280, %v1280
        %v1300 = vsub.f32 %v1298, %v1299
        %v1301 = vsub.f32 %v1256, %v1280
        %v1302 = vsub.f32 %v1259, %v1280
        %v1303 = vsub.f32 %v1262, %v1280
        %v1304 = vsub.f32 %v1265, %v1280
        %v1305 = vadd.f32 %v1300, 1e-05
        %v1306 = vrsqrt.pop %v1305
        %v1307 = vmul.f32 %v1306, %v1305
        %v1308 = vmul.f32 %v1307, %v1306
        %v1309 = vmul.f32 0.5, %v1308
        %v1310 = vsub.f32 1.5, %v1309
        %v1311 = vmul.f32 %v1306, %v1310
        %vm1312 = vweird.f32 %v1305
        %vm1313 = vweird.f32 %v1306
        %vm1314 = vmor %vm1312, %vm1313
        %v1315 = vsel %vm1314, %v1306, %v1311
        %v1316 = vmul.f32 %v1301, %v1315
        %v1317 = vmul.f32 %v1302, %v1315
        %v1318 = vmul.f32 %v1303, %v1315
        %v1319 = vmul.f32 %v1304, %v1315
        %v1320 = vperm.slane %v1089, 5
        %v1321 = vmul.f32 %v1316, %v1320
        %v1322 = vmul.f32 %v1317, %v1320
        %v1323 = vmul.f32 %v1318, %v1320
        %v1324 = vmul.f32 %v1319, %v1320
        %v1325 = vperm.slane %v1089, 6
        %v1326 = vadd.f32 %v1321, %v1325
        %v1327 = vadd.f32 %v1322, %v1325
        %v1328 = vadd.f32 %v1323, %v1325
        %v1329 = vadd.f32 %v1324, %v1325
        %v1330 = vmax.f32 %v1326, 0.0
        %v1331 = vmax.f32 %v1327, 0.0
        %v1332 = vmax.f32 %v1328, 0.0
        %v1333 = vmax.f32 %v1329, 0.0
        %s1334 = scalar_lea.vmem %s530, 16
        %v1335 = vld [vmem:[%s1334] sm:$0xff]
        %v1336 = vld [vmem:[%s1334 + $0x8] sm:$0xff]
        %v1337 = vperm.slane %v1089, 7
        %v1339 = vsel %vm1147, %v1330, 0
        %v1342 = vsel %vm1147, %v1331, 0
        %v1345 = vsel %vm1147, %v1332, 0
        %v1348 = vsel %vm1147, %v1333, 0
        %1350 = vmatpush.msra.mxu0 0.0
        %1351 = vmatpush.msra.mxu0 0.0
        %1352 = vmatpush.msra.mxu0 0.0
        %1353 = vmatpush.msra.mxu0 0.0
        %1354 = vmatpush.msra.mxu0 0.0
        %1355 = vmatpush.msra.mxu0 0.0
        %1356 = vmatpush.msra.mxu0 0.0
        %1357 = vmatpush.msra.mxu0 0.0
        %1358 = vmatpush.msra.mxu0 0.0
        %1359 = vmatpush.msra.mxu0 0.0
        %1360 = vmatpush.msra.mxu0 0.0
        %1361 = vmatpush.msra.mxu0 0.0
        %1362 = vmatpush.msra.mxu0 0.0
        %1363 = vmatpush.msra.mxu0 0.0
        %1364 = vmatpush.msra.mxu0 %v1336
        %1365 = vmatpush.msra.mxu0 %v1335
        %1366 = vmatmul.f32.gmra.mxu0 %v1339
        %v1367 = vpop.f32.mrf.mxu0
        %v1368 = vadd.f32 %v1337, %v1367
        %1369 = vmatmul.f32.gmra.mxu0 %v1342
        %v1370 = vpop.f32.mrf.mxu0
        %v1371 = vadd.f32 %v1337, %v1370
        %1372 = vmatmul.f32.gmra.mxu0 %v1345
        %v1373 = vpop.f32.mrf.mxu0
        %v1374 = vadd.f32 %v1337, %v1373
        %1375 = vmatmul.f32.gmra.mxu0 %v1348
        %v1376 = vpop.f32.mrf.mxu0
        %v1377 = vadd.f32 %v1337, %v1376
        %1378 = vdwg.mxu0
        %v1379 = vperm.slane %v1089, 0
        %v1380 = vsub.f32 %v1090, %v1379
        %v1381 = vsub.f32 %v1091, %v1379
        %v1382 = vsub.f32 %v1092, %v1379
        %v1383 = vsub.f32 %v1093, %v1379
        %v1384 = vmul.f32 %v1380, %v1380
        %v1385 = vmul.f32 %v1381, %v1381
        %v1386 = vmul.f32 %v1382, %v1382
        %v1387 = vmul.f32 %v1383, %v1383
        %v1388 = vsel %vm1101, %v1384, 0.0
        %1389 = vadd.xlane.f32.xlu0 %v1388
        %v1390 = vpop.xlane.xlu0 %1389
        %v1391 = vsel %vm1101, %v1385, 0.0
        %1392 = vadd.xlane.f32.xlu0 %v1391
        %v1393 = vpop.xlane.xlu0 %1392
        %v1394 = vsel %vm1101, %v1386, 0.0
        %1395 = vadd.xlane.f32.xlu0 %v1394
        %v1396 = vpop.xlane.xlu0 %1395
        %v1397 = vsel %vm1101, %v1387, 0.0
        %1398 = vadd.xlane.f32.xlu0 %v1397
        %v1399 = vpop.xlane.xlu0 %1398
        %v1400 = vmul.f32 %v1390, 0.32
        %v1401 = vmul.f32 %v1393, 0.32
        %v1402 = vmul.f32 %v1396, 0.32
        %v1403 = vmul.f32 %v1399, 0.32
        %v1404 = vmul.f32 %v1368, %v1368
        %v1405 = vmul.f32 %v1371, %v1371
        %v1406 = vmul.f32 %v1374, %v1374
        %v1407 = vmul.f32 %v1377, %v1377
        %v1408 = vsel %vm1101, %v1404, 0.0
        %1409 = vadd.xlane.f32.xlu0 %v1408
        %v1410 = vpop.xlane.xlu0 %1409
        %v1411 = vsel %vm1101, %v1405, 0.0
        %1412 = vadd.xlane.f32.xlu0 %v1411
        %v1413 = vpop.xlane.xlu0 %1412
        %v1414 = vsel %vm1101, %v1406, 0.0
        %1415 = vadd.xlane.f32.xlu0 %v1414
        %v1416 = vpop.xlane.xlu0 %1415
        %v1417 = vsel %vm1101, %v1407, 0.0
        %1418 = vadd.xlane.f32.xlu0 %v1417
        %v1419 = vpop.xlane.xlu0 %1418
        %v1420 = vmul.f32 %v1410, 0.5
        %v1421 = vmul.f32 %v1413, 0.5
        %v1422 = vmul.f32 %v1416, 0.5
        %v1423 = vmul.f32 %v1419, 0.5
        %v1424 = vadd.f32 %v1400, %v1420
        %v1425 = vadd.f32 %v1401, %v1421
        %v1426 = vadd.f32 %v1402, %v1422
        %v1427 = vadd.f32 %v1403, %v1423
        %v1428 = vstv %s1081
        %v1429 = vmul.f32 %v1424, %v1428
        %v1430 = vmul.f32 %v1425, %v1428
        %v1431 = vmul.f32 %v1426, %v1428
        %v1432 = vmul.f32 %v1427, %v1428
        %v1433 = vsub.f32 %v1094, %v1429
        %v1434 = vsub.f32 %v1095, %v1430
        %v1435 = vsub.f32 %v1096, %v1431
        %v1436 = vsub.f32 %v1097, %v1432
        %s1437 = smul.f32 %s1082, 0.5
        %v1438 = vmul.f32 %v1368, %v1084
        %v1439 = vmul.f32 %v1371, %v1085
        %v1440 = vmul.f32 %v1374, %v1086
        %v1441 = vmul.f32 %v1377, %v1087
        %v1442 = vsel %vm1101, %v1438, 0.0
        %1443 = vadd.xlane.f32.xlu0 %v1442
        %v1444 = vpop.xlane.xlu0 %1443
        %v1445 = vsel %vm1101, %v1439, 0.0
        %1446 = vadd.xlane.f32.xlu0 %v1445
        %v1447 = vpop.xlane.xlu0 %1446
        %v1448 = vsel %vm1101, %v1440, 0.0
        %1449 = vadd.xlane.f32.xlu0 %v1448
        %v1450 = vpop.xlane.xlu0 %1449
        %v1451 = vsel %vm1101, %v1441, 0.0
        %1452 = vadd.xlane.f32.xlu0 %v1451
        %v1453 = vpop.xlane.xlu0 %1452
        %v1454 = vstv %s1437
        %v1455 = vmul.f32 %v1454, %v1444
        %v1456 = vmul.f32 %v1454, %v1447
        %v1457 = vmul.f32 %v1454, %v1450
        %v1458 = vmul.f32 %v1454, %v1453
        %v1459 = vadd.f32 %v1433, %v1455
        %v1460 = vadd.f32 %v1434, %v1456
        %v1461 = vadd.f32 %v1435, %v1457
        %v1462 = vadd.f32 %v1436, %v1458
        %v1463 = vmul.f32 %v1368, %v1428
        %v1464 = vmul.f32 %v1371, %v1428
        %v1465 = vmul.f32 %v1374, %v1428
        %v1466 = vmul.f32 %v1377, %v1428
        %v1467 = vsub.f32 %v1090, %v1463
        %v1468 = vsub.f32 %v1091, %v1464
        %v1469 = vsub.f32 %v1092, %v1465
        %v1470 = vsub.f32 %v1093, %v1466
        %v1471 = vmul.f32 %v1454, %v1084
        %v1472 = vmul.f32 %v1454, %v1085
        %v1473 = vmul.f32 %v1454, %v1086
        %v1474 = vmul.f32 %v1454, %v1087
        %v1475 = vadd.f32 %v1467, %v1471
        %v1476 = vadd.f32 %v1468, %v1472
        %v1477 = vadd.f32 %v1469, %v1473
        %v1478 = vadd.f32 %v1470, %v1474
        %vm1479 = vcmask 7168
        %1480 = vst.msk [vmem:[%s10] sm:$0xff] %vm1479, %v1459
        %1481 = vst.msk [vmem:[%s10 + $0x8] sm:$0xff] %vm1479, %v1460
        %1482 = vst.msk [vmem:[%s10 + $0x10] sm:$0xff] %vm1479, %v1461
        %1483 = vst.msk [vmem:[%s10 + $0x18] sm:$0xff] %vm1479, %v1462
        %1484 = vst.msk [vmem:[%s11] sm:$0xff] %vm1101, %v1475
        %1485 = vst.msk [vmem:[%s11 + $0x8] sm:$0xff] %vm1101, %v1476
        %1486 = vst.msk [vmem:[%s11 + $0x10] sm:$0xff] %vm1101, %v1477
        %1487 = vst.msk [vmem:[%s11 + $0x18] sm:$0xff] %vm1101, %v1478
        %s1488 = scalar_lea.vmem %s537, 32
        %1489 = vst.msk [vmem:[%s1488] sm:$0xff] %vm1101, %v1475
        %1490 = vst.msk [vmem:[%s1488 + $0x8] sm:$0xff] %vm1101, %v1476
        %1491 = vst.msk [vmem:[%s1488 + $0x10] sm:$0xff] %vm1101, %v1477
        %1492 = vst.msk [vmem:[%s1488 + $0x18] sm:$0xff] %vm1101, %v1478
        %s1493 = sadd.s32 %s1079, 2
        %s1494 = sld [smem:[#allocation3 + %s1493]]
        %s1495 = sld [smem:[#allocation5 + %s1493]]
        %s1496 = scalar_lea.vmem %s504, 64
        %v1497 = vld [vmem:[%s1496] sm:$0xff]
        %v1498 = vld [vmem:[%s1496 + $0x8] sm:$0xff]
        %v1499 = vld [vmem:[%s1496 + $0x10] sm:$0xff]
        %v1500 = vld [vmem:[%s1496 + $0x18] sm:$0xff]
        %s1501 = scalar_lea.vmem %s510, 16
        %v1502 = vld [vmem:[%s1501] sm:$0xff]
        %v1503 = vld [vmem:[%s11] sm:$0xff]
        %v1504 = vld [vmem:[%s11 + $0x8] sm:$0xff]
        %v1505 = vld [vmem:[%s11 + $0x10] sm:$0xff]
        %v1506 = vld [vmem:[%s11 + $0x18] sm:$0xff]
        %v1507 = vld [vmem:[%s10] sm:$0xff]
        %v1508 = vld [vmem:[%s10 + $0x8] sm:$0xff]
        %v1509 = vld [vmem:[%s10 + $0x10] sm:$0xff]
        %v1510 = vld [vmem:[%s10 + $0x18] sm:$0xff]
        %s1511 = scalar_lea.vmem %s516, 16
        %v1512 = vld [vmem:[%s1511] sm:$0x3f]
        %v1513 = vperm.slane %v1502, 1
        %v1515 = vsel %vm1101, %v1503, 0
        %v1518 = vsel %vm1101, %v1504, 0
        %v1521 = vsel %vm1101, %v1505, 0
        %v1524 = vsel %vm1101, %v1506, 0
        %v1527 = vsel %vm1114, %v1512, 0
        %1529 = vmatpush.msra.mxu0 0.0
        %1530 = vmatpush.msra.mxu0 0.0
        %1531 = vmatpush.msra.mxu0 0.0
        %1532 = vmatpush.msra.mxu0 0.0
        %1533 = vmatpush.msra.mxu0 0.0
        %1534 = vmatpush.msra.mxu0 0.0
        %1535 = vmatpush.msra.mxu0 0.0
        %1536 = vmatpush.msra.mxu0 0.0
        %1537 = vmatpush.msra.mxu0 0.0
        %1538 = vmatpush.msra.mxu0 0.0
        %1539 = vmatpush.msra.mxu0 0.0
        %1540 = vmatpush.msra.mxu0 0.0
        %1541 = vmatpush.msra.mxu0 0.0
        %1542 = vmatpush.msra.mxu0 0.0
        %1543 = vmatpush.msra.mxu0 0.0
        %1544 = vmatpush.msra.mxu0 %v1527
        %1545 = vmatmul.f32.gmra.mxu0 %v1515
        %v1546 = vpop.f32.mrf.mxu0
        %v1547 = vadd.f32 %v1513, %v1546
        %1548 = vmatmul.f32.gmra.mxu0 %v1518
        %v1549 = vpop.f32.mrf.mxu0
        %v1550 = vadd.f32 %v1513, %v1549
        %1551 = vmatmul.f32.gmra.mxu0 %v1521
        %v1552 = vpop.f32.mrf.mxu0
        %v1553 = vadd.f32 %v1513, %v1552
        %1554 = vmatmul.f32.gmra.mxu0 %v1524
        %v1555 = vpop.f32.mrf.mxu0
        %v1556 = vadd.f32 %v1513, %v1555
        %1557 = vdwg.mxu0
        %v1558 = vsel %vm1147, %v1547, 0.0
        %v1559 = vsel %vm1147, %v1550, 0.0
        %v1560 = vadd.f32 %v1558, %v1559
        %v1561 = vsel %vm1147, %v1553, 0.0
        %v1562 = vadd.f32 %v1560, %v1561
        %v1563 = vsel %vm1147, %v1556, 0.0
        %v1564 = vadd.f32 %v1562, %v1563
        %v1565 = vrot.slane %v1564, 4
        %v1566 = vadd.f32 %v1564, %v1565
        %v1567 = vrot.slane %v1566, 2
        %v1568 = vadd.f32 %v1566, %v1567
        %v1569 = vrot.slane %v1568, 1
        %v1570 = vadd.f32 %v1568, %v1569
        %v1571 = vmul.f32 %v1570, %v1167
        %v1572 = vmul.f32 %v1547, %v1547
        %v1573 = vmul.f32 %v1550, %v1550
        %v1574 = vmul.f32 %v1553, %v1553
        %v1575 = vmul.f32 %v1556, %v1556
        %v1576 = vsel %vm1147, %v1572, 0.0
        %v1577 = vsel %vm1147, %v1573, 0.0
        %v1578 = vadd.f32 %v1576, %v1577
        %v1579 = vsel %vm1147, %v1574, 0.0
        %v1580 = vadd.f32 %v1578, %v1579
        %v1581 = vsel %vm1147, %v1575, 0.0
        %v1582 = vadd.f32 %v1580, %v1581
        %v1583 = vrot.slane %v1582, 4
        %v1584 = vadd.f32 %v1582, %v1583
        %v1585 = vrot.slane %v1584, 2
        %v1586 = vadd.f32 %v1584, %v1585
        %v1587 = vrot.slane %v1586, 1
        %v1588 = vadd.f32 %v1586, %v1587
        %v1589 = vmul.f32 %v1588, %v1167
        %v1590 = vmul.f32 %v1571, %v1571
        %v1591 = vsub.f32 %v1589, %v1590
        %v1592 = vsub.f32 %v1547, %v1571
        %v1593 = vsub.f32 %v1550, %v1571
        %v1594 = vsub.f32 %v1553, %v1571
        %v1595 = vsub.f32 %v1556, %v1571
        %v1596 = vadd.f32 %v1591, 1e-05
        %v1597 = vrsqrt.pop %v1596
        %v1598 = vmul.f32 %v1597, %v1596
        %v1599 = vmul.f32 %v1598, %v1597
        %v1600 = vmul.f32 0.5, %v1599
        %v1601 = vsub.f32 1.5, %v1600
        %v1602 = vmul.f32 %v1597, %v1601
        %vm1603 = vweird.f32 %v1596
        %vm1604 = vweird.f32 %v1597
        %vm1605 = vmor %vm1603, %vm1604
        %v1606 = vsel %vm1605, %v1597, %v1602
        %v1607 = vmul.f32 %v1592, %v1606
        %v1608 = vmul.f32 %v1593, %v1606
        %v1609 = vmul.f32 %v1594, %v1606
        %v1610 = vmul.f32 %v1595, %v1606
        %v1611 = vperm.slane %v1502, 2
        %v1612 = vmul.f32 %v1607, %v1611
        %v1613 = vmul.f32 %v1608, %v1611
        %v1614 = vmul.f32 %v1609, %v1611
        %v1615 = vmul.f32 %v1610, %v1611
        %v1616 = vperm.slane %v1502, 3
        %v1617 = vadd.f32 %v1612, %v1616
        %v1618 = vadd.f32 %v1613, %v1616
        %v1619 = vadd.f32 %v1614, %v1616
        %v1620 = vadd.f32 %v1615, %v1616
        %v1621 = vmax.f32 %v1617, 0.0
        %v1622 = vmax.f32 %v1618, 0.0
        %v1623 = vmax.f32 %v1619, 0.0
        %v1624 = vmax.f32 %v1620, 0.0
        %s1625 = scalar_lea.vmem %s523, 32
        %v1626 = vld [vmem:[%s1625] sm:$0xff]
        %v1627 = vld [vmem:[%s1625 + $0x8] sm:$0xff]
        %v1628 = vperm.slane %v1502, 4
        %v1630 = vsel %vm1147, %v1621, 0
        %v1633 = vsel %vm1147, %v1622, 0
        %v1636 = vsel %vm1147, %v1623, 0
        %v1639 = vsel %vm1147, %v1624, 0
        %1641 = vmatpush.msra.mxu0 0.0
        %1642 = vmatpush.msra.mxu0 0.0
        %1643 = vmatpush.msra.mxu0 0.0
        %1644 = vmatpush.msra.mxu0 0.0
        %1645 = vmatpush.msra.mxu0 0.0
        %1646 = vmatpush.msra.mxu0 0.0
        %1647 = vmatpush.msra.mxu0 0.0
        %1648 = vmatpush.msra.mxu0 0.0
        %1649 = vmatpush.msra.mxu0 0.0
        %1650 = vmatpush.msra.mxu0 0.0
        %1651 = vmatpush.msra.mxu0 0.0
        %1652 = vmatpush.msra.mxu0 0.0
        %1653 = vmatpush.msra.mxu0 0.0
        %1654 = vmatpush.msra.mxu0 0.0
        %1655 = vmatpush.msra.mxu0 %v1627
        %1656 = vmatpush.msra.mxu0 %v1626
        %1657 = vmatmul.f32.gmra.mxu0 %v1630
        %v1658 = vpop.f32.mrf.mxu0
        %v1659 = vadd.f32 %v1628, %v1658
        %1660 = vmatmul.f32.gmra.mxu0 %v1633
        %v1661 = vpop.f32.mrf.mxu0
        %v1662 = vadd.f32 %v1628, %v1661
        %1663 = vmatmul.f32.gmra.mxu0 %v1636
        %v1664 = vpop.f32.mrf.mxu0
        %v1665 = vadd.f32 %v1628, %v1664
        %1666 = vmatmul.f32.gmra.mxu0 %v1639
        %v1667 = vpop.f32.mrf.mxu0
        %v1668 = vadd.f32 %v1628, %v1667
        %1669 = vdwg.mxu0
        %v1670 = vsel %vm1147, %v1659, 0.0
        %v1671 = vsel %vm1147, %v1662, 0.0
        %v1672 = vadd.f32 %v1670, %v1671
        %v1673 = vsel %vm1147, %v1665, 0.0
        %v1674 = vadd.f32 %v1672, %v1673
        %v1675 = vsel %vm1147, %v1668, 0.0
        %v1676 = vadd.f32 %v1674, %v1675
        %v1677 = vrot.slane %v1676, 4
        %v1678 = vadd.f32 %v1676, %v1677
        %v1679 = vrot.slane %v1678, 2
        %v1680 = vadd.f32 %v1678, %v1679
        %v1681 = vrot.slane %v1680, 1
        %v1682 = vadd.f32 %v1680, %v1681
        %v1683 = vmul.f32 %v1682, %v1167
        %v1684 = vmul.f32 %v1659, %v1659
        %v1685 = vmul.f32 %v1662, %v1662
        %v1686 = vmul.f32 %v1665, %v1665
        %v1687 = vmul.f32 %v1668, %v1668
        %v1688 = vsel %vm1147, %v1684, 0.0
        %v1689 = vsel %vm1147, %v1685, 0.0
        %v1690 = vadd.f32 %v1688, %v1689
        %v1691 = vsel %vm1147, %v1686, 0.0
        %v1692 = vadd.f32 %v1690, %v1691
        %v1693 = vsel %vm1147, %v1687, 0.0
        %v1694 = vadd.f32 %v1692, %v1693
        %v1695 = vrot.slane %v1694, 4
        %v1696 = vadd.f32 %v1694, %v1695
        %v1697 = vrot.slane %v1696, 2
        %v1698 = vadd.f32 %v1696, %v1697
        %v1699 = vrot.slane %v1698, 1
        %v1700 = vadd.f32 %v1698, %v1699
        %v1701 = vmul.f32 %v1700, %v1167
        %v1702 = vmul.f32 %v1683, %v1683
        %v1703 = vsub.f32 %v1701, %v1702
        %v1704 = vsub.f32 %v1659, %v1683
        %v1705 = vsub.f32 %v1662, %v1683
        %v1706 = vsub.f32 %v1665, %v1683
        %v1707 = vsub.f32 %v1668, %v1683
        %v1708 = vadd.f32 %v1703, 1e-05
        %v1709 = vrsqrt.pop %v1708
        %v1710 = vmul.f32 %v1709, %v1708
        %v1711 = vmul.f32 %v1710, %v1709
        %v1712 = vmul.f32 0.5, %v1711
        %v1713 = vsub.f32 1.5, %v1712
        %v1714 = vmul.f32 %v1709, %v1713
        %vm1715 = vweird.f32 %v1708
        %vm1716 = vweird.f32 %v1709
        %vm1717 = vmor %vm1715, %vm1716
        %v1718 = vsel %vm1717, %v1709, %v1714
        %v1719 = vmul.f32 %v1704, %v1718
        %v1720 = vmul.f32 %v1705, %v1718
        %v1721 = vmul.f32 %v1706, %v1718
        %v1722 = vmul.f32 %v1707, %v1718
        %v1723 = vperm.slane %v1502, 5
        %v1724 = vmul.f32 %v1719, %v1723
        %v1725 = vmul.f32 %v1720, %v1723
        %v1726 = vmul.f32 %v1721, %v1723
        %v1727 = vmul.f32 %v1722, %v1723
        %v1728 = vperm.slane %v1502, 6
        %v1729 = vadd.f32 %v1724, %v1728
        %v1730 = vadd.f32 %v1725, %v1728
        %v1731 = vadd.f32 %v1726, %v1728
        %v1732 = vadd.f32 %v1727, %v1728
        %v1733 = vmax.f32 %v1729, 0.0
        %v1734 = vmax.f32 %v1730, 0.0
        %v1735 = vmax.f32 %v1731, 0.0
        %v1736 = vmax.f32 %v1732, 0.0
        %s1737 = scalar_lea.vmem %s530, 32
        %v1738 = vld [vmem:[%s1737] sm:$0xff]
        %v1739 = vld [vmem:[%s1737 + $0x8] sm:$0xff]
        %v1740 = vperm.slane %v1502, 7
        %v1742 = vsel %vm1147, %v1733, 0
        %v1745 = vsel %vm1147, %v1734, 0
        %v1748 = vsel %vm1147, %v1735, 0
        %v1751 = vsel %vm1147, %v1736, 0
        %1753 = vmatpush.msra.mxu0 0.0
        %1754 = vmatpush.msra.mxu0 0.0
        %1755 = vmatpush.msra.mxu0 0.0
        %1756 = vmatpush.msra.mxu0 0.0
        %1757 = vmatpush.msra.mxu0 0.0
        %1758 = vmatpush.msra.mxu0 0.0
        %1759 = vmatpush.msra.mxu0 0.0
        %1760 = vmatpush.msra.mxu0 0.0
        %1761 = vmatpush.msra.mxu0 0.0
        %1762 = vmatpush.msra.mxu0 0.0
        %1763 = vmatpush.msra.mxu0 0.0
        %1764 = vmatpush.msra.mxu0 0.0
        %1765 = vmatpush.msra.mxu0 0.0
        %1766 = vmatpush.msra.mxu0 0.0
        %1767 = vmatpush.msra.mxu0 %v1739
        %1768 = vmatpush.msra.mxu0 %v1738
        %1769 = vmatmul.f32.gmra.mxu0 %v1742
        %v1770 = vpop.f32.mrf.mxu0
        %v1771 = vadd.f32 %v1740, %v1770
        %1772 = vmatmul.f32.gmra.mxu0 %v1745
        %v1773 = vpop.f32.mrf.mxu0
        %v1774 = vadd.f32 %v1740, %v1773
        %1775 = vmatmul.f32.gmra.mxu0 %v1748
        %v1776 = vpop.f32.mrf.mxu0
        %v1777 = vadd.f32 %v1740, %v1776
        %1778 = vmatmul.f32.gmra.mxu0 %v1751
        %v1779 = vpop.f32.mrf.mxu0
        %v1780 = vadd.f32 %v1740, %v1779
        %1781 = vdwg.mxu0
        %v1782 = vperm.slane %v1502, 0
        %v1783 = vsub.f32 %v1503, %v1782
        %v1784 = vsub.f32 %v1504, %v1782
        %v1785 = vsub.f32 %v1505, %v1782
        %v1786 = vsub.f32 %v1506, %v1782
        %v1787 = vmul.f32 %v1783, %v1783
        %v1788 = vmul.f32 %v1784, %v1784
        %v1789 = vmul.f32 %v1785, %v1785
        %v1790 = vmul.f32 %v1786, %v1786
        %v1791 = vsel %vm1101, %v1787, 0.0
        %1792 = vadd.xlane.f32.xlu0 %v1791
        %v1793 = vpop.xlane.xlu0 %1792
        %v1794 = vsel %vm1101, %v1788, 0.0
        %1795 = vadd.xlane.f32.xlu0 %v1794
        %v1796 = vpop.xlane.xlu0 %1795
        %v1797 = vsel %vm1101, %v1789, 0.0
        %1798 = vadd.xlane.f32.xlu0 %v1797
        %v1799 = vpop.xlane.xlu0 %1798
        %v1800 = vsel %vm1101, %v1790, 0.0
        %1801 = vadd.xlane.f32.xlu0 %v1800
        %v1802 = vpop.xlane.xlu0 %1801
        %v1803 = vmul.f32 %v1793, 0.32
        %v1804 = vmul.f32 %v1796, 0.32
        %v1805 = vmul.f32 %v1799, 0.32
        %v1806 = vmul.f32 %v1802, 0.32
        %v1807 = vmul.f32 %v1771, %v1771
        %v1808 = vmul.f32 %v1774, %v1774
        %v1809 = vmul.f32 %v1777, %v1777
        %v1810 = vmul.f32 %v1780, %v1780
        %v1811 = vsel %vm1101, %v1807, 0.0
        %1812 = vadd.xlane.f32.xlu0 %v1811
        %v1813 = vpop.xlane.xlu0 %1812
        %v1814 = vsel %vm1101, %v1808, 0.0
        %1815 = vadd.xlane.f32.xlu0 %v1814
        %v1816 = vpop.xlane.xlu0 %1815
        %v1817 = vsel %vm1101, %v1809, 0.0
        %1818 = vadd.xlane.f32.xlu0 %v1817
        %v1819 = vpop.xlane.xlu0 %1818
        %v1820 = vsel %vm1101, %v1810, 0.0
        %1821 = vadd.xlane.f32.xlu0 %v1820
        %v1822 = vpop.xlane.xlu0 %1821
        %v1823 = vmul.f32 %v1813, 0.5
        %v1824 = vmul.f32 %v1816, 0.5
        %v1825 = vmul.f32 %v1819, 0.5
        %v1826 = vmul.f32 %v1822, 0.5
        %v1827 = vadd.f32 %v1803, %v1823
        %v1828 = vadd.f32 %v1804, %v1824
        %v1829 = vadd.f32 %v1805, %v1825
        %v1830 = vadd.f32 %v1806, %v1826
        %v1831 = vstv %s1494
        %v1832 = vmul.f32 %v1827, %v1831
        %v1833 = vmul.f32 %v1828, %v1831
        %v1834 = vmul.f32 %v1829, %v1831
        %v1835 = vmul.f32 %v1830, %v1831
        %v1836 = vsub.f32 %v1507, %v1832
        %v1837 = vsub.f32 %v1508, %v1833
        %v1838 = vsub.f32 %v1509, %v1834
        %v1839 = vsub.f32 %v1510, %v1835
        %s1840 = smul.f32 %s1495, 0.5
        %v1841 = vmul.f32 %v1771, %v1497
        %v1842 = vmul.f32 %v1774, %v1498
        %v1843 = vmul.f32 %v1777, %v1499
        %v1844 = vmul.f32 %v1780, %v1500
        %v1845 = vsel %vm1101, %v1841, 0.0
        %1846 = vadd.xlane.f32.xlu0 %v1845
        %v1847 = vpop.xlane.xlu0 %1846
        %v1848 = vsel %vm1101, %v1842, 0.0
        %1849 = vadd.xlane.f32.xlu0 %v1848
        %v1850 = vpop.xlane.xlu0 %1849
        %v1851 = vsel %vm1101, %v1843, 0.0
        %1852 = vadd.xlane.f32.xlu0 %v1851
        %v1853 = vpop.xlane.xlu0 %1852
        %v1854 = vsel %vm1101, %v1844, 0.0
        %1855 = vadd.xlane.f32.xlu0 %v1854
        %v1856 = vpop.xlane.xlu0 %1855
        %v1857 = vstv %s1840
        %v1858 = vmul.f32 %v1857, %v1847
        %v1859 = vmul.f32 %v1857, %v1850
        %v1860 = vmul.f32 %v1857, %v1853
        %v1861 = vmul.f32 %v1857, %v1856
        %v1862 = vadd.f32 %v1836, %v1858
        %v1863 = vadd.f32 %v1837, %v1859
        %v1864 = vadd.f32 %v1838, %v1860
        %v1865 = vadd.f32 %v1839, %v1861
        %v1866 = vmul.f32 %v1771, %v1831
        %v1867 = vmul.f32 %v1774, %v1831
        %v1868 = vmul.f32 %v1777, %v1831
        %v1869 = vmul.f32 %v1780, %v1831
        %v1870 = vsub.f32 %v1503, %v1866
        %v1871 = vsub.f32 %v1504, %v1867
        %v1872 = vsub.f32 %v1505, %v1868
        %v1873 = vsub.f32 %v1506, %v1869
        %v1874 = vmul.f32 %v1857, %v1497
        %v1875 = vmul.f32 %v1857, %v1498
        %v1876 = vmul.f32 %v1857, %v1499
        %v1877 = vmul.f32 %v1857, %v1500
        %v1878 = vadd.f32 %v1870, %v1874
        %v1879 = vadd.f32 %v1871, %v1875
        %v1880 = vadd.f32 %v1872, %v1876
        %v1881 = vadd.f32 %v1873, %v1877
        %1882 = vst.msk [vmem:[%s10] sm:$0xff] %vm1479, %v1862
        %1883 = vst.msk [vmem:[%s10 + $0x8] sm:$0xff] %vm1479, %v1863
        %1884 = vst.msk [vmem:[%s10 + $0x10] sm:$0xff] %vm1479, %v1864
        %1885 = vst.msk [vmem:[%s10 + $0x18] sm:$0xff] %vm1479, %v1865
        %1886 = vst.msk [vmem:[%s11] sm:$0xff] %vm1101, %v1878
        %1887 = vst.msk [vmem:[%s11 + $0x8] sm:$0xff] %vm1101, %v1879
        %1888 = vst.msk [vmem:[%s11 + $0x10] sm:$0xff] %vm1101, %v1880
        %1889 = vst.msk [vmem:[%s11 + $0x18] sm:$0xff] %vm1101, %v1881
        %s1890 = scalar_lea.vmem %s537, 64
        %1891 = vst.msk [vmem:[%s1890] sm:$0xff] %vm1101, %v1878
        %1892 = vst.msk [vmem:[%s1890 + $0x8] sm:$0xff] %vm1101, %v1879
        %1893 = vst.msk [vmem:[%s1890 + $0x10] sm:$0xff] %vm1101, %v1880
        %1894 = vst.msk [vmem:[%s1890 + $0x18] sm:$0xff] %vm1101, %v1881
        %s1895 = sadd.s32 %s1079, 3
        %s1896 = sld [smem:[#allocation3 + %s1895]]
        %s1897 = sld [smem:[#allocation5 + %s1895]]
        %s1898 = scalar_lea.vmem %s504, 96
        %v1899 = vld [vmem:[%s1898] sm:$0xff]
        %v1900 = vld [vmem:[%s1898 + $0x8] sm:$0xff]
        %v1901 = vld [vmem:[%s1898 + $0x10] sm:$0xff]
        %v1902 = vld [vmem:[%s1898 + $0x18] sm:$0xff]
        %s1903 = scalar_lea.vmem %s510, 24
        %v1904 = vld [vmem:[%s1903] sm:$0xff]
        %v1905 = vld [vmem:[%s11] sm:$0xff]
        %v1906 = vld [vmem:[%s11 + $0x8] sm:$0xff]
        %v1907 = vld [vmem:[%s11 + $0x10] sm:$0xff]
        %v1908 = vld [vmem:[%s11 + $0x18] sm:$0xff]
        %v1909 = vld [vmem:[%s10] sm:$0xff]
        %v1910 = vld [vmem:[%s10 + $0x8] sm:$0xff]
        %v1911 = vld [vmem:[%s10 + $0x10] sm:$0xff]
        %v1912 = vld [vmem:[%s10 + $0x18] sm:$0xff]
        %s1913 = scalar_lea.vmem %s516, 24
        %v1914 = vld [vmem:[%s1913] sm:$0x3f]
        %v1915 = vperm.slane %v1904, 1
        %v1917 = vsel %vm1101, %v1905, 0
        %v1920 = vsel %vm1101, %v1906, 0
        %v1923 = vsel %vm1101, %v1907, 0
        %v1926 = vsel %vm1101, %v1908, 0
        %v1929 = vsel %vm1114, %v1914, 0
        %1931 = vmatpush.msra.mxu0 0.0
        %1932 = vmatpush.msra.mxu0 0.0
        %1933 = vmatpush.msra.mxu0 0.0
        %1934 = vmatpush.msra.mxu0 0.0
        %1935 = vmatpush.msra.mxu0 0.0
        %1936 = vmatpush.msra.mxu0 0.0
        %1937 = vmatpush.msra.mxu0 0.0
        %1938 = vmatpush.msra.mxu0 0.0
        %1939 = vmatpush.msra.mxu0 0.0
        %1940 = vmatpush.msra.mxu0 0.0
        %1941 = vmatpush.msra.mxu0 0.0
        %1942 = vmatpush.msra.mxu0 0.0
        %1943 = vmatpush.msra.mxu0 0.0
        %1944 = vmatpush.msra.mxu0 0.0
        %1945 = vmatpush.msra.mxu0 0.0
        %1946 = vmatpush.msra.mxu0 %v1929
        %1947 = vmatmul.f32.gmra.mxu0 %v1917
        %v1948 = vpop.f32.mrf.mxu0
        %v1949 = vadd.f32 %v1915, %v1948
        %1950 = vmatmul.f32.gmra.mxu0 %v1920
        %v1951 = vpop.f32.mrf.mxu0
        %v1952 = vadd.f32 %v1915, %v1951
        %1953 = vmatmul.f32.gmra.mxu0 %v1923
        %v1954 = vpop.f32.mrf.mxu0
        %v1955 = vadd.f32 %v1915, %v1954
        %1956 = vmatmul.f32.gmra.mxu0 %v1926
        %v1957 = vpop.f32.mrf.mxu0
        %v1958 = vadd.f32 %v1915, %v1957
        %1959 = vdwg.mxu0
        %v1960 = vsel %vm1147, %v1949, 0.0
        %v1961 = vsel %vm1147, %v1952, 0.0
        %v1962 = vadd.f32 %v1960, %v1961
        %v1963 = vsel %vm1147, %v1955, 0.0
        %v1964 = vadd.f32 %v1962, %v1963
        %v1965 = vsel %vm1147, %v1958, 0.0
        %v1966 = vadd.f32 %v1964, %v1965
        %v1967 = vrot.slane %v1966, 4
        %v1968 = vadd.f32 %v1966, %v1967
        %v1969 = vrot.slane %v1968, 2
        %v1970 = vadd.f32 %v1968, %v1969
        %v1971 = vrot.slane %v1970, 1
        %v1972 = vadd.f32 %v1970, %v1971
        %v1973 = vmul.f32 %v1972, %v1167
        %v1974 = vmul.f32 %v1949, %v1949
        %v1975 = vmul.f32 %v1952, %v1952
        %v1976 = vmul.f32 %v1955, %v1955
        %v1977 = vmul.f32 %v1958, %v1958
        %v1978 = vsel %vm1147, %v1974, 0.0
        %v1979 = vsel %vm1147, %v1975, 0.0
        %v1980 = vadd.f32 %v1978, %v1979
        %v1981 = vsel %vm1147, %v1976, 0.0
        %v1982 = vadd.f32 %v1980, %v1981
        %v1983 = vsel %vm1147, %v1977, 0.0
        %v1984 = vadd.f32 %v1982, %v1983
        %v1985 = vrot.slane %v1984, 4
        %v1986 = vadd.f32 %v1984, %v1985
        %v1987 = vrot.slane %v1986, 2
        %v1988 = vadd.f32 %v1986, %v1987
        %v1989 = vrot.slane %v1988, 1
        %v1990 = vadd.f32 %v1988, %v1989
        %v1991 = vmul.f32 %v1990, %v1167
        %v1992 = vmul.f32 %v1973, %v1973
        %v1993 = vsub.f32 %v1991, %v1992
        %v1994 = vsub.f32 %v1949, %v1973
        %v1995 = vsub.f32 %v1952, %v1973
        %v1996 = vsub.f32 %v1955, %v1973
        %v1997 = vsub.f32 %v1958, %v1973
        %v1998 = vadd.f32 %v1993, 1e-05
        %v1999 = vrsqrt.pop %v1998
        %v2000 = vmul.f32 %v1999, %v1998
        %v2001 = vmul.f32 %v2000, %v1999
        %v2002 = vmul.f32 0.5, %v2001
        %v2003 = vsub.f32 1.5, %v2002
        %v2004 = vmul.f32 %v1999, %v2003
        %vm2005 = vweird.f32 %v1998
        %vm2006 = vweird.f32 %v1999
        %vm2007 = vmor %vm2005, %vm2006
        %v2008 = vsel %vm2007, %v1999, %v2004
        %v2009 = vmul.f32 %v1994, %v2008
        %v2010 = vmul.f32 %v1995, %v2008
        %v2011 = vmul.f32 %v1996, %v2008
        %v2012 = vmul.f32 %v1997, %v2008
        %v2013 = vperm.slane %v1904, 2
        %v2014 = vmul.f32 %v2009, %v2013
        %v2015 = vmul.f32 %v2010, %v2013
        %v2016 = vmul.f32 %v2011, %v2013
        %v2017 = vmul.f32 %v2012, %v2013
        %v2018 = vperm.slane %v1904, 3
        %v2019 = vadd.f32 %v2014, %v2018
        %v2020 = vadd.f32 %v2015, %v2018
        %v2021 = vadd.f32 %v2016, %v2018
        %v2022 = vadd.f32 %v2017, %v2018
        %v2023 = vmax.f32 %v2019, 0.0
        %v2024 = vmax.f32 %v2020, 0.0
        %v2025 = vmax.f32 %v2021, 0.0
        %v2026 = vmax.f32 %v2022, 0.0
        %s2027 = scalar_lea.vmem %s523, 48
        %v2028 = vld [vmem:[%s2027] sm:$0xff]
        %v2029 = vld [vmem:[%s2027 + $0x8] sm:$0xff]
        %v2030 = vperm.slane %v1904, 4
        %v2032 = vsel %vm1147, %v2023, 0
        %v2035 = vsel %vm1147, %v2024, 0
        %v2038 = vsel %vm1147, %v2025, 0
        %v2041 = vsel %vm1147, %v2026, 0
        %2043 = vmatpush.msra.mxu0 0.0
        %2044 = vmatpush.msra.mxu0 0.0
        %2045 = vmatpush.msra.mxu0 0.0
        %2046 = vmatpush.msra.mxu0 0.0
        %2047 = vmatpush.msra.mxu0 0.0
        %2048 = vmatpush.msra.mxu0 0.0
        %2049 = vmatpush.msra.mxu0 0.0
        %2050 = vmatpush.msra.mxu0 0.0
        %2051 = vmatpush.msra.mxu0 0.0
        %2052 = vmatpush.msra.mxu0 0.0
        %2053 = vmatpush.msra.mxu0 0.0
        %2054 = vmatpush.msra.mxu0 0.0
        %2055 = vmatpush.msra.mxu0 0.0
        %2056 = vmatpush.msra.mxu0 0.0
        %2057 = vmatpush.msra.mxu0 %v2029
        %2058 = vmatpush.msra.mxu0 %v2028
        %2059 = vmatmul.f32.gmra.mxu0 %v2032
        %v2060 = vpop.f32.mrf.mxu0
        %v2061 = vadd.f32 %v2030, %v2060
        %2062 = vmatmul.f32.gmra.mxu0 %v2035
        %v2063 = vpop.f32.mrf.mxu0
        %v2064 = vadd.f32 %v2030, %v2063
        %2065 = vmatmul.f32.gmra.mxu0 %v2038
        %v2066 = vpop.f32.mrf.mxu0
        %v2067 = vadd.f32 %v2030, %v2066
        %2068 = vmatmul.f32.gmra.mxu0 %v2041
        %v2069 = vpop.f32.mrf.mxu0
        %v2070 = vadd.f32 %v2030, %v2069
        %2071 = vdwg.mxu0
        %v2072 = vsel %vm1147, %v2061, 0.0
        %v2073 = vsel %vm1147, %v2064, 0.0
        %v2074 = vadd.f32 %v2072, %v2073
        %v2075 = vsel %vm1147, %v2067, 0.0
        %v2076 = vadd.f32 %v2074, %v2075
        %v2077 = vsel %vm1147, %v2070, 0.0
        %v2078 = vadd.f32 %v2076, %v2077
        %v2079 = vrot.slane %v2078, 4
        %v2080 = vadd.f32 %v2078, %v2079
        %v2081 = vrot.slane %v2080, 2
        %v2082 = vadd.f32 %v2080, %v2081
        %v2083 = vrot.slane %v2082, 1
        %v2084 = vadd.f32 %v2082, %v2083
        %v2085 = vmul.f32 %v2084, %v1167
        %v2086 = vmul.f32 %v2061, %v2061
        %v2087 = vmul.f32 %v2064, %v2064
        %v2088 = vmul.f32 %v2067, %v2067
        %v2089 = vmul.f32 %v2070, %v2070
        %v2090 = vsel %vm1147, %v2086, 0.0
        %v2091 = vsel %vm1147, %v2087, 0.0
        %v2092 = vadd.f32 %v2090, %v2091
        %v2093 = vsel %vm1147, %v2088, 0.0
        %v2094 = vadd.f32 %v2092, %v2093
        %v2095 = vsel %vm1147, %v2089, 0.0
        %v2096 = vadd.f32 %v2094, %v2095
        %v2097 = vrot.slane %v2096, 4
        %v2098 = vadd.f32 %v2096, %v2097
        %v2099 = vrot.slane %v2098, 2
        %v2100 = vadd.f32 %v2098, %v2099
        %v2101 = vrot.slane %v2100, 1
        %v2102 = vadd.f32 %v2100, %v2101
        %v2103 = vmul.f32 %v2102, %v1167
        %v2104 = vmul.f32 %v2085, %v2085
        %v2105 = vsub.f32 %v2103, %v2104
        %v2106 = vsub.f32 %v2061, %v2085
        %v2107 = vsub.f32 %v2064, %v2085
        %v2108 = vsub.f32 %v2067, %v2085
        %v2109 = vsub.f32 %v2070, %v2085
        %v2110 = vadd.f32 %v2105, 1e-05
        %v2111 = vrsqrt.pop %v2110
        %v2112 = vmul.f32 %v2111, %v2110
        %v2113 = vmul.f32 %v2112, %v2111
        %v2114 = vmul.f32 0.5, %v2113
        %v2115 = vsub.f32 1.5, %v2114
        %v2116 = vmul.f32 %v2111, %v2115
        %vm2117 = vweird.f32 %v2110
        %vm2118 = vweird.f32 %v2111
        %vm2119 = vmor %vm2117, %vm2118
        %v2120 = vsel %vm2119, %v2111, %v2116
        %v2121 = vmul.f32 %v2106, %v2120
        %v2122 = vmul.f32 %v2107, %v2120
        %v2123 = vmul.f32 %v2108, %v2120
        %v2124 = vmul.f32 %v2109, %v2120
        %v2125 = vperm.slane %v1904, 5
        %v2126 = vmul.f32 %v2121, %v2125
        %v2127 = vmul.f32 %v2122, %v2125
        %v2128 = vmul.f32 %v2123, %v2125
        %v2129 = vmul.f32 %v2124, %v2125
        %v2130 = vperm.slane %v1904, 6
        %v2131 = vadd.f32 %v2126, %v2130
        %v2132 = vadd.f32 %v2127, %v2130
        %v2133 = vadd.f32 %v2128, %v2130
        %v2134 = vadd.f32 %v2129, %v2130
        %v2135 = vmax.f32 %v2131, 0.0
        %v2136 = vmax.f32 %v2132, 0.0
        %v2137 = vmax.f32 %v2133, 0.0
        %v2138 = vmax.f32 %v2134, 0.0
        %s2139 = scalar_lea.vmem %s530, 48
        %v2140 = vld [vmem:[%s2139] sm:$0xff]
        %v2141 = vld [vmem:[%s2139 + $0x8] sm:$0xff]
        %v2142 = vperm.slane %v1904, 7
        %v2144 = vsel %vm1147, %v2135, 0
        %v2147 = vsel %vm1147, %v2136, 0
        %v2150 = vsel %vm1147, %v2137, 0
        %v2153 = vsel %vm1147, %v2138, 0
        %2155 = vmatpush.msra.mxu0 0.0
        %2156 = vmatpush.msra.mxu0 0.0
        %2157 = vmatpush.msra.mxu0 0.0
        %2158 = vmatpush.msra.mxu0 0.0
        %2159 = vmatpush.msra.mxu0 0.0
        %2160 = vmatpush.msra.mxu0 0.0
        %2161 = vmatpush.msra.mxu0 0.0
        %2162 = vmatpush.msra.mxu0 0.0
        %2163 = vmatpush.msra.mxu0 0.0
        %2164 = vmatpush.msra.mxu0 0.0
        %2165 = vmatpush.msra.mxu0 0.0
        %2166 = vmatpush.msra.mxu0 0.0
        %2167 = vmatpush.msra.mxu0 0.0
        %2168 = vmatpush.msra.mxu0 0.0
        %2169 = vmatpush.msra.mxu0 %v2141
        %2170 = vmatpush.msra.mxu0 %v2140
        %2171 = vmatmul.f32.gmra.mxu0 %v2144
        %v2172 = vpop.f32.mrf.mxu0
        %v2173 = vadd.f32 %v2142, %v2172
        %2174 = vmatmul.f32.gmra.mxu0 %v2147
        %v2175 = vpop.f32.mrf.mxu0
        %v2176 = vadd.f32 %v2142, %v2175
        %2177 = vmatmul.f32.gmra.mxu0 %v2150
        %v2178 = vpop.f32.mrf.mxu0
        %v2179 = vadd.f32 %v2142, %v2178
        %2180 = vmatmul.f32.gmra.mxu0 %v2153
        %v2181 = vpop.f32.mrf.mxu0
        %v2182 = vadd.f32 %v2142, %v2181
        %2183 = vdwg.mxu0
        %v2184 = vperm.slane %v1904, 0
        %v2185 = vsub.f32 %v1905, %v2184
        %v2186 = vsub.f32 %v1906, %v2184
        %v2187 = vsub.f32 %v1907, %v2184
        %v2188 = vsub.f32 %v1908, %v2184
        %v2189 = vmul.f32 %v2185, %v2185
        %v2190 = vmul.f32 %v2186, %v2186
        %v2191 = vmul.f32 %v2187, %v2187
        %v2192 = vmul.f32 %v2188, %v2188
        %v2193 = vsel %vm1101, %v2189, 0.0
        %2194 = vadd.xlane.f32.xlu0 %v2193
        %v2195 = vpop.xlane.xlu0 %2194
        %v2196 = vsel %vm1101, %v2190, 0.0
        %2197 = vadd.xlane.f32.xlu0 %v2196
        %v2198 = vpop.xlane.xlu0 %2197
        %v2199 = vsel %vm1101, %v2191, 0.0
        %2200 = vadd.xlane.f32.xlu0 %v2199
        %v2201 = vpop.xlane.xlu0 %2200
        %v2202 = vsel %vm1101, %v2192, 0.0
        %2203 = vadd.xlane.f32.xlu0 %v2202
        %v2204 = vpop.xlane.xlu0 %2203
        %v2205 = vmul.f32 %v2195, 0.32
        %v2206 = vmul.f32 %v2198, 0.32
        %v2207 = vmul.f32 %v2201, 0.32
        %v2208 = vmul.f32 %v2204, 0.32
        %v2209 = vmul.f32 %v2173, %v2173
        %v2210 = vmul.f32 %v2176, %v2176
        %v2211 = vmul.f32 %v2179, %v2179
        %v2212 = vmul.f32 %v2182, %v2182
        %v2213 = vsel %vm1101, %v2209, 0.0
        %2214 = vadd.xlane.f32.xlu0 %v2213
        %v2215 = vpop.xlane.xlu0 %2214
        %v2216 = vsel %vm1101, %v2210, 0.0
        %2217 = vadd.xlane.f32.xlu0 %v2216
        %v2218 = vpop.xlane.xlu0 %2217
        %v2219 = vsel %vm1101, %v2211, 0.0
        %2220 = vadd.xlane.f32.xlu0 %v2219
        %v2221 = vpop.xlane.xlu0 %2220
        %v2222 = vsel %vm1101, %v2212, 0.0
        %2223 = vadd.xlane.f32.xlu0 %v2222
        %v2224 = vpop.xlane.xlu0 %2223
        %v2225 = vmul.f32 %v2215, 0.5
        %v2226 = vmul.f32 %v2218, 0.5
        %v2227 = vmul.f32 %v2221, 0.5
        %v2228 = vmul.f32 %v2224, 0.5
        %v2229 = vadd.f32 %v2205, %v2225
        %v2230 = vadd.f32 %v2206, %v2226
        %v2231 = vadd.f32 %v2207, %v2227
        %v2232 = vadd.f32 %v2208, %v2228
        %v2233 = vstv %s1896
        %v2234 = vmul.f32 %v2229, %v2233
        %v2235 = vmul.f32 %v2230, %v2233
        %v2236 = vmul.f32 %v2231, %v2233
        %v2237 = vmul.f32 %v2232, %v2233
        %v2238 = vsub.f32 %v1909, %v2234
        %v2239 = vsub.f32 %v1910, %v2235
        %v2240 = vsub.f32 %v1911, %v2236
        %v2241 = vsub.f32 %v1912, %v2237
        %s2242 = smul.f32 %s1897, 0.5
        %v2243 = vmul.f32 %v2173, %v1899
        %v2244 = vmul.f32 %v2176, %v1900
        %v2245 = vmul.f32 %v2179, %v1901
        %v2246 = vmul.f32 %v2182, %v1902
        %v2247 = vsel %vm1101, %v2243, 0.0
        %2248 = vadd.xlane.f32.xlu0 %v2247
        %v2249 = vpop.xlane.xlu0 %2248
        %v2250 = vsel %vm1101, %v2244, 0.0
        %2251 = vadd.xlane.f32.xlu0 %v2250
        %v2252 = vpop.xlane.xlu0 %2251
        %v2253 = vsel %vm1101, %v2245, 0.0
        %2254 = vadd.xlane.f32.xlu0 %v2253
        %v2255 = vpop.xlane.xlu0 %2254
        %v2256 = vsel %vm1101, %v2246, 0.0
        %2257 = vadd.xlane.f32.xlu0 %v2256
        %v2258 = vpop.xlane.xlu0 %2257
        %v2259 = vstv %s2242
        %v2260 = vmul.f32 %v2259, %v2249
        %v2261 = vmul.f32 %v2259, %v2252
        %v2262 = vmul.f32 %v2259, %v2255
        %v2263 = vmul.f32 %v2259, %v2258
        %v2264 = vadd.f32 %v2238, %v2260
        %v2265 = vadd.f32 %v2239, %v2261
        %v2266 = vadd.f32 %v2240, %v2262
        %v2267 = vadd.f32 %v2241, %v2263
        %v2268 = vmul.f32 %v2173, %v2233
        %v2269 = vmul.f32 %v2176, %v2233
        %v2270 = vmul.f32 %v2179, %v2233
        %v2271 = vmul.f32 %v2182, %v2233
        %v2272 = vsub.f32 %v1905, %v2268
        %v2273 = vsub.f32 %v1906, %v2269
        %v2274 = vsub.f32 %v1907, %v2270
        %v2275 = vsub.f32 %v1908, %v2271
        %v2276 = vmul.f32 %v2259, %v1899
        %v2277 = vmul.f32 %v2259, %v1900
        %v2278 = vmul.f32 %v2259, %v1901
        %v2279 = vmul.f32 %v2259, %v1902
        %v2280 = vadd.f32 %v2272, %v2276
        %v2281 = vadd.f32 %v2273, %v2277
        %v2282 = vadd.f32 %v2274, %v2278
        %v2283 = vadd.f32 %v2275, %v2279
        %2284 = vst.msk [vmem:[%s10] sm:$0xff] %vm1479, %v2264
        %2285 = vst.msk [vmem:[%s10 + $0x8] sm:$0xff] %vm1479, %v2265
        %2286 = vst.msk [vmem:[%s10 + $0x10] sm:$0xff] %vm1479, %v2266
        %2287 = vst.msk [vmem:[%s10 + $0x18] sm:$0xff] %vm1479, %v2267
        %2288 = vst.msk [vmem:[%s11] sm:$0xff] %vm1101, %v2280
        %2289 = vst.msk [vmem:[%s11 + $0x8] sm:$0xff] %vm1101, %v2281
        %2290 = vst.msk [vmem:[%s11 + $0x10] sm:$0xff] %vm1101, %v2282
        %2291 = vst.msk [vmem:[%s11 + $0x18] sm:$0xff] %vm1101, %v2283
        %s2292 = scalar_lea.vmem %s537, 96
        %2293 = vst.msk [vmem:[%s2292] sm:$0xff] %vm1101, %v2280
        %2294 = vst.msk [vmem:[%s2292 + $0x8] sm:$0xff] %vm1101, %v2281
        %2295 = vst.msk [vmem:[%s2292 + $0x10] sm:$0xff] %vm1101, %v2282
        %2296 = vst.msk [vmem:[%s2292 + $0x18] sm:$0xff] %vm1101, %v2283
        %s2297 = sadd.s32 %s1079, 4
        %p2298 = scmp.lt.s32.totalorder %s2297, 20
        // Predicated region
        $region77: #{tpu_custom_call.1} parent=59 // pred_check
          %p2299 = pneg %p2298
        $region78: #{tpu_custom_call.1} parent=59 // pred_check_branch
          %2301 = sbr.rel (%p2299) target = $region80
        $region79: #{tpu_custom_call.1} parent=59 // pred_region
          %s2302 = sld [smem:[#allocation3 + %s2297]]
          %s2303 = sld [smem:[#allocation5 + %s2297]]
          %s2304 = scalar_lea.vmem %s504, 128
          %v2305 = vld [vmem:[%s2304] sm:$0xff]
          %v2306 = vld [vmem:[%s2304 + $0x8] sm:$0xff]
          %v2307 = vld [vmem:[%s2304 + $0x10] sm:$0xff]
          %v2308 = vld [vmem:[%s2304 + $0x18] sm:$0xff]
          %s2309 = scalar_lea.vmem %s510, 32
          %v2310 = vld [vmem:[%s2309] sm:$0xff]
          %v2311 = vld [vmem:[%s11] sm:$0xff]
          %v2312 = vld [vmem:[%s11 + $0x8] sm:$0xff]
          %v2313 = vld [vmem:[%s11 + $0x10] sm:$0xff]
          %v2314 = vld [vmem:[%s11 + $0x18] sm:$0xff]
          %v2315 = vld [vmem:[%s10] sm:$0xff]
          %v2316 = vld [vmem:[%s10 + $0x8] sm:$0xff]
          %v2317 = vld [vmem:[%s10 + $0x10] sm:$0xff]
          %v2318 = vld [vmem:[%s10 + $0x18] sm:$0xff]
          %s2319 = scalar_lea.vmem %s516, 32
          %v2320 = vld [vmem:[%s2319] sm:$0x3f]
          %v2321 = vperm.slane %v2310, 1
          %v2323 = vsel %vm1101, %v2311, 0
          %v2326 = vsel %vm1101, %v2312, 0
          %v2329 = vsel %vm1101, %v2313, 0
          %v2332 = vsel %vm1101, %v2314, 0
          %v2335 = vsel %vm1114, %v2320, 0
          %2337 = vmatpush.msra.mxu0 0.0
          %2338 = vmatpush.msra.mxu0 0.0
          %2339 = vmatpush.msra.mxu0 0.0
          %2340 = vmatpush.msra.mxu0 0.0
          %2341 = vmatpush.msra.mxu0 0.0
          %2342 = vmatpush.msra.mxu0 0.0
          %2343 = vmatpush.msra.mxu0 0.0
          %2344 = vmatpush.msra.mxu0 0.0
          %2345 = vmatpush.msra.mxu0 0.0
          %2346 = vmatpush.msra.mxu0 0.0
          %2347 = vmatpush.msra.mxu0 0.0
          %2348 = vmatpush.msra.mxu0 0.0
          %2349 = vmatpush.msra.mxu0 0.0
          %2350 = vmatpush.msra.mxu0 0.0
          %2351 = vmatpush.msra.mxu0 0.0
          %2352 = vmatpush.msra.mxu0 %v2335
          %2353 = vmatmul.f32.gmra.mxu0 %v2323
          %v2354 = vpop.f32.mrf.mxu0
          %v2355 = vadd.f32 %v2321, %v2354
          %2356 = vmatmul.f32.gmra.mxu0 %v2326
          %v2357 = vpop.f32.mrf.mxu0
          %v2358 = vadd.f32 %v2321, %v2357
          %2359 = vmatmul.f32.gmra.mxu0 %v2329
          %v2360 = vpop.f32.mrf.mxu0
          %v2361 = vadd.f32 %v2321, %v2360
          %2362 = vmatmul.f32.gmra.mxu0 %v2332
          %v2363 = vpop.f32.mrf.mxu0
          %v2364 = vadd.f32 %v2321, %v2363
          %2365 = vdwg.mxu0
          %v2366 = vsel %vm1147, %v2355, 0.0
          %v2367 = vsel %vm1147, %v2358, 0.0
          %v2368 = vadd.f32 %v2366, %v2367
          %v2369 = vsel %vm1147, %v2361, 0.0
          %v2370 = vadd.f32 %v2368, %v2369
          %v2371 = vsel %vm1147, %v2364, 0.0
          %v2372 = vadd.f32 %v2370, %v2371
          %v2373 = vrot.slane %v2372, 4
          %v2374 = vadd.f32 %v2372, %v2373
          %v2375 = vrot.slane %v2374, 2
          %v2376 = vadd.f32 %v2374, %v2375
          %v2377 = vrot.slane %v2376, 1
          %v2378 = vadd.f32 %v2376, %v2377
          %v2379 = vmul.f32 %v2378, %v1167
          %v2380 = vmul.f32 %v2355, %v2355
          %v2381 = vmul.f32 %v2358, %v2358
          %v2382 = vmul.f32 %v2361, %v2361
          %v2383 = vmul.f32 %v2364, %v2364
          %v2384 = vsel %vm1147, %v2380, 0.0
          %v2385 = vsel %vm1147, %v2381, 0.0
          %v2386 = vadd.f32 %v2384, %v2385
          %v2387 = vsel %vm1147, %v2382, 0.0
          %v2388 = vadd.f32 %v2386, %v2387
          %v2389 = vsel %vm1147, %v2383, 0.0
          %v2390 = vadd.f32 %v2388, %v2389
          %v2391 = vrot.slane %v2390, 4
          %v2392 = vadd.f32 %v2390, %v2391
          %v2393 = vrot.slane %v2392, 2
          %v2394 = vadd.f32 %v2392, %v2393
          %v2395 = vrot.slane %v2394, 1
          %v2396 = vadd.f32 %v2394, %v2395
          %v2397 = vmul.f32 %v2396, %v1167
          %v2398 = vmul.f32 %v2379, %v2379
          %v2399 = vsub.f32 %v2397, %v2398
          %v2400 = vsub.f32 %v2355, %v2379
          %v2401 = vsub.f32 %v2358, %v2379
          %v2402 = vsub.f32 %v2361, %v2379
          %v2403 = vsub.f32 %v2364, %v2379
          %v2404 = vadd.f32 %v2399, 1e-05
          %v2405 = vrsqrt.pop %v2404
          %v2406 = vmul.f32 %v2405, %v2404
          %v2407 = vmul.f32 %v2406, %v2405
          %v2408 = vmul.f32 0.5, %v2407
          %v2409 = vsub.f32 1.5, %v2408
          %v2410 = vmul.f32 %v2405, %v2409
          %vm2411 = vweird.f32 %v2404
          %vm2412 = vweird.f32 %v2405
          %vm2413 = vmor %vm2411, %vm2412
          %v2414 = vsel %vm2413, %v2405, %v2410
          %v2415 = vmul.f32 %v2400, %v2414
          %v2416 = vmul.f32 %v2401, %v2414
          %v2417 = vmul.f32 %v2402, %v2414
          %v2418 = vmul.f32 %v2403, %v2414
          %v2419 = vperm.slane %v2310, 2
          %v2420 = vmul.f32 %v2415, %v2419
          %v2421 = vmul.f32 %v2416, %v2419
          %v2422 = vmul.f32 %v2417, %v2419
          %v2423 = vmul.f32 %v2418, %v2419
          %v2424 = vperm.slane %v2310, 3
          %v2425 = vadd.f32 %v2420, %v2424
          %v2426 = vadd.f32 %v2421, %v2424
          %v2427 = vadd.f32 %v2422, %v2424
          %v2428 = vadd.f32 %v2423, %v2424
          %v2429 = vmax.f32 %v2425, 0.0
          %v2430 = vmax.f32 %v2426, 0.0
          %v2431 = vmax.f32 %v2427, 0.0
          %v2432 = vmax.f32 %v2428, 0.0
          %s2433 = scalar_lea.vmem %s523, 64
          %v2434 = vld [vmem:[%s2433] sm:$0xff]
          %v2435 = vld [vmem:[%s2433 + $0x8] sm:$0xff]
          %v2436 = vperm.slane %v2310, 4
          %v2438 = vsel %vm1147, %v2429, 0
          %v2441 = vsel %vm1147, %v2430, 0
          %v2444 = vsel %vm1147, %v2431, 0
          %v2447 = vsel %vm1147, %v2432, 0
          %2449 = vmatpush.msra.mxu0 0.0
          %2450 = vmatpush.msra.mxu0 0.0
          %2451 = vmatpush.msra.mxu0 0.0
          %2452 = vmatpush.msra.mxu0 0.0
          %2453 = vmatpush.msra.mxu0 0.0
          %2454 = vmatpush.msra.mxu0 0.0
          %2455 = vmatpush.msra.mxu0 0.0
          %2456 = vmatpush.msra.mxu0 0.0
          %2457 = vmatpush.msra.mxu0 0.0
          %2458 = vmatpush.msra.mxu0 0.0
          %2459 = vmatpush.msra.mxu0 0.0
          %2460 = vmatpush.msra.mxu0 0.0
          %2461 = vmatpush.msra.mxu0 0.0
          %2462 = vmatpush.msra.mxu0 0.0
          %2463 = vmatpush.msra.mxu0 %v2435
          %2464 = vmatpush.msra.mxu0 %v2434
          %2465 = vmatmul.f32.gmra.mxu0 %v2438
          %v2466 = vpop.f32.mrf.mxu0
          %v2467 = vadd.f32 %v2436, %v2466
          %2468 = vmatmul.f32.gmra.mxu0 %v2441
          %v2469 = vpop.f32.mrf.mxu0
          %v2470 = vadd.f32 %v2436, %v2469
          %2471 = vmatmul.f32.gmra.mxu0 %v2444
          %v2472 = vpop.f32.mrf.mxu0
          %v2473 = vadd.f32 %v2436, %v2472
          %2474 = vmatmul.f32.gmra.mxu0 %v2447
          %v2475 = vpop.f32.mrf.mxu0
          %v2476 = vadd.f32 %v2436, %v2475
          %2477 = vdwg.mxu0
          %v2478 = vsel %vm1147, %v2467, 0.0
          %v2479 = vsel %vm1147, %v2470, 0.0
          %v2480 = vadd.f32 %v2478, %v2479
          %v2481 = vsel %vm1147, %v2473, 0.0
          %v2482 = vadd.f32 %v2480, %v2481
          %v2483 = vsel %vm1147, %v2476, 0.0
          %v2484 = vadd.f32 %v2482, %v2483
          %v2485 = vrot.slane %v2484, 4
          %v2486 = vadd.f32 %v2484, %v2485
          %v2487 = vrot.slane %v2486, 2
          %v2488 = vadd.f32 %v2486, %v2487
          %v2489 = vrot.slane %v2488, 1
          %v2490 = vadd.f32 %v2488, %v2489
          %v2491 = vmul.f32 %v2490, %v1167
          %v2492 = vmul.f32 %v2467, %v2467
          %v2493 = vmul.f32 %v2470, %v2470
          %v2494 = vmul.f32 %v2473, %v2473
          %v2495 = vmul.f32 %v2476, %v2476
          %v2496 = vsel %vm1147, %v2492, 0.0
          %v2497 = vsel %vm1147, %v2493, 0.0
          %v2498 = vadd.f32 %v2496, %v2497
          %v2499 = vsel %vm1147, %v2494, 0.0
          %v2500 = vadd.f32 %v2498, %v2499
          %v2501 = vsel %vm1147, %v2495, 0.0
          %v2502 = vadd.f32 %v2500, %v2501
          %v2503 = vrot.slane %v2502, 4
          %v2504 = vadd.f32 %v2502, %v2503
          %v2505 = vrot.slane %v2504, 2
          %v2506 = vadd.f32 %v2504, %v2505
          %v2507 = vrot.slane %v2506, 1
          %v2508 = vadd.f32 %v2506, %v2507
          %v2509 = vmul.f32 %v2508, %v1167
          %v2510 = vmul.f32 %v2491, %v2491
          %v2511 = vsub.f32 %v2509, %v2510
          %v2512 = vsub.f32 %v2467, %v2491
          %v2513 = vsub.f32 %v2470, %v2491
          %v2514 = vsub.f32 %v2473, %v2491
          %v2515 = vsub.f32 %v2476, %v2491
          %v2516 = vadd.f32 %v2511, 1e-05
          %v2517 = vrsqrt.pop %v2516
          %v2518 = vmul.f32 %v2517, %v2516
          %v2519 = vmul.f32 %v2518, %v2517
          %v2520 = vmul.f32 0.5, %v2519
          %v2521 = vsub.f32 1.5, %v2520
          %v2522 = vmul.f32 %v2517, %v2521
          %vm2523 = vweird.f32 %v2516
          %vm2524 = vweird.f32 %v2517
          %vm2525 = vmor %vm2523, %vm2524
          %v2526 = vsel %vm2525, %v2517, %v2522
          %v2527 = vmul.f32 %v2512, %v2526
          %v2528 = vmul.f32 %v2513, %v2526
          %v2529 = vmul.f32 %v2514, %v2526
          %v2530 = vmul.f32 %v2515, %v2526
          %v2531 = vperm.slane %v2310, 5
          %v2532 = vmul.f32 %v2527, %v2531
          %v2533 = vmul.f32 %v2528, %v2531
          %v2534 = vmul.f32 %v2529, %v2531
          %v2535 = vmul.f32 %v2530, %v2531
          %v2536 = vperm.slane %v2310, 6
          %v2537 = vadd.f32 %v2532, %v2536
          %v2538 = vadd.f32 %v2533, %v2536
          %v2539 = vadd.f32 %v2534, %v2536
          %v2540 = vadd.f32 %v2535, %v2536
          %v2541 = vmax.f32 %v2537, 0.0
          %v2542 = vmax.f32 %v2538, 0.0
          %v2543 = vmax.f32 %v2539, 0.0
          %v2544 = vmax.f32 %v2540, 0.0
          %s2545 = scalar_lea.vmem %s530, 64
          %v2546 = vld [vmem:[%s2545] sm:$0xff]
          %v2547 = vld [vmem:[%s2545 + $0x8] sm:$0xff]
          %v2548 = vperm.slane %v2310, 7
          %v2550 = vsel %vm1147, %v2541, 0
          %v2553 = vsel %vm1147, %v2542, 0
          %v2556 = vsel %vm1147, %v2543, 0
          %v2559 = vsel %vm1147, %v2544, 0
          %2561 = vmatpush.msra.mxu0 0.0
          %2562 = vmatpush.msra.mxu0 0.0
          %2563 = vmatpush.msra.mxu0 0.0
          %2564 = vmatpush.msra.mxu0 0.0
          %2565 = vmatpush.msra.mxu0 0.0
          %2566 = vmatpush.msra.mxu0 0.0
          %2567 = vmatpush.msra.mxu0 0.0
          %2568 = vmatpush.msra.mxu0 0.0
          %2569 = vmatpush.msra.mxu0 0.0
          %2570 = vmatpush.msra.mxu0 0.0
          %2571 = vmatpush.msra.mxu0 0.0
          %2572 = vmatpush.msra.mxu0 0.0
          %2573 = vmatpush.msra.mxu0 0.0
          %2574 = vmatpush.msra.mxu0 0.0
          %2575 = vmatpush.msra.mxu0 %v2547
          %2576 = vmatpush.msra.mxu0 %v2546
          %2577 = vmatmul.f32.gmra.mxu0 %v2550
          %v2578 = vpop.f32.mrf.mxu0
          %v2579 = vadd.f32 %v2548, %v2578
          %2580 = vmatmul.f32.gmra.mxu0 %v2553
          %v2581 = vpop.f32.mrf.mxu0
          %v2582 = vadd.f32 %v2548, %v2581
          %2583 = vmatmul.f32.gmra.mxu0 %v2556
          %v2584 = vpop.f32.mrf.mxu0
          %v2585 = vadd.f32 %v2548, %v2584
          %2586 = vmatmul.f32.gmra.mxu0 %v2559
          %v2587 = vpop.f32.mrf.mxu0
          %v2588 = vadd.f32 %v2548, %v2587
          %2589 = vdwg.mxu0
          %v2590 = vperm.slane %v2310, 0
          %v2591 = vsub.f32 %v2311, %v2590
          %v2592 = vsub.f32 %v2312, %v2590
          %v2593 = vsub.f32 %v2313, %v2590
          %v2594 = vsub.f32 %v2314, %v2590
          %v2595 = vmul.f32 %v2591, %v2591
          %v2596 = vmul.f32 %v2592, %v2592
          %v2597 = vmul.f32 %v2593, %v2593
          %v2598 = vmul.f32 %v2594, %v2594
          %v2599 = vsel %vm1101, %v2595, 0.0
          %2600 = vadd.xlane.f32.xlu0 %v2599
          %v2601 = vpop.xlane.xlu0 %2600
          %v2602 = vsel %vm1101, %v2596, 0.0
          %2603 = vadd.xlane.f32.xlu0 %v2602
          %v2604 = vpop.xlane.xlu0 %2603
          %v2605 = vsel %vm1101, %v2597, 0.0
          %2606 = vadd.xlane.f32.xlu0 %v2605
          %v2607 = vpop.xlane.xlu0 %2606
          %v2608 = vsel %vm1101, %v2598, 0.0
          %2609 = vadd.xlane.f32.xlu0 %v2608
          %v2610 = vpop.xlane.xlu0 %2609
          %v2611 = vmul.f32 %v2601, 0.32
          %v2612 = vmul.f32 %v2604, 0.32
          %v2613 = vmul.f32 %v2607, 0.32
          %v2614 = vmul.f32 %v2610, 0.32
          %v2615 = vmul.f32 %v2579, %v2579
          %v2616 = vmul.f32 %v2582, %v2582
          %v2617 = vmul.f32 %v2585, %v2585
          %v2618 = vmul.f32 %v2588, %v2588
          %v2619 = vsel %vm1101, %v2615, 0.0
          %2620 = vadd.xlane.f32.xlu0 %v2619
          %v2621 = vpop.xlane.xlu0 %2620
          %v2622 = vsel %vm1101, %v2616, 0.0
          %2623 = vadd.xlane.f32.xlu0 %v2622
          %v2624 = vpop.xlane.xlu0 %2623
          %v2625 = vsel %vm1101, %v2617, 0.0
          %2626 = vadd.xlane.f32.xlu0 %v2625
          %v2627 = vpop.xlane.xlu0 %2626
          %v2628 = vsel %vm1101, %v2618, 0.0
          %2629 = vadd.xlane.f32.xlu0 %v2628
          %v2630 = vpop.xlane.xlu0 %2629
          %v2631 = vmul.f32 %v2621, 0.5
          %v2632 = vmul.f32 %v2624, 0.5
          %v2633 = vmul.f32 %v2627, 0.5
          %v2634 = vmul.f32 %v2630, 0.5
          %v2635 = vadd.f32 %v2611, %v2631
          %v2636 = vadd.f32 %v2612, %v2632
          %v2637 = vadd.f32 %v2613, %v2633
          %v2638 = vadd.f32 %v2614, %v2634
          %v2639 = vstv %s2302
          %v2640 = vmul.f32 %v2635, %v2639
          %v2641 = vmul.f32 %v2636, %v2639
          %v2642 = vmul.f32 %v2637, %v2639
          %v2643 = vmul.f32 %v2638, %v2639
          %v2644 = vsub.f32 %v2315, %v2640
          %v2645 = vsub.f32 %v2316, %v2641
          %v2646 = vsub.f32 %v2317, %v2642
          %v2647 = vsub.f32 %v2318, %v2643
          %s2648 = smul.f32 %s2303, 0.5
          %v2649 = vmul.f32 %v2579, %v2305
          %v2650 = vmul.f32 %v2582, %v2306
          %v2651 = vmul.f32 %v2585, %v2307
          %v2652 = vmul.f32 %v2588, %v2308
          %v2653 = vsel %vm1101, %v2649, 0.0
          %2654 = vadd.xlane.f32.xlu0 %v2653
          %v2655 = vpop.xlane.xlu0 %2654
          %v2656 = vsel %vm1101, %v2650, 0.0
          %2657 = vadd.xlane.f32.xlu0 %v2656
          %v2658 = vpop.xlane.xlu0 %2657
          %v2659 = vsel %vm1101, %v2651, 0.0
          %2660 = vadd.xlane.f32.xlu0 %v2659
          %v2661 = vpop.xlane.xlu0 %2660
          %v2662 = vsel %vm1101, %v2652, 0.0
          %2663 = vadd.xlane.f32.xlu0 %v2662
          %v2664 = vpop.xlane.xlu0 %2663
          %v2665 = vstv %s2648
          %v2666 = vmul.f32 %v2665, %v2655
          %v2667 = vmul.f32 %v2665, %v2658
          %v2668 = vmul.f32 %v2665, %v2661
          %v2669 = vmul.f32 %v2665, %v2664
          %v2670 = vadd.f32 %v2644, %v2666
          %v2671 = vadd.f32 %v2645, %v2667
          %v2672 = vadd.f32 %v2646, %v2668
          %v2673 = vadd.f32 %v2647, %v2669
          %v2674 = vmul.f32 %v2579, %v2639
          %v2675 = vmul.f32 %v2582, %v2639
          %v2676 = vmul.f32 %v2585, %v2639
          %v2677 = vmul.f32 %v2588, %v2639
          %v2678 = vsub.f32 %v2311, %v2674
          %v2679 = vsub.f32 %v2312, %v2675
          %v2680 = vsub.f32 %v2313, %v2676
          %v2681 = vsub.f32 %v2314, %v2677
          %v2682 = vmul.f32 %v2665, %v2305
          %v2683 = vmul.f32 %v2665, %v2306
          %v2684 = vmul.f32 %v2665, %v2307
          %v2685 = vmul.f32 %v2665, %v2308
          %v2686 = vadd.f32 %v2678, %v2682
          %v2687 = vadd.f32 %v2679, %v2683
          %v2688 = vadd.f32 %v2680, %v2684
          %v2689 = vadd.f32 %v2681, %v2685
          %2690 = vst.msk [vmem:[%s10] sm:$0xff] %vm1479, %v2670
          %2691 = vst.msk [vmem:[%s10 + $0x8] sm:$0xff] %vm1479, %v2671
          %2692 = vst.msk [vmem:[%s10 + $0x10] sm:$0xff] %vm1479, %v2672
          %2693 = vst.msk [vmem:[%s10 + $0x18] sm:$0xff] %vm1479, %v2673
          %2694 = vst.msk [vmem:[%s11] sm:$0xff] %vm1101, %v2686
          %2695 = vst.msk [vmem:[%s11 + $0x8] sm:$0xff] %vm1101, %v2687
          %2696 = vst.msk [vmem:[%s11 + $0x10] sm:$0xff] %vm1101, %v2688
          %2697 = vst.msk [vmem:[%s11 + $0x18] sm:$0xff] %vm1101, %v2689
          %s2698 = scalar_lea.vmem %s537, 128
          %2699 = vst.msk [vmem:[%s2698] sm:$0xff] %vm1101, %v2686
          %2700 = vst.msk [vmem:[%s2698 + $0x8] sm:$0xff] %vm1101, %v2687
          %2701 = vst.msk [vmem:[%s2698 + $0x10] sm:$0xff] %vm1101, %v2688
          %2702 = vst.msk [vmem:[%s2698 + $0x18] sm:$0xff] %vm1101, %v2689
        $region80: #{tpu_custom_call.1} parent=59 // pred_fallthru
          _
        %s2703 = sadd.s32 %s1079, 5
        %p2704 = scmp.lt.s32.totalorder %s2703, 20
        // Predicated region
        $region81: #{tpu_custom_call.1} parent=59 // pred_check
          %p2705 = pneg %p2704
        $region82: #{tpu_custom_call.1} parent=59 // pred_check_branch
          %2707 = sbr.rel (%p2705) target = $region84
        $region83: #{tpu_custom_call.1} parent=59 // pred_region
          %s2708 = sld [smem:[#allocation3 + %s2703]]
          %s2709 = sld [smem:[#allocation5 + %s2703]]
          %s2710 = scalar_lea.vmem %s504, 160
          %v2711 = vld [vmem:[%s2710] sm:$0xff]
          %v2712 = vld [vmem:[%s2710 + $0x8] sm:$0xff]
          %v2713 = vld [vmem:[%s2710 + $0x10] sm:$0xff]
          %v2714 = vld [vmem:[%s2710 + $0x18] sm:$0xff]
          %s2715 = scalar_lea.vmem %s510, 40
          %v2716 = vld [vmem:[%s2715] sm:$0xff]
          %v2717 = vld [vmem:[%s11] sm:$0xff]
          %v2718 = vld [vmem:[%s11 + $0x8] sm:$0xff]
          %v2719 = vld [vmem:[%s11 + $0x10] sm:$0xff]
          %v2720 = vld [vmem:[%s11 + $0x18] sm:$0xff]
          %v2721 = vld [vmem:[%s10] sm:$0xff]
          %v2722 = vld [vmem:[%s10 + $0x8] sm:$0xff]
          %v2723 = vld [vmem:[%s10 + $0x10] sm:$0xff]
          %v2724 = vld [vmem:[%s10 + $0x18] sm:$0xff]
          %s2725 = scalar_lea.vmem %s516, 40
          %v2726 = vld [vmem:[%s2725] sm:$0x3f]
          %v2727 = vperm.slane %v2716, 1
          %v2729 = vsel %vm1101, %v2717, 0
          %v2732 = vsel %vm1101, %v2718, 0
          %v2735 = vsel %vm1101, %v2719, 0
          %v2738 = vsel %vm1101, %v2720, 0
          %v2741 = vsel %vm1114, %v2726, 0
          %2743 = vmatpush.msra.mxu0 0.0
          %2744 = vmatpush.msra.mxu0 0.0
          %2745 = vmatpush.msra.mxu0 0.0
          %2746 = vmatpush.msra.mxu0 0.0
          %2747 = vmatpush.msra.mxu0 0.0
          %2748 = vmatpush.msra.mxu0 0.0
          %2749 = vmatpush.msra.mxu0 0.0
          %2750 = vmatpush.msra.mxu0 0.0
          %2751 = vmatpush.msra.mxu0 0.0
          %2752 = vmatpush.msra.mxu0 0.0
          %2753 = vmatpush.msra.mxu0 0.0
          %2754 = vmatpush.msra.mxu0 0.0
          %2755 = vmatpush.msra.mxu0 0.0
          %2756 = vmatpush.msra.mxu0 0.0
          %2757 = vmatpush.msra.mxu0 0.0
          %2758 = vmatpush.msra.mxu0 %v2741
          %2759 = vmatmul.f32.gmra.mxu0 %v2729
          %v2760 = vpop.f32.mrf.mxu0
          %v2761 = vadd.f32 %v2727, %v2760
          %2762 = vmatmul.f32.gmra.mxu0 %v2732
          %v2763 = vpop.f32.mrf.mxu0
          %v2764 = vadd.f32 %v2727, %v2763
          %2765 = vmatmul.f32.gmra.mxu0 %v2735
          %v2766 = vpop.f32.mrf.mxu0
          %v2767 = vadd.f32 %v2727, %v2766
          %2768 = vmatmul.f32.gmra.mxu0 %v2738
          %v2769 = vpop.f32.mrf.mxu0
          %v2770 = vadd.f32 %v2727, %v2769
          %2771 = vdwg.mxu0
          %v2772 = vsel %vm1147, %v2761, 0.0
          %v2773 = vsel %vm1147, %v2764, 0.0
          %v2774 = vadd.f32 %v2772, %v2773
          %v2775 = vsel %vm1147, %v2767, 0.0
          %v2776 = vadd.f32 %v2774, %v2775
          %v2777 = vsel %vm1147, %v2770, 0.0
          %v2778 = vadd.f32 %v2776, %v2777
          %v2779 = vrot.slane %v2778, 4
          %v2780 = vadd.f32 %v2778, %v2779
          %v2781 = vrot.slane %v2780, 2
          %v2782 = vadd.f32 %v2780, %v2781
          %v2783 = vrot.slane %v2782, 1
          %v2784 = vadd.f32 %v2782, %v2783
          %v2785 = vmul.f32 %v2784, %v1167
          %v2786 = vmul.f32 %v2761, %v2761
          %v2787 = vmul.f32 %v2764, %v2764
          %v2788 = vmul.f32 %v2767, %v2767
          %v2789 = vmul.f32 %v2770, %v2770
          %v2790 = vsel %vm1147, %v2786, 0.0
          %v2791 = vsel %vm1147, %v2787, 0.0
          %v2792 = vadd.f32 %v2790, %v2791
          %v2793 = vsel %vm1147, %v2788, 0.0
          %v2794 = vadd.f32 %v2792, %v2793
          %v2795 = vsel %vm1147, %v2789, 0.0
          %v2796 = vadd.f32 %v2794, %v2795
          %v2797 = vrot.slane %v2796, 4
          %v2798 = vadd.f32 %v2796, %v2797
          %v2799 = vrot.slane %v2798, 2
          %v2800 = vadd.f32 %v2798, %v2799
          %v2801 = vrot.slane %v2800, 1
          %v2802 = vadd.f32 %v2800, %v2801
          %v2803 = vmul.f32 %v2802, %v1167
          %v2804 = vmul.f32 %v2785, %v2785
          %v2805 = vsub.f32 %v2803, %v2804
          %v2806 = vsub.f32 %v2761, %v2785
          %v2807 = vsub.f32 %v2764, %v2785
          %v2808 = vsub.f32 %v2767, %v2785
          %v2809 = vsub.f32 %v2770, %v2785
          %v2810 = vadd.f32 %v2805, 1e-05
          %v2811 = vrsqrt.pop %v2810
          %v2812 = vmul.f32 %v2811, %v2810
          %v2813 = vmul.f32 %v2812, %v2811
          %v2814 = vmul.f32 0.5, %v2813
          %v2815 = vsub.f32 1.5, %v2814
          %v2816 = vmul.f32 %v2811, %v2815
          %vm2817 = vweird.f32 %v2810
          %vm2818 = vweird.f32 %v2811
          %vm2819 = vmor %vm2817, %vm2818
          %v2820 = vsel %vm2819, %v2811, %v2816
          %v2821 = vmul.f32 %v2806, %v2820
          %v2822 = vmul.f32 %v2807, %v2820
          %v2823 = vmul.f32 %v2808, %v2820
          %v2824 = vmul.f32 %v2809, %v2820
          %v2825 = vperm.slane %v2716, 2
          %v2826 = vmul.f32 %v2821, %v2825
          %v2827 = vmul.f32 %v2822, %v2825
          %v2828 = vmul.f32 %v2823, %v2825
          %v2829 = vmul.f32 %v2824, %v2825
          %v2830 = vperm.slane %v2716, 3
          %v2831 = vadd.f32 %v2826, %v2830
          %v2832 = vadd.f32 %v2827, %v2830
          %v2833 = vadd.f32 %v2828, %v2830
          %v2834 = vadd.f32 %v2829, %v2830
          %v2835 = vmax.f32 %v2831, 0.0
          %v2836 = vmax.f32 %v2832, 0.0
          %v2837 = vmax.f32 %v2833, 0.0
          %v2838 = vmax.f32 %v2834, 0.0
          %s2839 = scalar_lea.vmem %s523, 80
          %v2840 = vld [vmem:[%s2839] sm:$0xff]
          %v2841 = vld [vmem:[%s2839 + $0x8] sm:$0xff]
          %v2842 = vperm.slane %v2716, 4
          %v2844 = vsel %vm1147, %v2835, 0
          %v2847 = vsel %vm1147, %v2836, 0
          %v2850 = vsel %vm1147, %v2837, 0
          %v2853 = vsel %vm1147, %v2838, 0
          %2855 = vmatpush.msra.mxu0 0.0
          %2856 = vmatpush.msra.mxu0 0.0
          %2857 = vmatpush.msra.mxu0 0.0
          %2858 = vmatpush.msra.mxu0 0.0
          %2859 = vmatpush.msra.mxu0 0.0
          %2860 = vmatpush.msra.mxu0 0.0
          %2861 = vmatpush.msra.mxu0 0.0
          %2862 = vmatpush.msra.mxu0 0.0
          %2863 = vmatpush.msra.mxu0 0.0
          %2864 = vmatpush.msra.mxu0 0.0
          %2865 = vmatpush.msra.mxu0 0.0
          %2866 = vmatpush.msra.mxu0 0.0
          %2867 = vmatpush.msra.mxu0 0.0
          %2868 = vmatpush.msra.mxu0 0.0
          %2869 = vmatpush.msra.mxu0 %v2841
          %2870 = vmatpush.msra.mxu0 %v2840
          %2871 = vmatmul.f32.gmra.mxu0 %v2844
          %v2872 = vpop.f32.mrf.mxu0
          %v2873 = vadd.f32 %v2842, %v2872
          %2874 = vmatmul.f32.gmra.mxu0 %v2847
          %v2875 = vpop.f32.mrf.mxu0
          %v2876 = vadd.f32 %v2842, %v2875
          %2877 = vmatmul.f32.gmra.mxu0 %v2850
          %v2878 = vpop.f32.mrf.mxu0
          %v2879 = vadd.f32 %v2842, %v2878
          %2880 = vmatmul.f32.gmra.mxu0 %v2853
          %v2881 = vpop.f32.mrf.mxu0
          %v2882 = vadd.f32 %v2842, %v2881
          %2883 = vdwg.mxu0
          %v2884 = vsel %vm1147, %v2873, 0.0
          %v2885 = vsel %vm1147, %v2876, 0.0
          %v2886 = vadd.f32 %v2884, %v2885
          %v2887 = vsel %vm1147, %v2879, 0.0
          %v2888 = vadd.f32 %v2886, %v2887
          %v2889 = vsel %vm1147, %v2882, 0.0
          %v2890 = vadd.f32 %v2888, %v2889
          %v2891 = vrot.slane %v2890, 4
          %v2892 = vadd.f32 %v2890, %v2891
          %v2893 = vrot.slane %v2892, 2
          %v2894 = vadd.f32 %v2892, %v2893
          %v2895 = vrot.slane %v2894, 1
          %v2896 = vadd.f32 %v2894, %v2895
          %v2897 = vmul.f32 %v2896, %v1167
          %v2898 = vmul.f32 %v2873, %v2873
          %v2899 = vmul.f32 %v2876, %v2876
          %v2900 = vmul.f32 %v2879, %v2879
          %v2901 = vmul.f32 %v2882, %v2882
          %v2902 = vsel %vm1147, %v2898, 0.0
          %v2903 = vsel %vm1147, %v2899, 0.0
          %v2904 = vadd.f32 %v2902, %v2903
          %v2905 = vsel %vm1147, %v2900, 0.0
          %v2906 = vadd.f32 %v2904, %v2905
          %v2907 = vsel %vm1147, %v2901, 0.0
          %v2908 = vadd.f32 %v2906, %v2907
          %v2909 = vrot.slane %v2908, 4
          %v2910 = vadd.f32 %v2908, %v2909
          %v2911 = vrot.slane %v2910, 2
          %v2912 = vadd.f32 %v2910, %v2911
          %v2913 = vrot.slane %v2912, 1
          %v2914 = vadd.f32 %v2912, %v2913
          %v2915 = vmul.f32 %v2914, %v1167
          %v2916 = vmul.f32 %v2897, %v2897
          %v2917 = vsub.f32 %v2915, %v2916
          %v2918 = vsub.f32 %v2873, %v2897
          %v2919 = vsub.f32 %v2876, %v2897
          %v2920 = vsub.f32 %v2879, %v2897
          %v2921 = vsub.f32 %v2882, %v2897
          %v2922 = vadd.f32 %v2917, 1e-05
          %v2923 = vrsqrt.pop %v2922
          %v2924 = vmul.f32 %v2923, %v2922
          %v2925 = vmul.f32 %v2924, %v2923
          %v2926 = vmul.f32 0.5, %v2925
          %v2927 = vsub.f32 1.5, %v2926
          %v2928 = vmul.f32 %v2923, %v2927
          %vm2929 = vweird.f32 %v2922
          %vm2930 = vweird.f32 %v2923
          %vm2931 = vmor %vm2929, %vm2930
          %v2932 = vsel %vm2931, %v2923, %v2928
          %v2933 = vmul.f32 %v2918, %v2932
          %v2934 = vmul.f32 %v2919, %v2932
          %v2935 = vmul.f32 %v2920, %v2932
          %v2936 = vmul.f32 %v2921, %v2932
          %v2937 = vperm.slane %v2716, 5
          %v2938 = vmul.f32 %v2933, %v2937
          %v2939 = vmul.f32 %v2934, %v2937
          %v2940 = vmul.f32 %v2935, %v2937
          %v2941 = vmul.f32 %v2936, %v2937
          %v2942 = vperm.slane %v2716, 6
          %v2943 = vadd.f32 %v2938, %v2942
          %v2944 = vadd.f32 %v2939, %v2942
          %v2945 = vadd.f32 %v2940, %v2942
          %v2946 = vadd.f32 %v2941, %v2942
          %v2947 = vmax.f32 %v2943, 0.0
          %v2948 = vmax.f32 %v2944, 0.0
          %v2949 = vmax.f32 %v2945, 0.0
          %v2950 = vmax.f32 %v2946, 0.0
          %s2951 = scalar_lea.vmem %s530, 80
          %v2952 = vld [vmem:[%s2951] sm:$0xff]
          %v2953 = vld [vmem:[%s2951 + $0x8] sm:$0xff]
          %v2954 = vperm.slane %v2716, 7
          %v2956 = vsel %vm1147, %v2947, 0
          %v2959 = vsel %vm1147, %v2948, 0
          %v2962 = vsel %vm1147, %v2949, 0
          %v2965 = vsel %vm1147, %v2950, 0
          %2967 = vmatpush.msra.mxu0 0.0
          %2968 = vmatpush.msra.mxu0 0.0
          %2969 = vmatpush.msra.mxu0 0.0
          %2970 = vmatpush.msra.mxu0 0.0
          %2971 = vmatpush.msra.mxu0 0.0
          %2972 = vmatpush.msra.mxu0 0.0
          %2973 = vmatpush.msra.mxu0 0.0
          %2974 = vmatpush.msra.mxu0 0.0
          %2975 = vmatpush.msra.mxu0 0.0
          %2976 = vmatpush.msra.mxu0 0.0
          %2977 = vmatpush.msra.mxu0 0.0
          %2978 = vmatpush.msra.mxu0 0.0
          %2979 = vmatpush.msra.mxu0 0.0
          %2980 = vmatpush.msra.mxu0 0.0
          %2981 = vmatpush.msra.mxu0 %v2953
          %2982 = vmatpush.msra.mxu0 %v2952
          %2983 = vmatmul.f32.gmra.mxu0 %v2956
          %v2984 = vpop.f32.mrf.mxu0
          %v2985 = vadd.f32 %v2954, %v2984
          %2986 = vmatmul.f32.gmra.mxu0 %v2959
          %v2987 = vpop.f32.mrf.mxu0
          %v2988 = vadd.f32 %v2954, %v2987
          %2989 = vmatmul.f32.gmra.mxu0 %v2962
          %v2990 = vpop.f32.mrf.mxu0
          %v2991 = vadd.f32 %v2954, %v2990
          %2992 = vmatmul.f32.gmra.mxu0 %v2965
          %v2993 = vpop.f32.mrf.mxu0
          %v2994 = vadd.f32 %v2954, %v2993
          %2995 = vdwg.mxu0
          %v2996 = vperm.slane %v2716, 0
          %v2997 = vsub.f32 %v2717, %v2996
          %v2998 = vsub.f32 %v2718, %v2996
          %v2999 = vsub.f32 %v2719, %v2996
          %v3000 = vsub.f32 %v2720, %v2996
          %v3001 = vmul.f32 %v2997, %v2997
          %v3002 = vmul.f32 %v2998, %v2998
          %v3003 = vmul.f32 %v2999, %v2999
          %v3004 = vmul.f32 %v3000, %v3000
          %v3005 = vsel %vm1101, %v3001, 0.0
          %3006 = vadd.xlane.f32.xlu0 %v3005
          %v3007 = vpop.xlane.xlu0 %3006
          %v3008 = vsel %vm1101, %v3002, 0.0
          %3009 = vadd.xlane.f32.xlu0 %v3008
          %v3010 = vpop.xlane.xlu0 %3009
          %v3011 = vsel %vm1101, %v3003, 0.0
          %3012 = vadd.xlane.f32.xlu0 %v3011
          %v3013 = vpop.xlane.xlu0 %3012
          %v3014 = vsel %vm1101, %v3004, 0.0
          %3015 = vadd.xlane.f32.xlu0 %v3014
          %v3016 = vpop.xlane.xlu0 %3015
          %v3017 = vmul.f32 %v3007, 0.32
          %v3018 = vmul.f32 %v3010, 0.32
          %v3019 = vmul.f32 %v3013, 0.32
          %v3020 = vmul.f32 %v3016, 0.32
          %v3021 = vmul.f32 %v2985, %v2985
          %v3022 = vmul.f32 %v2988, %v2988
          %v3023 = vmul.f32 %v2991, %v2991
          %v3024 = vmul.f32 %v2994, %v2994
          %v3025 = vsel %vm1101, %v3021, 0.0
          %3026 = vadd.xlane.f32.xlu0 %v3025
          %v3027 = vpop.xlane.xlu0 %3026
          %v3028 = vsel %vm1101, %v3022, 0.0
          %3029 = vadd.xlane.f32.xlu0 %v3028
          %v3030 = vpop.xlane.xlu0 %3029
          %v3031 = vsel %vm1101, %v3023, 0.0
          %3032 = vadd.xlane.f32.xlu0 %v3031
          %v3033 = vpop.xlane.xlu0 %3032
          %v3034 = vsel %vm1101, %v3024, 0.0
          %3035 = vadd.xlane.f32.xlu0 %v3034
          %v3036 = vpop.xlane.xlu0 %3035
          %v3037 = vmul.f32 %v3027, 0.5
          %v3038 = vmul.f32 %v3030, 0.5
          %v3039 = vmul.f32 %v3033, 0.5
          %v3040 = vmul.f32 %v3036, 0.5
          %v3041 = vadd.f32 %v3017, %v3037
          %v3042 = vadd.f32 %v3018, %v3038
          %v3043 = vadd.f32 %v3019, %v3039
          %v3044 = vadd.f32 %v3020, %v3040
          %v3045 = vstv %s2708
          %v3046 = vmul.f32 %v3041, %v3045
          %v3047 = vmul.f32 %v3042, %v3045
          %v3048 = vmul.f32 %v3043, %v3045
          %v3049 = vmul.f32 %v3044, %v3045
          %v3050 = vsub.f32 %v2721, %v3046
          %v3051 = vsub.f32 %v2722, %v3047
          %v3052 = vsub.f32 %v2723, %v3048
          %v3053 = vsub.f32 %v2724, %v3049
          %s3054 = smul.f32 %s2709, 0.5
          %v3055 = vmul.f32 %v2985, %v2711
          %v3056 = vmul.f32 %v2988, %v2712
          %v3057 = vmul.f32 %v2991, %v2713
          %v3058 = vmul.f32 %v2994, %v2714
          %v3059 = vsel %vm1101, %v3055, 0.0
          %3060 = vadd.xlane.f32.xlu0 %v3059
          %v3061 = vpop.xlane.xlu0 %3060
          %v3062 = vsel %vm1101, %v3056, 0.0
          %3063 = vadd.xlane.f32.xlu0 %v3062
          %v3064 = vpop.xlane.xlu0 %3063
          %v3065 = vsel %vm1101, %v3057, 0.0
          %3066 = vadd.xlane.f32.xlu0 %v3065
          %v3067 = vpop.xlane.xlu0 %3066
          %v3068 = vsel %vm1101, %v3058, 0.0
          %3069 = vadd.xlane.f32.xlu0 %v3068
          %v3070 = vpop.xlane.xlu0 %3069
          %v3071 = vstv %s3054
          %v3072 = vmul.f32 %v3071, %v3061
          %v3073 = vmul.f32 %v3071, %v3064
          %v3074 = vmul.f32 %v3071, %v3067
          %v3075 = vmul.f32 %v3071, %v3070
          %v3076 = vadd.f32 %v3050, %v3072
          %v3077 = vadd.f32 %v3051, %v3073
          %v3078 = vadd.f32 %v3052, %v3074
          %v3079 = vadd.f32 %v3053, %v3075
          %v3080 = vmul.f32 %v2985, %v3045
          %v3081 = vmul.f32 %v2988, %v3045
          %v3082 = vmul.f32 %v2991, %v3045
          %v3083 = vmul.f32 %v2994, %v3045
          %v3084 = vsub.f32 %v2717, %v3080
          %v3085 = vsub.f32 %v2718, %v3081
          %v3086 = vsub.f32 %v2719, %v3082
          %v3087 = vsub.f32 %v2720, %v3083
          %v3088 = vmul.f32 %v3071, %v2711
          %v3089 = vmul.f32 %v3071, %v2712
          %v3090 = vmul.f32 %v3071, %v2713
          %v3091 = vmul.f32 %v3071, %v2714
          %v3092 = vadd.f32 %v3084, %v3088
          %v3093 = vadd.f32 %v3085, %v3089
          %v3094 = vadd.f32 %v3086, %v3090
          %v3095 = vadd.f32 %v3087, %v3091
          %3096 = vst.msk [vmem:[%s10] sm:$0xff] %vm1479, %v3076
          %3097 = vst.msk [vmem:[%s10 + $0x8] sm:$0xff] %vm1479, %v3077
          %3098 = vst.msk [vmem:[%s10 + $0x10] sm:$0xff] %vm1479, %v3078
          %3099 = vst.msk [vmem:[%s10 + $0x18] sm:$0xff] %vm1479, %v3079
          %3100 = vst.msk [vmem:[%s11] sm:$0xff] %vm1101, %v3092
          %3101 = vst.msk [vmem:[%s11 + $0x8] sm:$0xff] %vm1101, %v3093
          %3102 = vst.msk [vmem:[%s11 + $0x10] sm:$0xff] %vm1101, %v3094
          %3103 = vst.msk [vmem:[%s11 + $0x18] sm:$0xff] %vm1101, %v3095
          %s3104 = scalar_lea.vmem %s537, 160
          %3105 = vst.msk [vmem:[%s3104] sm:$0xff] %vm1101, %v3092
          %3106 = vst.msk [vmem:[%s3104 + $0x8] sm:$0xff] %vm1101, %v3093
          %3107 = vst.msk [vmem:[%s3104 + $0x10] sm:$0xff] %vm1101, %v3094
          %3108 = vst.msk [vmem:[%s3104 + $0x18] sm:$0xff] %vm1101, %v3095
        $region84: #{tpu_custom_call.1} parent=59 // pred_fallthru
          _
        %s3109 = sadd.s32 %s1079, 6
        %p3110 = scmp.lt.s32.totalorder %s3109, 20
        // Predicated region
        $region85: #{tpu_custom_call.1} parent=59 // pred_check
          %p3111 = pneg %p3110
        $region86: #{tpu_custom_call.1} parent=59 // pred_check_branch
          %3113 = sbr.rel (%p3111) target = $region88
        $region87: #{tpu_custom_call.1} parent=59 // pred_region
          %s3114 = sld [smem:[#allocation3 + %s3109]]
          %s3115 = sld [smem:[#allocation5 + %s3109]]
          %s3116 = scalar_lea.vmem %s504, 192
          %v3117 = vld [vmem:[%s3116] sm:$0xff]
          %v3118 = vld [vmem:[%s3116 + $0x8] sm:$0xff]
          %v3119 = vld [vmem:[%s3116 + $0x10] sm:$0xff]
          %v3120 = vld [vmem:[%s3116 + $0x18] sm:$0xff]
          %s3121 = scalar_lea.vmem %s510, 48
          %v3122 = vld [vmem:[%s3121] sm:$0xff]
          %v3123 = vld [vmem:[%s11] sm:$0xff]
          %v3124 = vld [vmem:[%s11 + $0x8] sm:$0xff]
          %v3125 = vld [vmem:[%s11 + $0x10] sm:$0xff]
          %v3126 = vld [vmem:[%s11 + $0x18] sm:$0xff]
          %v3127 = vld [vmem:[%s10] sm:$0xff]
          %v3128 = vld [vmem:[%s10 + $0x8] sm:$0xff]
          %v3129 = vld [vmem:[%s10 + $0x10] sm:$0xff]
          %v3130 = vld [vmem:[%s10 + $0x18] sm:$0xff]
          %s3131 = scalar_lea.vmem %s516, 48
          %v3132 = vld [vmem:[%s3131] sm:$0x3f]
          %v3133 = vperm.slane %v3122, 1
          %v3135 = vsel %vm1101, %v3123, 0
          %v3138 = vsel %vm1101, %v3124, 0
          %v3141 = vsel %vm1101, %v3125, 0
          %v3144 = vsel %vm1101, %v3126, 0
          %v3147 = vsel %vm1114, %v3132, 0
          %3149 = vmatpush.msra.mxu0 0.0
          %3150 = vmatpush.msra.mxu0 0.0
          %3151 = vmatpush.msra.mxu0 0.0
          %3152 = vmatpush.msra.mxu0 0.0
          %3153 = vmatpush.msra.mxu0 0.0
          %3154 = vmatpush.msra.mxu0 0.0
          %3155 = vmatpush.msra.mxu0 0.0
          %3156 = vmatpush.msra.mxu0 0.0
          %3157 = vmatpush.msra.mxu0 0.0
          %3158 = vmatpush.msra.mxu0 0.0
          %3159 = vmatpush.msra.mxu0 0.0
          %3160 = vmatpush.msra.mxu0 0.0
          %3161 = vmatpush.msra.mxu0 0.0
          %3162 = vmatpush.msra.mxu0 0.0
          %3163 = vmatpush.msra.mxu0 0.0
          %3164 = vmatpush.msra.mxu0 %v3147
          %3165 = vmatmul.f32.gmra.mxu0 %v3135
          %v3166 = vpop.f32.mrf.mxu0
          %v3167 = vadd.f32 %v3133, %v3166
          %3168 = vmatmul.f32.gmra.mxu0 %v3138
          %v3169 = vpop.f32.mrf.mxu0
          %v3170 = vadd.f32 %v3133, %v3169
          %3171 = vmatmul.f32.gmra.mxu0 %v3141
          %v3172 = vpop.f32.mrf.mxu0
          %v3173 = vadd.f32 %v3133, %v3172
          %3174 = vmatmul.f32.gmra.mxu0 %v3144
          %v3175 = vpop.f32.mrf.mxu0
          %v3176 = vadd.f32 %v3133, %v3175
          %3177 = vdwg.mxu0
          %v3178 = vsel %vm1147, %v3167, 0.0
          %v3179 = vsel %vm1147, %v3170, 0.0
          %v3180 = vadd.f32 %v3178, %v3179
          %v3181 = vsel %vm1147, %v3173, 0.0
          %v3182 = vadd.f32 %v3180, %v3181
          %v3183 = vsel %vm1147, %v3176, 0.0
          %v3184 = vadd.f32 %v3182, %v3183
          %v3185 = vrot.slane %v3184, 4
          %v3186 = vadd.f32 %v3184, %v3185
          %v3187 = vrot.slane %v3186, 2
          %v3188 = vadd.f32 %v3186, %v3187
          %v3189 = vrot.slane %v3188, 1
          %v3190 = vadd.f32 %v3188, %v3189
          %v3191 = vmul.f32 %v3190, %v1167
          %v3192 = vmul.f32 %v3167, %v3167
          %v3193 = vmul.f32 %v3170, %v3170
          %v3194 = vmul.f32 %v3173, %v3173
          %v3195 = vmul.f32 %v3176, %v3176
          %v3196 = vsel %vm1147, %v3192, 0.0
          %v3197 = vsel %vm1147, %v3193, 0.0
          %v3198 = vadd.f32 %v3196, %v3197
          %v3199 = vsel %vm1147, %v3194, 0.0
          %v3200 = vadd.f32 %v3198, %v3199
          %v3201 = vsel %vm1147, %v3195, 0.0
          %v3202 = vadd.f32 %v3200, %v3201
          %v3203 = vrot.slane %v3202, 4
          %v3204 = vadd.f32 %v3202, %v3203
          %v3205 = vrot.slane %v3204, 2
          %v3206 = vadd.f32 %v3204, %v3205
          %v3207 = vrot.slane %v3206, 1
          %v3208 = vadd.f32 %v3206, %v3207
          %v3209 = vmul.f32 %v3208, %v1167
          %v3210 = vmul.f32 %v3191, %v3191
          %v3211 = vsub.f32 %v3209, %v3210
          %v3212 = vsub.f32 %v3167, %v3191
          %v3213 = vsub.f32 %v3170, %v3191
          %v3214 = vsub.f32 %v3173, %v3191
          %v3215 = vsub.f32 %v3176, %v3191
          %v3216 = vadd.f32 %v3211, 1e-05
          %v3217 = vrsqrt.pop %v3216
          %v3218 = vmul.f32 %v3217, %v3216
          %v3219 = vmul.f32 %v3218, %v3217
          %v3220 = vmul.f32 0.5, %v3219
          %v3221 = vsub.f32 1.5, %v3220
          %v3222 = vmul.f32 %v3217, %v3221
          %vm3223 = vweird.f32 %v3216
          %vm3224 = vweird.f32 %v3217
          %vm3225 = vmor %vm3223, %vm3224
          %v3226 = vsel %vm3225, %v3217, %v3222
          %v3227 = vmul.f32 %v3212, %v3226
          %v3228 = vmul.f32 %v3213, %v3226
          %v3229 = vmul.f32 %v3214, %v3226
          %v3230 = vmul.f32 %v3215, %v3226
          %v3231 = vperm.slane %v3122, 2
          %v3232 = vmul.f32 %v3227, %v3231
          %v3233 = vmul.f32 %v3228, %v3231
          %v3234 = vmul.f32 %v3229, %v3231
          %v3235 = vmul.f32 %v3230, %v3231
          %v3236 = vperm.slane %v3122, 3
          %v3237 = vadd.f32 %v3232, %v3236
          %v3238 = vadd.f32 %v3233, %v3236
          %v3239 = vadd.f32 %v3234, %v3236
          %v3240 = vadd.f32 %v3235, %v3236
          %v3241 = vmax.f32 %v3237, 0.0
          %v3242 = vmax.f32 %v3238, 0.0
          %v3243 = vmax.f32 %v3239, 0.0
          %v3244 = vmax.f32 %v3240, 0.0
          %s3245 = scalar_lea.vmem %s523, 96
          %v3246 = vld [vmem:[%s3245] sm:$0xff]
          %v3247 = vld [vmem:[%s3245 + $0x8] sm:$0xff]
          %v3248 = vperm.slane %v3122, 4
          %v3250 = vsel %vm1147, %v3241, 0
          %v3253 = vsel %vm1147, %v3242, 0
          %v3256 = vsel %vm1147, %v3243, 0
          %v3259 = vsel %vm1147, %v3244, 0
          %3261 = vmatpush.msra.mxu0 0.0
          %3262 = vmatpush.msra.mxu0 0.0
          %3263 = vmatpush.msra.mxu0 0.0
          %3264 = vmatpush.msra.mxu0 0.0
          %3265 = vmatpush.msra.mxu0 0.0
          %3266 = vmatpush.msra.mxu0 0.0
          %3267 = vmatpush.msra.mxu0 0.0
          %3268 = vmatpush.msra.mxu0 0.0
          %3269 = vmatpush.msra.mxu0 0.0
          %3270 = vmatpush.msra.mxu0 0.0
          %3271 = vmatpush.msra.mxu0 0.0
          %3272 = vmatpush.msra.mxu0 0.0
          %3273 = vmatpush.msra.mxu0 0.0
          %3274 = vmatpush.msra.mxu0 0.0
          %3275 = vmatpush.msra.mxu0 %v3247
          %3276 = vmatpush.msra.mxu0 %v3246
          %3277 = vmatmul.f32.gmra.mxu0 %v3250
          %v3278 = vpop.f32.mrf.mxu0
          %v3279 = vadd.f32 %v3248, %v3278
          %3280 = vmatmul.f32.gmra.mxu0 %v3253
          %v3281 = vpop.f32.mrf.mxu0
          %v3282 = vadd.f32 %v3248, %v3281
          %3283 = vmatmul.f32.gmra.mxu0 %v3256
          %v3284 = vpop.f32.mrf.mxu0
          %v3285 = vadd.f32 %v3248, %v3284
          %3286 = vmatmul.f32.gmra.mxu0 %v3259
          %v3287 = vpop.f32.mrf.mxu0
          %v3288 = vadd.f32 %v3248, %v3287
          %3289 = vdwg.mxu0
          %v3290 = vsel %vm1147, %v3279, 0.0
          %v3291 = vsel %vm1147, %v3282, 0.0
          %v3292 = vadd.f32 %v3290, %v3291
          %v3293 = vsel %vm1147, %v3285, 0.0
          %v3294 = vadd.f32 %v3292, %v3293
          %v3295 = vsel %vm1147, %v3288, 0.0
          %v3296 = vadd.f32 %v3294, %v3295
          %v3297 = vrot.slane %v3296, 4
          %v3298 = vadd.f32 %v3296, %v3297
          %v3299 = vrot.slane %v3298, 2
          %v3300 = vadd.f32 %v3298, %v3299
          %v3301 = vrot.slane %v3300, 1
          %v3302 = vadd.f32 %v3300, %v3301
          %v3303 = vmul.f32 %v3302, %v1167
          %v3304 = vmul.f32 %v3279, %v3279
          %v3305 = vmul.f32 %v3282, %v3282
          %v3306 = vmul.f32 %v3285, %v3285
          %v3307 = vmul.f32 %v3288, %v3288
          %v3308 = vsel %vm1147, %v3304, 0.0
          %v3309 = vsel %vm1147, %v3305, 0.0
          %v3310 = vadd.f32 %v3308, %v3309
          %v3311 = vsel %vm1147, %v3306, 0.0
          %v3312 = vadd.f32 %v3310, %v3311
          %v3313 = vsel %vm1147, %v3307, 0.0
          %v3314 = vadd.f32 %v3312, %v3313
          %v3315 = vrot.slane %v3314, 4
          %v3316 = vadd.f32 %v3314, %v3315
          %v3317 = vrot.slane %v3316, 2
          %v3318 = vadd.f32 %v3316, %v3317
          %v3319 = vrot.slane %v3318, 1
          %v3320 = vadd.f32 %v3318, %v3319
          %v3321 = vmul.f32 %v3320, %v1167
          %v3322 = vmul.f32 %v3303, %v3303
          %v3323 = vsub.f32 %v3321, %v3322
          %v3324 = vsub.f32 %v3279, %v3303
          %v3325 = vsub.f32 %v3282, %v3303
          %v3326 = vsub.f32 %v3285, %v3303
          %v3327 = vsub.f32 %v3288, %v3303
          %v3328 = vadd.f32 %v3323, 1e-05
          %v3329 = vrsqrt.pop %v3328
          %v3330 = vmul.f32 %v3329, %v3328
          %v3331 = vmul.f32 %v3330, %v3329
          %v3332 = vmul.f32 0.5, %v3331
          %v3333 = vsub.f32 1.5, %v3332
          %v3334 = vmul.f32 %v3329, %v3333
          %vm3335 = vweird.f32 %v3328
          %vm3336 = vweird.f32 %v3329
          %vm3337 = vmor %vm3335, %vm3336
          %v3338 = vsel %vm3337, %v3329, %v3334
          %v3339 = vmul.f32 %v3324, %v3338
          %v3340 = vmul.f32 %v3325, %v3338
          %v3341 = vmul.f32 %v3326, %v3338
          %v3342 = vmul.f32 %v3327, %v3338
          %v3343 = vperm.slane %v3122, 5
          %v3344 = vmul.f32 %v3339, %v3343
          %v3345 = vmul.f32 %v3340, %v3343
          %v3346 = vmul.f32 %v3341, %v3343
          %v3347 = vmul.f32 %v3342, %v3343
          %v3348 = vperm.slane %v3122, 6
          %v3349 = vadd.f32 %v3344, %v3348
          %v3350 = vadd.f32 %v3345, %v3348
          %v3351 = vadd.f32 %v3346, %v3348
          %v3352 = vadd.f32 %v3347, %v3348
          %v3353 = vmax.f32 %v3349, 0.0
          %v3354 = vmax.f32 %v3350, 0.0
          %v3355 = vmax.f32 %v3351, 0.0
          %v3356 = vmax.f32 %v3352, 0.0
          %s3357 = scalar_lea.vmem %s530, 96
          %v3358 = vld [vmem:[%s3357] sm:$0xff]
          %v3359 = vld [vmem:[%s3357 + $0x8] sm:$0xff]
          %v3360 = vperm.slane %v3122, 7
          %v3362 = vsel %vm1147, %v3353, 0
          %v3365 = vsel %vm1147, %v3354, 0
          %v3368 = vsel %vm1147, %v3355, 0
          %v3371 = vsel %vm1147, %v3356, 0
          %3373 = vmatpush.msra.mxu0 0.0
          %3374 = vmatpush.msra.mxu0 0.0
          %3375 = vmatpush.msra.mxu0 0.0
          %3376 = vmatpush.msra.mxu0 0.0
          %3377 = vmatpush.msra.mxu0 0.0
          %3378 = vmatpush.msra.mxu0 0.0
          %3379 = vmatpush.msra.mxu0 0.0
          %3380 = vmatpush.msra.mxu0 0.0
          %3381 = vmatpush.msra.mxu0 0.0
          %3382 = vmatpush.msra.mxu0 0.0
          %3383 = vmatpush.msra.mxu0 0.0
          %3384 = vmatpush.msra.mxu0 0.0
          %3385 = vmatpush.msra.mxu0 0.0
          %3386 = vmatpush.msra.mxu0 0.0
          %3387 = vmatpush.msra.mxu0 %v3359
          %3388 = vmatpush.msra.mxu0 %v3358
          %3389 = vmatmul.f32.gmra.mxu0 %v3362
          %v3390 = vpop.f32.mrf.mxu0
          %v3391 = vadd.f32 %v3360, %v3390
          %3392 = vmatmul.f32.gmra.mxu0 %v3365
          %v3393 = vpop.f32.mrf.mxu0
          %v3394 = vadd.f32 %v3360, %v3393
          %3395 = vmatmul.f32.gmra.mxu0 %v3368
          %v3396 = vpop.f32.mrf.mxu0
          %v3397 = vadd.f32 %v3360, %v3396
          %3398 = vmatmul.f32.gmra.mxu0 %v3371
          %v3399 = vpop.f32.mrf.mxu0
          %v3400 = vadd.f32 %v3360, %v3399
          %3401 = vdwg.mxu0
          %v3402 = vperm.slane %v3122, 0
          %v3403 = vsub.f32 %v3123, %v3402
          %v3404 = vsub.f32 %v3124, %v3402
          %v3405 = vsub.f32 %v3125, %v3402
          %v3406 = vsub.f32 %v3126, %v3402
          %v3407 = vmul.f32 %v3403, %v3403
          %v3408 = vmul.f32 %v3404, %v3404
          %v3409 = vmul.f32 %v3405, %v3405
          %v3410 = vmul.f32 %v3406, %v3406
          %v3411 = vsel %vm1101, %v3407, 0.0
          %3412 = vadd.xlane.f32.xlu0 %v3411
          %v3413 = vpop.xlane.xlu0 %3412
          %v3414 = vsel %vm1101, %v3408, 0.0
          %3415 = vadd.xlane.f32.xlu0 %v3414
          %v3416 = vpop.xlane.xlu0 %3415
          %v3417 = vsel %vm1101, %v3409, 0.0
          %3418 = vadd.xlane.f32.xlu0 %v3417
          %v3419 = vpop.xlane.xlu0 %3418
          %v3420 = vsel %vm1101, %v3410, 0.0
          %3421 = vadd.xlane.f32.xlu0 %v3420
          %v3422 = vpop.xlane.xlu0 %3421
          %v3423 = vmul.f32 %v3413, 0.32
          %v3424 = vmul.f32 %v3416, 0.32
          %v3425 = vmul.f32 %v3419, 0.32
          %v3426 = vmul.f32 %v3422, 0.32
          %v3427 = vmul.f32 %v3391, %v3391
          %v3428 = vmul.f32 %v3394, %v3394
          %v3429 = vmul.f32 %v3397, %v3397
          %v3430 = vmul.f32 %v3400, %v3400
          %v3431 = vsel %vm1101, %v3427, 0.0
          %3432 = vadd.xlane.f32.xlu0 %v3431
          %v3433 = vpop.xlane.xlu0 %3432
          %v3434 = vsel %vm1101, %v3428, 0.0
          %3435 = vadd.xlane.f32.xlu0 %v3434
          %v3436 = vpop.xlane.xlu0 %3435
          %v3437 = vsel %vm1101, %v3429, 0.0
          %3438 = vadd.xlane.f32.xlu0 %v3437
          %v3439 = vpop.xlane.xlu0 %3438
          %v3440 = vsel %vm1101, %v3430, 0.0
          %3441 = vadd.xlane.f32.xlu0 %v3440
          %v3442 = vpop.xlane.xlu0 %3441
          %v3443 = vmul.f32 %v3433, 0.5
          %v3444 = vmul.f32 %v3436, 0.5
          %v3445 = vmul.f32 %v3439, 0.5
          %v3446 = vmul.f32 %v3442, 0.5
          %v3447 = vadd.f32 %v3423, %v3443
          %v3448 = vadd.f32 %v3424, %v3444
          %v3449 = vadd.f32 %v3425, %v3445
          %v3450 = vadd.f32 %v3426, %v3446
          %v3451 = vstv %s3114
          %v3452 = vmul.f32 %v3447, %v3451
          %v3453 = vmul.f32 %v3448, %v3451
          %v3454 = vmul.f32 %v3449, %v3451
          %v3455 = vmul.f32 %v3450, %v3451
          %v3456 = vsub.f32 %v3127, %v3452
          %v3457 = vsub.f32 %v3128, %v3453
          %v3458 = vsub.f32 %v3129, %v3454
          %v3459 = vsub.f32 %v3130, %v3455
          %s3460 = smul.f32 %s3115, 0.5
          %v3461 = vmul.f32 %v3391, %v3117
          %v3462 = vmul.f32 %v3394, %v3118
          %v3463 = vmul.f32 %v3397, %v3119
          %v3464 = vmul.f32 %v3400, %v3120
          %v3465 = vsel %vm1101, %v3461, 0.0
          %3466 = vadd.xlane.f32.xlu0 %v3465
          %v3467 = vpop.xlane.xlu0 %3466
          %v3468 = vsel %vm1101, %v3462, 0.0
          %3469 = vadd.xlane.f32.xlu0 %v3468
          %v3470 = vpop.xlane.xlu0 %3469
          %v3471 = vsel %vm1101, %v3463, 0.0
          %3472 = vadd.xlane.f32.xlu0 %v3471
          %v3473 = vpop.xlane.xlu0 %3472
          %v3474 = vsel %vm1101, %v3464, 0.0
          %3475 = vadd.xlane.f32.xlu0 %v3474
          %v3476 = vpop.xlane.xlu0 %3475
          %v3477 = vstv %s3460
          %v3478 = vmul.f32 %v3477, %v3467
          %v3479 = vmul.f32 %v3477, %v3470
          %v3480 = vmul.f32 %v3477, %v3473
          %v3481 = vmul.f32 %v3477, %v3476
          %v3482 = vadd.f32 %v3456, %v3478
          %v3483 = vadd.f32 %v3457, %v3479
          %v3484 = vadd.f32 %v3458, %v3480
          %v3485 = vadd.f32 %v3459, %v3481
          %v3486 = vmul.f32 %v3391, %v3451
          %v3487 = vmul.f32 %v3394, %v3451
          %v3488 = vmul.f32 %v3397, %v3451
          %v3489 = vmul.f32 %v3400, %v3451
          %v3490 = vsub.f32 %v3123, %v3486
          %v3491 = vsub.f32 %v3124, %v3487
          %v3492 = vsub.f32 %v3125, %v3488
          %v3493 = vsub.f32 %v3126, %v3489
          %v3494 = vmul.f32 %v3477, %v3117
          %v3495 = vmul.f32 %v3477, %v3118
          %v3496 = vmul.f32 %v3477, %v3119
          %v3497 = vmul.f32 %v3477, %v3120
          %v3498 = vadd.f32 %v3490, %v3494
          %v3499 = vadd.f32 %v3491, %v3495
          %v3500 = vadd.f32 %v3492, %v3496
          %v3501 = vadd.f32 %v3493, %v3497
          %3502 = vst.msk [vmem:[%s10] sm:$0xff] %vm1479, %v3482
          %3503 = vst.msk [vmem:[%s10 + $0x8] sm:$0xff] %vm1479, %v3483
          %3504 = vst.msk [vmem:[%s10 + $0x10] sm:$0xff] %vm1479, %v3484
          %3505 = vst.msk [vmem:[%s10 + $0x18] sm:$0xff] %vm1479, %v3485
          %3506 = vst.msk [vmem:[%s11] sm:$0xff] %vm1101, %v3498
          %3507 = vst.msk [vmem:[%s11 + $0x8] sm:$0xff] %vm1101, %v3499
          %3508 = vst.msk [vmem:[%s11 + $0x10] sm:$0xff] %vm1101, %v3500
          %3509 = vst.msk [vmem:[%s11 + $0x18] sm:$0xff] %vm1101, %v3501
          %s3510 = scalar_lea.vmem %s537, 192
          %3511 = vst.msk [vmem:[%s3510] sm:$0xff] %vm1101, %v3498
          %3512 = vst.msk [vmem:[%s3510 + $0x8] sm:$0xff] %vm1101, %v3499
          %3513 = vst.msk [vmem:[%s3510 + $0x10] sm:$0xff] %vm1101, %v3500
          %3514 = vst.msk [vmem:[%s3510 + $0x18] sm:$0xff] %vm1101, %v3501
        $region88: #{tpu_custom_call.1} parent=59 // pred_fallthru
          _
        %s3515 = sadd.s32 %s1079, 7
        %p3516 = scmp.lt.s32.totalorder %s3515, 20
        // Predicated region
        $region89: #{tpu_custom_call.1} parent=59 // pred_check
          %p3517 = pneg %p3516
        $region90: #{tpu_custom_call.1} parent=59 // pred_check_branch
          %3519 = sbr.rel (%p3517) target = $region92
        $region91: #{tpu_custom_call.1} parent=59 // pred_region
          %s3520 = sld [smem:[#allocation3 + %s3515]]
          %s3521 = sld [smem:[#allocation5 + %s3515]]
          %s3522 = scalar_lea.vmem %s504, 224
          %v3523 = vld [vmem:[%s3522] sm:$0xff]
          %v3524 = vld [vmem:[%s3522 + $0x8] sm:$0xff]
          %v3525 = vld [vmem:[%s3522 + $0x10] sm:$0xff]
          %v3526 = vld [vmem:[%s3522 + $0x18] sm:$0xff]
          %s3527 = scalar_lea.vmem %s510, 56
          %v3528 = vld [vmem:[%s3527] sm:$0xff]
          %v3529 = vld [vmem:[%s11] sm:$0xff]
          %v3530 = vld [vmem:[%s11 + $0x8] sm:$0xff]
          %v3531 = vld [vmem:[%s11 + $0x10] sm:$0xff]
          %v3532 = vld [vmem:[%s11 + $0x18] sm:$0xff]
          %v3533 = vld [vmem:[%s10] sm:$0xff]
          %v3534 = vld [vmem:[%s10 + $0x8] sm:$0xff]
          %v3535 = vld [vmem:[%s10 + $0x10] sm:$0xff]
          %v3536 = vld [vmem:[%s10 + $0x18] sm:$0xff]
          %s3537 = scalar_lea.vmem %s516, 56
          %v3538 = vld [vmem:[%s3537] sm:$0x3f]
          %v3539 = vperm.slane %v3528, 1
          %v3541 = vsel %vm1101, %v3529, 0
          %v3544 = vsel %vm1101, %v3530, 0
          %v3547 = vsel %vm1101, %v3531, 0
          %v3550 = vsel %vm1101, %v3532, 0
          %v3553 = vsel %vm1114, %v3538, 0
          %3555 = vmatpush.msra.mxu0 0.0
          %3556 = vmatpush.msra.mxu0 0.0
          %3557 = vmatpush.msra.mxu0 0.0
          %3558 = vmatpush.msra.mxu0 0.0
          %3559 = vmatpush.msra.mxu0 0.0
          %3560 = vmatpush.msra.mxu0 0.0
          %3561 = vmatpush.msra.mxu0 0.0
          %3562 = vmatpush.msra.mxu0 0.0
          %3563 = vmatpush.msra.mxu0 0.0
          %3564 = vmatpush.msra.mxu0 0.0
          %3565 = vmatpush.msra.mxu0 0.0
          %3566 = vmatpush.msra.mxu0 0.0
          %3567 = vmatpush.msra.mxu0 0.0
          %3568 = vmatpush.msra.mxu0 0.0
          %3569 = vmatpush.msra.mxu0 0.0
          %3570 = vmatpush.msra.mxu0 %v3553
          %3571 = vmatmul.f32.gmra.mxu0 %v3541
          %v3572 = vpop.f32.mrf.mxu0
          %v3573 = vadd.f32 %v3539, %v3572
          %3574 = vmatmul.f32.gmra.mxu0 %v3544
          %v3575 = vpop.f32.mrf.mxu0
          %v3576 = vadd.f32 %v3539, %v3575
          %3577 = vmatmul.f32.gmra.mxu0 %v3547
          %v3578 = vpop.f32.mrf.mxu0
          %v3579 = vadd.f32 %v3539, %v3578
          %3580 = vmatmul.f32.gmra.mxu0 %v3550
          %v3581 = vpop.f32.mrf.mxu0
          %v3582 = vadd.f32 %v3539, %v3581
          %3583 = vdwg.mxu0
          %v3584 = vsel %vm1147, %v3573, 0.0
          %v3585 = vsel %vm1147, %v3576, 0.0
          %v3586 = vadd.f32 %v3584, %v3585
          %v3587 = vsel %vm1147, %v3579, 0.0
          %v3588 = vadd.f32 %v3586, %v3587
          %v3589 = vsel %vm1147, %v3582, 0.0
          %v3590 = vadd.f32 %v3588, %v3589
          %v3591 = vrot.slane %v3590, 4
          %v3592 = vadd.f32 %v3590, %v3591
          %v3593 = vrot.slane %v3592, 2
          %v3594 = vadd.f32 %v3592, %v3593
          %v3595 = vrot.slane %v3594, 1
          %v3596 = vadd.f32 %v3594, %v3595
          %v3597 = vmul.f32 %v3596, %v1167
          %v3598 = vmul.f32 %v3573, %v3573
          %v3599 = vmul.f32 %v3576, %v3576
          %v3600 = vmul.f32 %v3579, %v3579
          %v3601 = vmul.f32 %v3582, %v3582
          %v3602 = vsel %vm1147, %v3598, 0.0
          %v3603 = vsel %vm1147, %v3599, 0.0
          %v3604 = vadd.f32 %v3602, %v3603
          %v3605 = vsel %vm1147, %v3600, 0.0
          %v3606 = vadd.f32 %v3604, %v3605
          %v3607 = vsel %vm1147, %v3601, 0.0
          %v3608 = vadd.f32 %v3606, %v3607
          %v3609 = vrot.slane %v3608, 4
          %v3610 = vadd.f32 %v3608, %v3609
          %v3611 = vrot.slane %v3610, 2
          %v3612 = vadd.f32 %v3610, %v3611
          %v3613 = vrot.slane %v3612, 1
          %v3614 = vadd.f32 %v3612, %v3613
          %v3615 = vmul.f32 %v3614, %v1167
          %v3616 = vmul.f32 %v3597, %v3597
          %v3617 = vsub.f32 %v3615, %v3616
          %v3618 = vsub.f32 %v3573, %v3597
          %v3619 = vsub.f32 %v3576, %v3597
          %v3620 = vsub.f32 %v3579, %v3597
          %v3621 = vsub.f32 %v3582, %v3597
          %v3622 = vadd.f32 %v3617, 1e-05
          %v3623 = vrsqrt.pop %v3622
          %v3624 = vmul.f32 %v3623, %v3622
          %v3625 = vmul.f32 %v3624, %v3623
          %v3626 = vmul.f32 0.5, %v3625
          %v3627 = vsub.f32 1.5, %v3626
          %v3628 = vmul.f32 %v3623, %v3627
          %vm3629 = vweird.f32 %v3622
          %vm3630 = vweird.f32 %v3623
          %vm3631 = vmor %vm3629, %vm3630
          %v3632 = vsel %vm3631, %v3623, %v3628
          %v3633 = vmul.f32 %v3618, %v3632
          %v3634 = vmul.f32 %v3619, %v3632
          %v3635 = vmul.f32 %v3620, %v3632
          %v3636 = vmul.f32 %v3621, %v3632
          %v3637 = vperm.slane %v3528, 2
          %v3638 = vmul.f32 %v3633, %v3637
          %v3639 = vmul.f32 %v3634, %v3637
          %v3640 = vmul.f32 %v3635, %v3637
          %v3641 = vmul.f32 %v3636, %v3637
          %v3642 = vperm.slane %v3528, 3
          %v3643 = vadd.f32 %v3638, %v3642
          %v3644 = vadd.f32 %v3639, %v3642
          %v3645 = vadd.f32 %v3640, %v3642
          %v3646 = vadd.f32 %v3641, %v3642
          %v3647 = vmax.f32 %v3643, 0.0
          %v3648 = vmax.f32 %v3644, 0.0
          %v3649 = vmax.f32 %v3645, 0.0
          %v3650 = vmax.f32 %v3646, 0.0
          %s3651 = scalar_lea.vmem %s523, 112
          %v3652 = vld [vmem:[%s3651] sm:$0xff]
          %v3653 = vld [vmem:[%s3651 + $0x8] sm:$0xff]
          %v3654 = vperm.slane %v3528, 4
          %v3656 = vsel %vm1147, %v3647, 0
          %v3659 = vsel %vm1147, %v3648, 0
          %v3662 = vsel %vm1147, %v3649, 0
          %v3665 = vsel %vm1147, %v3650, 0
          %3667 = vmatpush.msra.mxu0 0.0
          %3668 = vmatpush.msra.mxu0 0.0
          %3669 = vmatpush.msra.mxu0 0.0
          %3670 = vmatpush.msra.mxu0 0.0
          %3671 = vmatpush.msra.mxu0 0.0
          %3672 = vmatpush.msra.mxu0 0.0
          %3673 = vmatpush.msra.mxu0 0.0
          %3674 = vmatpush.msra.mxu0 0.0
          %3675 = vmatpush.msra.mxu0 0.0
          %3676 = vmatpush.msra.mxu0 0.0
          %3677 = vmatpush.msra.mxu0 0.0
          %3678 = vmatpush.msra.mxu0 0.0
          %3679 = vmatpush.msra.mxu0 0.0
          %3680 = vmatpush.msra.mxu0 0.0
          %3681 = vmatpush.msra.mxu0 %v3653
          %3682 = vmatpush.msra.mxu0 %v3652
          %3683 = vmatmul.f32.gmra.mxu0 %v3656
          %v3684 = vpop.f32.mrf.mxu0
          %v3685 = vadd.f32 %v3654, %v3684
          %3686 = vmatmul.f32.gmra.mxu0 %v3659
          %v3687 = vpop.f32.mrf.mxu0
          %v3688 = vadd.f32 %v3654, %v3687
          %3689 = vmatmul.f32.gmra.mxu0 %v3662
          %v3690 = vpop.f32.mrf.mxu0
          %v3691 = vadd.f32 %v3654, %v3690
          %3692 = vmatmul.f32.gmra.mxu0 %v3665
          %v3693 = vpop.f32.mrf.mxu0
          %v3694 = vadd.f32 %v3654, %v3693
          %3695 = vdwg.mxu0
          %v3696 = vsel %vm1147, %v3685, 0.0
          %v3697 = vsel %vm1147, %v3688, 0.0
          %v3698 = vadd.f32 %v3696, %v3697
          %v3699 = vsel %vm1147, %v3691, 0.0
          %v3700 = vadd.f32 %v3698, %v3699
          %v3701 = vsel %vm1147, %v3694, 0.0
          %v3702 = vadd.f32 %v3700, %v3701
          %v3703 = vrot.slane %v3702, 4
          %v3704 = vadd.f32 %v3702, %v3703
          %v3705 = vrot.slane %v3704, 2
          %v3706 = vadd.f32 %v3704, %v3705
          %v3707 = vrot.slane %v3706, 1
          %v3708 = vadd.f32 %v3706, %v3707
          %v3709 = vmul.f32 %v3708, %v1167
          %v3710 = vmul.f32 %v3685, %v3685
          %v3711 = vmul.f32 %v3688, %v3688
          %v3712 = vmul.f32 %v3691, %v3691
          %v3713 = vmul.f32 %v3694, %v3694
          %v3714 = vsel %vm1147, %v3710, 0.0
          %v3715 = vsel %vm1147, %v3711, 0.0
          %v3716 = vadd.f32 %v3714, %v3715
          %v3717 = vsel %vm1147, %v3712, 0.0
          %v3718 = vadd.f32 %v3716, %v3717
          %v3719 = vsel %vm1147, %v3713, 0.0
          %v3720 = vadd.f32 %v3718, %v3719
          %v3721 = vrot.slane %v3720, 4
          %v3722 = vadd.f32 %v3720, %v3721
          %v3723 = vrot.slane %v3722, 2
          %v3724 = vadd.f32 %v3722, %v3723
          %v3725 = vrot.slane %v3724, 1
          %v3726 = vadd.f32 %v3724, %v3725
          %v3727 = vmul.f32 %v3726, %v1167
          %v3728 = vmul.f32 %v3709, %v3709
          %v3729 = vsub.f32 %v3727, %v3728
          %v3730 = vsub.f32 %v3685, %v3709
          %v3731 = vsub.f32 %v3688, %v3709
          %v3732 = vsub.f32 %v3691, %v3709
          %v3733 = vsub.f32 %v3694, %v3709
          %v3734 = vadd.f32 %v3729, 1e-05
          %v3735 = vrsqrt.pop %v3734
          %v3736 = vmul.f32 %v3735, %v3734
          %v3737 = vmul.f32 %v3736, %v3735
          %v3738 = vmul.f32 0.5, %v3737
          %v3739 = vsub.f32 1.5, %v3738
          %v3740 = vmul.f32 %v3735, %v3739
          %vm3741 = vweird.f32 %v3734
          %vm3742 = vweird.f32 %v3735
          %vm3743 = vmor %vm3741, %vm3742
          %v3744 = vsel %vm3743, %v3735, %v3740
          %v3745 = vmul.f32 %v3730, %v3744
          %v3746 = vmul.f32 %v3731, %v3744
          %v3747 = vmul.f32 %v3732, %v3744
          %v3748 = vmul.f32 %v3733, %v3744
          %v3749 = vperm.slane %v3528, 5
          %v3750 = vmul.f32 %v3745, %v3749
          %v3751 = vmul.f32 %v3746, %v3749
          %v3752 = vmul.f32 %v3747, %v3749
          %v3753 = vmul.f32 %v3748, %v3749
          %v3754 = vperm.slane %v3528, 6
          %v3755 = vadd.f32 %v3750, %v3754
          %v3756 = vadd.f32 %v3751, %v3754
          %v3757 = vadd.f32 %v3752, %v3754
          %v3758 = vadd.f32 %v3753, %v3754
          %v3759 = vmax.f32 %v3755, 0.0
          %v3760 = vmax.f32 %v3756, 0.0
          %v3761 = vmax.f32 %v3757, 0.0
          %v3762 = vmax.f32 %v3758, 0.0
          %s3763 = scalar_lea.vmem %s530, 112
          %v3764 = vld [vmem:[%s3763] sm:$0xff]
          %v3765 = vld [vmem:[%s3763 + $0x8] sm:$0xff]
          %v3766 = vperm.slane %v3528, 7
          %v3768 = vsel %vm1147, %v3759, 0
          %v3771 = vsel %vm1147, %v3760, 0
          %v3774 = vsel %vm1147, %v3761, 0
          %v3777 = vsel %vm1147, %v3762, 0
          %3779 = vmatpush.msra.mxu0 0.0
          %3780 = vmatpush.msra.mxu0 0.0
          %3781 = vmatpush.msra.mxu0 0.0
          %3782 = vmatpush.msra.mxu0 0.0
          %3783 = vmatpush.msra.mxu0 0.0
          %3784 = vmatpush.msra.mxu0 0.0
          %3785 = vmatpush.msra.mxu0 0.0
          %3786 = vmatpush.msra.mxu0 0.0
          %3787 = vmatpush.msra.mxu0 0.0
          %3788 = vmatpush.msra.mxu0 0.0
          %3789 = vmatpush.msra.mxu0 0.0
          %3790 = vmatpush.msra.mxu0 0.0
          %3791 = vmatpush.msra.mxu0 0.0
          %3792 = vmatpush.msra.mxu0 0.0
          %3793 = vmatpush.msra.mxu0 %v3765
          %3794 = vmatpush.msra.mxu0 %v3764
          %3795 = vmatmul.f32.gmra.mxu0 %v3768
          %v3796 = vpop.f32.mrf.mxu0
          %v3797 = vadd.f32 %v3766, %v3796
          %3798 = vmatmul.f32.gmra.mxu0 %v3771
          %v3799 = vpop.f32.mrf.mxu0
          %v3800 = vadd.f32 %v3766, %v3799
          %3801 = vmatmul.f32.gmra.mxu0 %v3774
          %v3802 = vpop.f32.mrf.mxu0
          %v3803 = vadd.f32 %v3766, %v3802
          %3804 = vmatmul.f32.gmra.mxu0 %v3777
          %v3805 = vpop.f32.mrf.mxu0
          %v3806 = vadd.f32 %v3766, %v3805
          %3807 = vdwg.mxu0
          %v3808 = vperm.slane %v3528, 0
          %v3809 = vsub.f32 %v3529, %v3808
          %v3810 = vsub.f32 %v3530, %v3808
          %v3811 = vsub.f32 %v3531, %v3808
          %v3812 = vsub.f32 %v3532, %v3808
          %v3813 = vmul.f32 %v3809, %v3809
          %v3814 = vmul.f32 %v3810, %v3810
          %v3815 = vmul.f32 %v3811, %v3811
          %v3816 = vmul.f32 %v3812, %v3812
          %v3817 = vsel %vm1101, %v3813, 0.0
          %3818 = vadd.xlane.f32.xlu0 %v3817
          %v3819 = vpop.xlane.xlu0 %3818
          %v3820 = vsel %vm1101, %v3814, 0.0
          %3821 = vadd.xlane.f32.xlu0 %v3820
          %v3822 = vpop.xlane.xlu0 %3821
          %v3823 = vsel %vm1101, %v3815, 0.0
          %3824 = vadd.xlane.f32.xlu0 %v3823
          %v3825 = vpop.xlane.xlu0 %3824
          %v3826 = vsel %vm1101, %v3816, 0.0
          %3827 = vadd.xlane.f32.xlu0 %v3826
          %v3828 = vpop.xlane.xlu0 %3827
          %v3829 = vmul.f32 %v3819, 0.32
          %v3830 = vmul.f32 %v3822, 0.32
          %v3831 = vmul.f32 %v3825, 0.32
          %v3832 = vmul.f32 %v3828, 0.32
          %v3833 = vmul.f32 %v3797, %v3797
          %v3834 = vmul.f32 %v3800, %v3800
          %v3835 = vmul.f32 %v3803, %v3803
          %v3836 = vmul.f32 %v3806, %v3806
          %v3837 = vsel %vm1101, %v3833, 0.0
          %3838 = vadd.xlane.f32.xlu0 %v3837
          %v3839 = vpop.xlane.xlu0 %3838
          %v3840 = vsel %vm1101, %v3834, 0.0
          %3841 = vadd.xlane.f32.xlu0 %v3840
          %v3842 = vpop.xlane.xlu0 %3841
          %v3843 = vsel %vm1101, %v3835, 0.0
          %3844 = vadd.xlane.f32.xlu0 %v3843
          %v3845 = vpop.xlane.xlu0 %3844
          %v3846 = vsel %vm1101, %v3836, 0.0
          %3847 = vadd.xlane.f32.xlu0 %v3846
          %v3848 = vpop.xlane.xlu0 %3847
          %v3849 = vmul.f32 %v3839, 0.5
          %v3850 = vmul.f32 %v3842, 0.5
          %v3851 = vmul.f32 %v3845, 0.5
          %v3852 = vmul.f32 %v3848, 0.5
          %v3853 = vadd.f32 %v3829, %v3849
          %v3854 = vadd.f32 %v3830, %v3850
          %v3855 = vadd.f32 %v3831, %v3851
          %v3856 = vadd.f32 %v3832, %v3852
          %v3857 = vstv %s3520
          %v3858 = vmul.f32 %v3853, %v3857
          %v3859 = vmul.f32 %v3854, %v3857
          %v3860 = vmul.f32 %v3855, %v3857
          %v3861 = vmul.f32 %v3856, %v3857
          %v3862 = vsub.f32 %v3533, %v3858
          %v3863 = vsub.f32 %v3534, %v3859
          %v3864 = vsub.f32 %v3535, %v3860
          %v3865 = vsub.f32 %v3536, %v3861
          %s3866 = smul.f32 %s3521, 0.5
          %v3867 = vmul.f32 %v3797, %v3523
          %v3868 = vmul.f32 %v3800, %v3524
          %v3869 = vmul.f32 %v3803, %v3525
          %v3870 = vmul.f32 %v3806, %v3526
          %v3871 = vsel %vm1101, %v3867, 0.0
          %3872 = vadd.xlane.f32.xlu0 %v3871
          %v3873 = vpop.xlane.xlu0 %3872
          %v3874 = vsel %vm1101, %v3868, 0.0
          %3875 = vadd.xlane.f32.xlu0 %v3874
          %v3876 = vpop.xlane.xlu0 %3875
          %v3877 = vsel %vm1101, %v3869, 0.0
          %3878 = vadd.xlane.f32.xlu0 %v3877
          %v3879 = vpop.xlane.xlu0 %3878
          %v3880 = vsel %vm1101, %v3870, 0.0
          %3881 = vadd.xlane.f32.xlu0 %v3880
          %v3882 = vpop.xlane.xlu0 %3881
          %v3883 = vstv %s3866
          %v3884 = vmul.f32 %v3883, %v3873
          %v3885 = vmul.f32 %v3883, %v3876
          %v3886 = vmul.f32 %v3883, %v3879
          %v3887 = vmul.f32 %v3883, %v3882
          %v3888 = vadd.f32 %v3862, %v3884
          %v3889 = vadd.f32 %v3863, %v3885
          %v3890 = vadd.f32 %v3864, %v3886
          %v3891 = vadd.f32 %v3865, %v3887
          %v3892 = vmul.f32 %v3797, %v3857
          %v3893 = vmul.f32 %v3800, %v3857
          %v3894 = vmul.f32 %v3803, %v3857
          %v3895 = vmul.f32 %v3806, %v3857
          %v3896 = vsub.f32 %v3529, %v3892
          %v3897 = vsub.f32 %v3530, %v3893
          %v3898 = vsub.f32 %v3531, %v3894
          %v3899 = vsub.f32 %v3532, %v3895
          %v3900 = vmul.f32 %v3883, %v3523
          %v3901 = vmul.f32 %v3883, %v3524
          %v3902 = vmul.f32 %v3883, %v3525
          %v3903 = vmul.f32 %v3883, %v3526
          %v3904 = vadd.f32 %v3896, %v3900
          %v3905 = vadd.f32 %v3897, %v3901
          %v3906 = vadd.f32 %v3898, %v3902
          %v3907 = vadd.f32 %v3899, %v3903
          %3908 = vst.msk [vmem:[%s10] sm:$0xff] %vm1479, %v3888
          %3909 = vst.msk [vmem:[%s10 + $0x8] sm:$0xff] %vm1479, %v3889
          %3910 = vst.msk [vmem:[%s10 + $0x10] sm:$0xff] %vm1479, %v3890
          %3911 = vst.msk [vmem:[%s10 + $0x18] sm:$0xff] %vm1479, %v3891
          %3912 = vst.msk [vmem:[%s11] sm:$0xff] %vm1101, %v3904
          %3913 = vst.msk [vmem:[%s11 + $0x8] sm:$0xff] %vm1101, %v3905
          %3914 = vst.msk [vmem:[%s11 + $0x10] sm:$0xff] %vm1101, %v3906
          %3915 = vst.msk [vmem:[%s11 + $0x18] sm:$0xff] %vm1101, %v3907
          %s3916 = scalar_lea.vmem %s537, 224
          %3917 = vst.msk [vmem:[%s3916] sm:$0xff] %vm1101, %v3904
          %3918 = vst.msk [vmem:[%s3916 + $0x8] sm:$0xff] %vm1101, %v3905
          %3919 = vst.msk [vmem:[%s3916 + $0x10] sm:$0xff] %vm1101, %v3906
          %3920 = vst.msk [vmem:[%s3916 + $0x18] sm:$0xff] %vm1101, %v3907
        $region92: #{tpu_custom_call.1} parent=59 // pred_fallthru
          _
        %s3921 = smul.u32 8, %s27
        %p3922 = scmp.lt.s32.totalorder %s3921, 23
        %s3923 = scalar_select %p3922, %s3921, 23
        %s3924 = smul.addr %s3923, 4
        %s3925 = smul.addr %s3924, 8
        %s3926 = scalar_lea.vmem %s12, %s3925
        // Predicated region
        $region93: #{tpu_custom_call.1} parent=59 // pred_check
          %p3927 = pneg %p275
        $region94: #{tpu_custom_call.1} parent=59 // pred_check_branch
          %3929 = sbr.rel (%p3927) target = $region96
        $region95: #{tpu_custom_call.1} parent=59 // pred_region
          _
        $region96: #{tpu_custom_call.1} parent=59 // pred_fallthru
          _
        // Predicated region
        $region97: #{tpu_custom_call.1} parent=59 // pred_check
          %p3930 = pneg %p296
        $region98: #{tpu_custom_call.1} parent=59 // pred_check_branch
          %3932 = sbr.rel (%p3930) target = $region100
        $region99: #{tpu_custom_call.1} parent=59 // pred_region
          _
        $region100: #{tpu_custom_call.1} parent=59 // pred_fallthru
          _
        // Predicated region
        $region101: #{tpu_custom_call.1} parent=59 // pred_check
          %p3933 = pneg %p322
        $region102: #{tpu_custom_call.1} parent=59 // pred_check_branch
          %3935 = sbr.rel (%p3933) target = $region104
        $region103: #{tpu_custom_call.1} parent=59 // pred_region
          %s3936 = smul.u32 8, %s27
        $region104: #{tpu_custom_call.1} parent=59 // pred_fallthru
          _
        // Predicated region
        $region105: #{tpu_custom_call.1} parent=59 // pred_check
          %p3937 = pneg %p275
        $region106: #{tpu_custom_call.1} parent=59 // pred_check_branch
          %3939 = sbr.rel (%p3937) target = $region108
        $region107: #{tpu_custom_call.1} parent=59 // pred_region
          _
        $region108: #{tpu_custom_call.1} parent=59 // pred_fallthru
          _
        // Predicated region
        $region109: #{tpu_custom_call.1} parent=59 // pred_check
          %p3940 = pneg %p296
        $region110: #{tpu_custom_call.1} parent=59 // pred_check_branch
          %3942 = sbr.rel (%p3940) target = $region112
        $region111: #{tpu_custom_call.1} parent=59 // pred_region
          _
        $region112: #{tpu_custom_call.1} parent=59 // pred_fallthru
          _
      $region60: #{tpu_custom_call.1} parent=5 // pred_fallthru
        _
      %p3943 = scmp.le.s32.totalorder 2, %s22
      // Predicated region
      $region113: #{tpu_custom_call.1} parent=5 // pred_check
        %p3944 = pneg %p3943
      $region114: #{tpu_custom_call.1} parent=5 // pred_check_branch
        %3946 = sbr.rel (%p3944) target = $region116
      $region115: #{tpu_custom_call.1} parent=5 // pred_region
        %s3947 = ssub.s32 %s22, 2
        // Predicated region
        $region117: #{tpu_custom_call.1} parent=115 // pred_check
          %p3948 = pneg %p328
        $region118: #{tpu_custom_call.1} parent=115 // pred_check_branch
          %3950 = sbr.rel (%p3948) target = $region120
        $region119: #{tpu_custom_call.1} parent=115 // pred_region
          %s3951 = smul.u32 8, %s28
          %p3952 = scmp.lt.s32.totalorder %s3951, 23
          %s3953 = scalar_select %p3952, %s3951, 23
          %s3954 = smul.addr %s3953, 4
          %s3955 = smul.addr %s3954, 8
          %s3956 = scalar_lea.vmem %s12, %s3955
        $region120: #{tpu_custom_call.1} parent=115 // pred_fallthru
          _
      $region116: #{tpu_custom_call.1} parent=5 // pred_fallthru
        _
    $region6: #{tpu_custom_call.1} parent=1 // loop_footer
      %s26 = sadd.s32 1, %s22
    $region7: #{tpu_custom_call.1} parent=1 // loop_footer_branch
      %21 = sbr.rel target = $region3
    $region8: #{tpu_custom_call.1} parent=1 // loop_exit
      _
    %3957 = vsyncpa [#allocation4], 1
    %s3958 = scalar_lea.sflag [#allocation4], 1
    %3959 = vsyncpa %s3958, 1
    %3960 = vsyncpa [#allocation6], 1

</llo_original>
